<compile_context>
chip_gen: v7x
topology: tpu7x:2x2x1
jax: 0.10.0
libtpu: 0.0.40
codegen_flags: <defaults>
</compile_context>

<pallas_src>
import functools

import jax
import jax.numpy as jnp
from jax import lax
from jax.experimental import pallas as pl
from jax.experimental.pallas import tpu as pltpu

LANE = 128  # TPU lane width; the hidden dim is padded to a multiple of this.


def _round_up(v, m):
    return (v + m - 1) // m * m


def _closed_surface_kernel(x_ref, w_in_ref, w_out_ref, b_h_ref, b_o_ref,
                           o_ref, *, matmul_dtype):
    # x_ref: (tile_n, D)   w_in_ref: (2, D, Hp)   w_out_ref: (2, Hp, D)
    # b_h_ref: (2, 1, Hp)  b_o_ref: (2, 1, D)     o_ref: (tile_n, D)
    x = x_ref[...]

    # f32 operands -> exact multi-pass MXU matmul (matches an f32 reference);
    # bf16 operands -> native single-pass MXU path with f32 accumulation.
    f32_mode = jnp.dtype(matmul_dtype) == jnp.dtype(jnp.float32)
    prec = jax.lax.Precision.HIGHEST if f32_mode else jax.lax.Precision.DEFAULT

    def mm(a, w):
        return jnp.dot(a.astype(matmul_dtype), w,
                       preferred_element_type=jnp.float32, precision=prec)

    w1, w3 = w_in_ref[0], w_in_ref[1]      # (D, Hp)
    w2, w4 = w_out_ref[0], w_out_ref[1]    # (Hp, D)
    b1, b3 = b_h_ref[0], b_h_ref[1]        # (1, Hp)  f32
    b2, b4 = b_o_ref[0], b_o_ref[1]        # (1, D)   f32

    # ---- encoder(x): Linear -> ReLU -> Linear ----
    h = jnp.maximum(mm(x, w1) + b1, 0.0)
    enc = mm(h, w2) + b2

    # ---- z = x + encoder(x); L2-normalize along last dim (always f32) ----
    z = x + enc
    z = z * lax.rsqrt(jnp.sum(z * z, axis=-1, keepdims=True))  # EUP rsqrt

    # ---- decoder(z): Linear -> ReLU -> Linear ----
    h2 = jnp.maximum(mm(z, w3) + b3, 0.0)
    dec = mm(h2, w4) + b4

    o_ref[...] = (z + dec).astype(o_ref.dtype)


def _pack_params(params, H, Hp, matmul_dtype):
    """Pad the hidden dim to Hp lanes and stack encoder/decoder params.

    Padding is mathematically inert: padded hidden units are ReLU(0+0)=0 and
    their zero rows in w2/w4 contribute nothing; the feature dim D is never
    padded, so the norm and the output are untouched.
    """
    ph = Hp - H

    def pad_cols(w):   # (D, H) -> (D, Hp)
        return jnp.pad(w, ((0, 0), (0, ph)))

    def pad_rows(w):   # (H, D) -> (Hp, D)
        return jnp.pad(w, ((0, ph), (0, 0)))

    w_in = jnp.stack([pad_cols(params["w1"]),
                      pad_cols(params["w3"])]).astype(matmul_dtype)   # (2, D, Hp)
    w_out = jnp.stack([pad_rows(params["w2"]),
                       pad_rows(params["w4"])]).astype(matmul_dtype)  # (2, Hp, D)
    b_h = jnp.stack([jnp.pad(params["b1"], ((0, 0), (0, ph))),
                     jnp.pad(params["b3"], ((0, 0), (0, ph)))])       # (2, 1, Hp)
    b_o = jnp.stack([params["b2"], params["b4"]])                     # (2, 1, D)
    return w_in, w_out, b_h, b_o


def _pick_tile_n(N):
    """Rows per grid step: multiple of 8, <= 1024 rows (v5e scoped-VMEM
    headroom), and an even grid of >= 2 steps when there is enough work so
    ("parallel",) shards across both v7x TensorCores."""
    if N <= 128:
        return N                      # single tiny block (block dim == full dim)
    n_tiles = max(2, pl.cdiv(N, 1024))
    if n_tiles % 2:                   # even grid for 2-TC chips
        n_tiles += 1
    return _round_up(pl.cdiv(N, n_tiles), 8)


def closed_surface_projection(x, params, *, tile_n=None,
                              matmul_dtype=jnp.float32):
    """x: (N, D) float32.  params: dict of encoder/decoder weights/biases.

    matmul_dtype=jnp.bfloat16 casts the matmul operands (weights + activations)
    to bf16 with f32 accumulation (recommended on v6e/v7x); residual adds and
    the L2 normalization always run in f32.
    """
    N, D = x.shape
    H = params["w1"].shape[1]
    Hp = _round_up(H, LANE)           # lane-dense hidden width

    if tile_n is None:
        tile_n = _pick_tile_n(N)
    grid = (pl.cdiv(N, tile_n),)      # a partial last block is masked by Pallas

    w_in, w_out, b_h, b_o = _pack_params(params, H, Hp, matmul_dtype)

    kernel = functools.partial(_closed_surface_kernel,
                               matmul_dtype=matmul_dtype)

    return pl.pallas_call(
        kernel,
        out_shape=jax.ShapeDtypeStruct((N, D), x.dtype),
        grid_spec=pltpu.PrefetchScalarGridSpec(
            num_scalar_prefetch=0,
            grid=grid,
            in_specs=[
                pl.BlockSpec((tile_n, D), lambda i: (i, 0)),    # x tile, native width
                pl.BlockSpec((2, D, Hp), lambda i: (0, 0, 0)),  # w1 / w3
                pl.BlockSpec((2, Hp, D), lambda i: (0, 0, 0)),  # w2 / w4
                pl.BlockSpec((2, 1, Hp), lambda i: (0, 0, 0)),  # b1 / b3
                pl.BlockSpec((2, 1, D), lambda i: (0, 0, 0)),   # b2 / b4
            ],
            out_specs=pl.BlockSpec((tile_n, D), lambda i: (i, 0)),
        ),
        compiler_params=pltpu.CompilerParams(
            dimension_semantics=("parallel",)),
    )(x, w_in, w_out, b_h, b_o)


def _reference(x, p):
    """Pure-JAX reference mirroring the PyTorch forward (exact f32 matmuls)."""
    hp = jax.lax.Precision.HIGHEST
    h = jnp.maximum(jnp.dot(x, p["w1"], precision=hp) + p["b1"], 0.0)
    enc = jnp.dot(h, p["w2"], precision=hp) + p["b2"]
    z = x + enc
    z = z / jnp.linalg.norm(z, axis=-1, keepdims=True)
    h2 = jnp.maximum(jnp.dot(z, p["w3"], precision=hp) + p["b3"], 0.0)
    dec = jnp.dot(h2, p["w4"], precision=hp) + p["b4"]
    return z + dec


def _init_params(key, D, H):
    ks = jax.random.split(key, 8)
    scale_in = 1.0 / jnp.sqrt(D)
    scale_h = 1.0 / jnp.sqrt(H)
    return {
        "w1": jax.random.normal(ks[0], (D, H), jnp.float32) * scale_in,
        "b1": jax.random.normal(ks[1], (1, H), jnp.float32) * 0.01,
        "w2": jax.random.normal(ks[2], (H, D), jnp.float32) * scale_h,
        "b2": jax.random.normal(ks[3], (1, D), jnp.float32) * 0.01,
        "w3": jax.random.normal(ks[4], (D, H), jnp.float32) * scale_in,
        "b3": jax.random.normal(ks[5], (1, H), jnp.float32) * 0.01,
        "w4": jax.random.normal(ks[6], (H, D), jnp.float32) * scale_h,
        "b4": jax.random.normal(ks[7], (1, D), jnp.float32) * 0.01,
    }


if __name__ == "__main__":
    key = jax.random.PRNGKey(0)
    k_x, k_p = jax.random.split(key)

    N, D, H = 256, 32, 64          # 256 points on a surface in R^32, hidden=64
    x = jax.random.normal(k_x, (N, D), jnp.float32)
    params = _init_params(k_p, D, H)

    ref = _reference(x, params)

    # f32 path (exact MXU matmuls) — grid=(2,), 128-row tiles, native D width.
    out = jax.block_until_ready(closed_surface_projection(x, params))
    assert out.shape == (N, D) and out.dtype == jnp.float32
    assert jnp.allclose(out, ref, atol=5e-4, rtol=5e-4), "f32 mismatch vs reference"

    # bf16 matmul operands (f32 accumulate + f32 normalization), recommended on
    # v6e / v7x; looser tolerance because operands are rounded to bf16.
    out_bf16 = jax.block_until_ready(
        closed_surface_projection(x, params, matmul_dtype=jnp.bfloat16))
    assert out_bf16.shape == (N, D)
    assert jnp.allclose(out_bf16, ref, atol=5e-2, rtol=5e-2), "bf16 mismatch vs reference"

    print("KERNEL_OK")
</pallas_src>

<mosaic_0001>
module attributes {stable_mosaic.version = 11 : i64} {
  func.func @_closed_surface_kernel(%arg0: i32, %arg1: memref<128x32xf32, #tpu.memory_space<vmem>>, %arg2: memref<2x32x128xf32, #tpu.memory_space<vmem>>, %arg3: memref<2x128x32xf32, #tpu.memory_space<vmem>>, %arg4: memref<2x1x128xf32, #tpu.memory_space<vmem>>, %arg5: memref<2x1x32xf32, #tpu.memory_space<vmem>>, %arg6: memref<128x32xf32, #tpu.memory_space<vmem>>) attributes {dimension_semantics = [#tpu.dimension_semantics<parallel>], iteration_bounds = array<i64: 2>, scalar_prefetch = 0 : i64, scratch_operands = 0 : i64, tpu.core_type = #tpu.core_type<tc>, window_params = [{transform_indices = @transform_0, window_bounds = array<i64: 128, 32>}, {pipeline_mode = #tpu.pipeline_mode<synchronous>, transform_indices = @transform_1, window_bounds = array<i64: 2, 32, 128>}, {pipeline_mode = #tpu.pipeline_mode<synchronous>, transform_indices = @transform_2, window_bounds = array<i64: 2, 128, 32>}, {pipeline_mode = #tpu.pipeline_mode<synchronous>, transform_indices = @transform_3, window_bounds = array<i64: 2, 1, 128>}, {pipeline_mode = #tpu.pipeline_mode<synchronous>, transform_indices = @transform_4, window_bounds = array<i64: 2, 1, 32>}, {transform_indices = @transform_5, window_bounds = array<i64: 128, 32>}]} {
    %c0 = arith.constant 0 : index
    %c0_0 = arith.constant 0 : index
    %0 = vector.load %arg1[%c0, %c0_0] : memref<128x32xf32, #tpu.memory_space<vmem>>, vector<128x32xf32>
    %c0_1 = arith.constant 0 : index
    %c0_2 = arith.constant 0 : index
    %c0_3 = arith.constant 0 : index
    %1 = vector.load %arg2[%c0_1, %c0_2, %c0_3] : memref<2x32x128xf32, #tpu.memory_space<vmem>>, vector<1x32x128xf32>
    %2 = vector.shape_cast %1 : vector<1x32x128xf32> to vector<32x128xf32>
    %c1 = arith.constant 1 : index
    %c0_4 = arith.constant 0 : index
    %c0_5 = arith.constant 0 : index
    %3 = vector.load %arg2[%c1, %c0_4, %c0_5] : memref<2x32x128xf32, #tpu.memory_space<vmem>>, vector<1x32x128xf32>
    %4 = vector.shape_cast %3 : vector<1x32x128xf32> to vector<32x128xf32>
    %c0_6 = arith.constant 0 : index
    %c0_7 = arith.constant 0 : index
    %c0_8 = arith.constant 0 : index
    %5 = vector.load %arg3[%c0_6, %c0_7, %c0_8] : memref<2x128x32xf32, #tpu.memory_space<vmem>>, vector<1x128x32xf32>
    %6 = vector.shape_cast %5 : vector<1x128x32xf32> to vector<128x32xf32>
    %c1_9 = arith.constant 1 : index
    %c0_10 = arith.constant 0 : index
    %c0_11 = arith.constant 0 : index
    %7 = vector.load %arg3[%c1_9, %c0_10, %c0_11] : memref<2x128x32xf32, #tpu.memory_space<vmem>>, vector<1x128x32xf32>
    %8 = vector.shape_cast %7 : vector<1x128x32xf32> to vector<128x32xf32>
    %c0_12 = arith.constant 0 : index
    %c0_13 = arith.constant 0 : index
    %c0_14 = arith.constant 0 : index
    %9 = vector.load %arg4[%c0_12, %c0_13, %c0_14] : memref<2x1x128xf32, #tpu.memory_space<vmem>>, vector<1x1x128xf32>
    %10 = vector.shape_cast %9 : vector<1x1x128xf32> to vector<1x128xf32>
    %c1_15 = arith.constant 1 : index
    %c0_16 = arith.constant 0 : index
    %c0_17 = arith.constant 0 : index
    %11 = vector.load %arg4[%c1_15, %c0_16, %c0_17] : memref<2x1x128xf32, #tpu.memory_space<vmem>>, vector<1x1x128xf32>
    %12 = vector.shape_cast %11 : vector<1x1x128xf32> to vector<1x128xf32>
    %c0_18 = arith.constant 0 : index
    %c0_19 = arith.constant 0 : index
    %c0_20 = arith.constant 0 : index
    %13 = vector.load %arg5[%c0_18, %c0_19, %c0_20] : memref<2x1x32xf32, #tpu.memory_space<vmem>>, vector<1x1x32xf32>
    %14 = vector.shape_cast %13 : vector<1x1x32xf32> to vector<1x32xf32>
    %c1_21 = arith.constant 1 : index
    %c0_22 = arith.constant 0 : index
    %c0_23 = arith.constant 0 : index
    %15 = vector.load %arg5[%c1_21, %c0_22, %c0_23] : memref<2x1x32xf32, #tpu.memory_space<vmem>>, vector<1x1x32xf32>
    %16 = vector.shape_cast %15 : vector<1x1x32xf32> to vector<1x32xf32>
    %cst = arith.constant dense<0.000000e+00> : vector<128x128xf32>
    %17 = tpu.matmul %0, %2, %cst {dimension_numbers = #tpu.dot_dimension_numbers<[1], [0], [0], [1], [0, 0, 1, 1], [], []>, precision = #tpu.contract_precision<fp32>} : vector<128x32xf32>, vector<32x128xf32>, vector<128x128xf32> -> vector<128x128xf32>
    %18 = vector.broadcast %10 : vector<1x128xf32> to vector<128x128xf32>
    %19 = arith.addf %17, %18 : vector<128x128xf32>
    %cst_24 = arith.constant 0.000000e+00 : f32
    %20 = vector.broadcast %cst_24 : f32 to vector<128x128xf32>
    %21 = arith.maximumf %19, %20 : vector<128x128xf32>
    %cst_25 = arith.constant dense<0.000000e+00> : vector<128x32xf32>
    %22 = tpu.matmul %21, %6, %cst_25 {dimension_numbers = #tpu.dot_dimension_numbers<[1], [0], [0], [1], [0, 0, 1, 1], [], []>, precision = #tpu.contract_precision<fp32>} : vector<128x128xf32>, vector<128x32xf32>, vector<128x32xf32> -> vector<128x32xf32>
    %23 = vector.broadcast %14 : vector<1x32xf32> to vector<128x32xf32>
    %24 = arith.addf %22, %23 : vector<128x32xf32>
    %25 = arith.addf %0, %24 : vector<128x32xf32>
    %26 = arith.mulf %25, %25 : vector<128x32xf32>
    %cst_26 = arith.constant dense<0.000000e+00> : vector<128xf32>
    %27 = vector.multi_reduction <add>, %26, %cst_26 [1] : vector<128x32xf32> to vector<128xf32>
    %28 = vector.shape_cast %27 : vector<128xf32> to vector<128x1xf32>
    %29 = math.rsqrt %28 : vector<128x1xf32>
    %30 = vector.broadcast %29 : vector<128x1xf32> to vector<128x32xf32>
    %31 = arith.mulf %25, %30 : vector<128x32xf32>
    %cst_27 = arith.constant dense<0.000000e+00> : vector<128x128xf32>
    %32 = tpu.matmul %31, %4, %cst_27 {dimension_numbers = #tpu.dot_dimension_numbers<[1], [0], [0], [1], [0, 0, 1, 1], [], []>, precision = #tpu.contract_precision<fp32>} : vector<128x32xf32>, vector<32x128xf32>, vector<128x128xf32> -> vector<128x128xf32>
    %33 = vector.broadcast %12 : vector<1x128xf32> to vector<128x128xf32>
    %34 = arith.addf %32, %33 : vector<128x128xf32>
    %cst_28 = arith.constant 0.000000e+00 : f32
    %35 = vector.broadcast %cst_28 : f32 to vector<128x128xf32>
    %36 = arith.maximumf %34, %35 : vector<128x128xf32>
    %cst_29 = arith.constant dense<0.000000e+00> : vector<128x32xf32>
    %37 = tpu.matmul %36, %8, %cst_29 {dimension_numbers = #tpu.dot_dimension_numbers<[1], [0], [0], [1], [0, 0, 1, 1], [], []>, precision = #tpu.contract_precision<fp32>} : vector<128x128xf32>, vector<128x32xf32>, vector<128x32xf32> -> vector<128x32xf32>
    %38 = vector.broadcast %16 : vector<1x32xf32> to vector<128x32xf32>
    %39 = arith.addf %37, %38 : vector<128x32xf32>
    %40 = arith.addf %31, %39 : vector<128x32xf32>
    %c0_30 = arith.constant 0 : index
    %c0_31 = arith.constant 0 : index
    %41 = vector.load %arg6[%c0_30, %c0_31] : memref<128x32xf32, #tpu.memory_space<vmem>>, vector<128x32xf32>
    tpu.vector_store %arg6[%c0_30, %c0_31], %40 {strides = array<i32>} : memref<128x32xf32, #tpu.memory_space<vmem>>, vector<128x32xf32>,
    return
  }
  func.func @transform_0(%arg0: i32) -> (i32, i32) {
    %c0_i32 = arith.constant 0 : i32
    %c0_i32_0 = arith.constant 0 : i32
    return %arg0, %c0_i32 : i32, i32
  }
  func.func @transform_1(%arg0: i32) -> (i32, i32, i32) {
    %c0_i32 = arith.constant 0 : i32
    %c0_i32_0 = arith.constant 0 : i32
    %c0_i32_1 = arith.constant 0 : i32
    %c0_i32_2 = arith.constant 0 : i32
    return %c0_i32, %c0_i32_0, %c0_i32_1 : i32, i32, i32
  }
  func.func @transform_2(%arg0: i32) -> (i32, i32, i32) {
    %c0_i32 = arith.constant 0 : i32
    %c0_i32_0 = arith.constant 0 : i32
    %c0_i32_1 = arith.constant 0 : i32
    %c0_i32_2 = arith.constant 0 : i32
    return %c0_i32, %c0_i32_0, %c0_i32_1 : i32, i32, i32
  }
  func.func @transform_3(%arg0: i32) -> (i32, i32, i32) {
    %c0_i32 = arith.constant 0 : i32
    %c0_i32_0 = arith.constant 0 : i32
    %c0_i32_1 = arith.constant 0 : i32
    %c0_i32_2 = arith.constant 0 : i32
    return %c0_i32, %c0_i32_0, %c0_i32_1 : i32, i32, i32
  }
  func.func @transform_4(%arg0: i32) -> (i32, i32, i32) {
    %c0_i32 = arith.constant 0 : i32
    %c0_i32_0 = arith.constant 0 : i32
    %c0_i32_1 = arith.constant 0 : i32
    %c0_i32_2 = arith.constant 0 : i32
    return %c0_i32, %c0_i32_0, %c0_i32_1 : i32, i32, i32
  }
  func.func @transform_5(%arg0: i32) -> (i32, i32) {
    %c0_i32 = arith.constant 0 : i32
    %c0_i32_0 = arith.constant 0 : i32
    return %arg0, %c0_i32 : i32, i32
  }
}

</mosaic_0001>

<llo_original>
// kernel: tpu_custom_call.1
$region0: #{tpu_custom_call.1}
  #allocation0 [shape = 'u32[]', space=smem, size = 0x4, offset = 0x4, fixed_abs, tag = 'smem constant byte address 0x4 - core index']
  #allocation1 [shape = 'u32[144,128]{1,0:T(1,128)}', space=vmem, size = 0x12000, scoped, tag = 'internal scratch']
  %s0 = inlined_call_operand.vmem [shape: f32[256,32], index: 0, kind: input, shape index: {}]
  %s1 = inlined_call_operand.vmem [shape: f32[2,32,128], index: 1, kind: input, shape index: {}]
  %s2 = inlined_call_operand.vmem [shape: f32[2,128,32], index: 2, kind: input, shape index: {}]
  %s3 = inlined_call_operand.vmem [shape: f32[2,1,128], index: 3, kind: input, shape index: {}]
  %s4 = inlined_call_operand.vmem [shape: f32[2,1,32], index: 4, kind: input, shape index: {}]
  %s5 = inlined_call_operand.vmem [shape: f32[256,32], index: 5, kind: output, shape index: {}]
  %s6 = sld [smem:[#allocation0]]
  $region53: #{tpu_custom_call.1} parent=0
    _
  %s8 = ssub.s32 1, %s6
  %s9 = scalar_select 0, %s8, %s6
  loop: start=0, step=1, limit=4
  $region2: #{tpu_custom_call.1} parent=0 // loop_pre_header
    _
  $region3: #{tpu_custom_call.1} parent=0 // loop_header
    %s11 = sphi 0, %s15
    %p12 = scmp.ge.s32.totalorder %s11, 4
    %s21 = sphi 0, %s23
    %s24 = sphi 0, %s21
    %s25 = sphi 0, %s24
    %s41 = sphi 0, %s25
    %s45 = sphi 0, %s45
    %s47 = sphi 0, %s45
    %s48 = sphi 0, %s47
    %s62 = sphi 0, %s48
    %s66 = sphi 0, %s66
    %s68 = sphi 0, %s66
    %s69 = sphi 0, %s68
    %s83 = sphi 0, %s69
    %s87 = sphi 0, %s87
    %s89 = sphi 0, %s87
    %s90 = sphi 0, %s89
    %s104 = sphi 0, %s90
    %s108 = sphi 0, %s108
    %s110 = sphi 0, %s108
    %s111 = sphi 0, %s110
    %s125 = sphi 0, %s111
    %s131 = sphi 0, %s133
    %s134 = sphi 0, %s131
    %s135 = sphi 0, %s134
    %s151 = sphi 0, %s135
  $region4: #{tpu_custom_call.1} parent=0 // loop_header_branch
    %14 = sbr.rel (%p12) target = $region8
  $region5: #{tpu_custom_call.1} parent=0 // loop_body
    %s16 = ssub.s32 %s11, 1
    %s17 = ssub.s32 %s11, 2
    %s18 = sadd.s32 %s11, 1
    %s19 = ssub.s32 %s11, %s18
    %p20 = scmp.eq.s32.totalorder %s19, 0
    %s22 = sadd.s32 %s21, 1
    %s23 = scalar_select %p20, %s21, %s22
    %p26 = pneg %p20
    %p27 = scmp.eq.s32.totalorder %s11, 1
    %p28 = por %p26, %p27
    %p29 = scmp.ne.s32.totalorder %s21, %s24
    %p30 = scmp.eq.s32.totalorder %s11, 0
    %p31 = por %p29, %p30
    %p32 = scmp.ne.s32.totalorder %s21, %s24
    %p33 = scmp.eq.s32.totalorder %s16, 1
    %p34 = por %p32, %p33
    %p35 = scmp.ne.s32.totalorder %s24, %s25
    %p36 = scmp.eq.s32.totalorder %s16, 0
    %p37 = por %p35, %p36
    %p38 = scmp.ne.s32.totalorder %s24, %s25
    %p39 = scmp.eq.s32.totalorder %s17, 1
    %p40 = por %p38, %p39
    %p42 = scmp.ne.s32.totalorder %s25, %s41
    %p43 = scmp.eq.s32.totalorder %s17, 0
    %p44 = por %p42, %p43
    %s46 = sadd.s32 %s45, 1
    %p49 = scmp.eq.s32.totalorder %s11, 1
    %p50 = scmp.ne.s32.totalorder %s45, %s47
    %p51 = scmp.eq.s32.totalorder %s11, 0
    %p52 = por %p50, %p51
    %p53 = scmp.ne.s32.totalorder %s45, %s47
    %p54 = scmp.eq.s32.totalorder %s16, 1
    %p55 = por %p53, %p54
    %p56 = scmp.ne.s32.totalorder %s47, %s48
    %p57 = scmp.eq.s32.totalorder %s16, 0
    %p58 = por %p56, %p57
    %p59 = scmp.ne.s32.totalorder %s47, %s48
    %p60 = scmp.eq.s32.totalorder %s17, 1
    %p61 = por %p59, %p60
    %p63 = scmp.ne.s32.totalorder %s48, %s62
    %p64 = scmp.eq.s32.totalorder %s17, 0
    %p65 = por %p63, %p64
    %s67 = sadd.s32 %s66, 1
    %p70 = scmp.eq.s32.totalorder %s11, 1
    %p71 = scmp.ne.s32.totalorder %s66, %s68
    %p72 = scmp.eq.s32.totalorder %s11, 0
    %p73 = por %p71, %p72
    %p74 = scmp.ne.s32.totalorder %s66, %s68
    %p75 = scmp.eq.s32.totalorder %s16, 1
    %p76 = por %p74, %p75
    %p77 = scmp.ne.s32.totalorder %s68, %s69
    %p78 = scmp.eq.s32.totalorder %s16, 0
    %p79 = por %p77, %p78
    %p80 = scmp.ne.s32.totalorder %s68, %s69
    %p81 = scmp.eq.s32.totalorder %s17, 1
    %p82 = por %p80, %p81
    %p84 = scmp.ne.s32.totalorder %s69, %s83
    %p85 = scmp.eq.s32.totalorder %s17, 0
    %p86 = por %p84, %p85
    %s88 = sadd.s32 %s87, 1
    %p91 = scmp.eq.s32.totalorder %s11, 1
    %p92 = scmp.ne.s32.totalorder %s87, %s89
    %p93 = scmp.eq.s32.totalorder %s11, 0
    %p94 = por %p92, %p93
    %p95 = scmp.ne.s32.totalorder %s87, %s89
    %p96 = scmp.eq.s32.totalorder %s16, 1
    %p97 = por %p95, %p96
    %p98 = scmp.ne.s32.totalorder %s89, %s90
    %p99 = scmp.eq.s32.totalorder %s16, 0
    %p100 = por %p98, %p99
    %p101 = scmp.ne.s32.totalorder %s89, %s90
    %p102 = scmp.eq.s32.totalorder %s17, 1
    %p103 = por %p101, %p102
    %p105 = scmp.ne.s32.totalorder %s90, %s104
    %p106 = scmp.eq.s32.totalorder %s17, 0
    %p107 = por %p105, %p106
    %s109 = sadd.s32 %s108, 1
    %p112 = scmp.eq.s32.totalorder %s11, 1
    %p113 = scmp.ne.s32.totalorder %s108, %s110
    %p114 = scmp.eq.s32.totalorder %s11, 0
    %p115 = por %p113, %p114
    %p116 = scmp.ne.s32.totalorder %s108, %s110
    %p117 = scmp.eq.s32.totalorder %s16, 1
    %p118 = por %p116, %p117
    %p119 = scmp.ne.s32.totalorder %s110, %s111
    %p120 = scmp.eq.s32.totalorder %s16, 0
    %p121 = por %p119, %p120
    %p122 = scmp.ne.s32.totalorder %s110, %s111
    %p123 = scmp.eq.s32.totalorder %s17, 1
    %p124 = por %p122, %p123
    %p126 = scmp.ne.s32.totalorder %s111, %s125
    %p127 = scmp.eq.s32.totalorder %s17, 0
    %p128 = por %p126, %p127
    %s129 = ssub.s32 %s11, %s18
    %p130 = scmp.eq.s32.totalorder %s129, 0
    %s132 = sadd.s32 %s131, 1
    %s133 = scalar_select %p130, %s131, %s132
    %p136 = pneg %p130
    %p137 = scmp.eq.s32.totalorder %s11, 1
    %p138 = por %p136, %p137
    %p139 = scmp.ne.s32.totalorder %s131, %s134
    %p140 = scmp.eq.s32.totalorder %s11, 0
    %p141 = por %p139, %p140
    %p142 = scmp.ne.s32.totalorder %s131, %s134
    %p143 = scmp.eq.s32.totalorder %s16, 1
    %p144 = por %p142, %p143
    %p145 = scmp.ne.s32.totalorder %s134, %s135
    %p146 = scmp.eq.s32.totalorder %s16, 0
    %p147 = por %p145, %p146
    %p148 = scmp.ne.s32.totalorder %s134, %s135
    %p149 = scmp.eq.s32.totalorder %s17, 1
    %p150 = por %p148, %p149
    %p152 = scmp.ne.s32.totalorder %s135, %s151
    %p153 = scmp.eq.s32.totalorder %s17, 0
    %p154 = por %p152, %p153
    %p155 = scmp.le.s32.totalorder 1, %s11
    %p156 = scmp.lt.s32.totalorder %s11, 3
    %p157 = pnand %p155, %p156
    %p158 = pneg %p157
    // Predicated region
    $region9: #{tpu_custom_call.1} parent=5 // pred_check
      _
    $region10: #{tpu_custom_call.1} parent=5 // pred_check_branch
      %160 = sbr.rel (%p157) target = $region12
    $region11: #{tpu_custom_call.1} parent=5 // pred_region
      %s161 = ssub.s32 %s11, 1
      // Predicated region
      $region13: #{tpu_custom_call.1} parent=11 // pred_check
        %p162 = pneg %p58
      $region14: #{tpu_custom_call.1} parent=11 // pred_check_branch
        %164 = sbr.rel (%p162) target = $region16
      $region15: #{tpu_custom_call.1} parent=11 // pred_region
        _
      $region16: #{tpu_custom_call.1} parent=11 // pred_fallthru
        _
      // Predicated region
      $region17: #{tpu_custom_call.1} parent=11 // pred_check
        %p165 = pneg %p79
      $region18: #{tpu_custom_call.1} parent=11 // pred_check_branch
        %167 = sbr.rel (%p165) target = $region20
      $region19: #{tpu_custom_call.1} parent=11 // pred_region
        _
      $region20: #{tpu_custom_call.1} parent=11 // pred_fallthru
        _
      // Predicated region
      $region21: #{tpu_custom_call.1} parent=11 // pred_check
        %p168 = pneg %p100
      $region22: #{tpu_custom_call.1} parent=11 // pred_check_branch
        %170 = sbr.rel (%p168) target = $region24
      $region23: #{tpu_custom_call.1} parent=11 // pred_region
        _
      $region24: #{tpu_custom_call.1} parent=11 // pred_fallthru
        _
      // Predicated region
      $region25: #{tpu_custom_call.1} parent=11 // pred_check
        %p171 = pneg %p121
      $region26: #{tpu_custom_call.1} parent=11 // pred_check_branch
        %173 = sbr.rel (%p171) target = $region28
      $region27: #{tpu_custom_call.1} parent=11 // pred_region
        _
      $region28: #{tpu_custom_call.1} parent=11 // pred_fallthru
        _
    $region12: #{tpu_custom_call.1} parent=5 // pred_fallthru
      _
    %p174 = scmp.lt.s32.totalorder %s11, 2
    // Predicated region
    $region29: #{tpu_custom_call.1} parent=5 // pred_check
      %p175 = pneg %p174
    $region30: #{tpu_custom_call.1} parent=5 // pred_check_branch
      %177 = sbr.rel (%p175) target = $region32
    $region31: #{tpu_custom_call.1} parent=5 // pred_region
      // Predicated region
      $region33: #{tpu_custom_call.1} parent=31 // pred_check
        %p178 = pneg %p31
      $region34: #{tpu_custom_call.1} parent=31 // pred_check_branch
        %180 = sbr.rel (%p178) target = $region36
      $region35: #{tpu_custom_call.1} parent=31 // pred_region
        %s181 = smul.u32 16, %s11
        %p182 = scmp.lt.s32.totalorder %s181, 31
        %s183 = scalar_select %p182, %s181, 31
        %s184 = smul.addr %s183, 8
        %s185 = scalar_lea.vmem %s0, %s184
        %s186 = smul.u32 16, %s11
      $region36: #{tpu_custom_call.1} parent=31 // pred_fallthru
        _
    $region32: #{tpu_custom_call.1} parent=5 // pred_fallthru
      _
    %p187 = scmp.le.s32.totalorder 1, %s11
    %p188 = scmp.lt.s32.totalorder %s11, 3
    %p189 = pnand %p187, %p188
    %p190 = pneg %p189
    // Predicated region
    $region37: #{tpu_custom_call.1} parent=5 // pred_check
      _
    $region38: #{tpu_custom_call.1} parent=5 // pred_check_branch
      %192 = sbr.rel (%p189) target = $region40
    $region39: #{tpu_custom_call.1} parent=5 // pred_region
      %s193 = ssub.s32 %s11, 1
      %s194 = smul.u32 16, %s16
      %p195 = scmp.lt.s32.totalorder %s194, 31
      %s196 = scalar_select %p195, %s194, 31
      %s197 = smul.addr %s196, 8
      %s198 = scalar_lea.vmem %s0, %s197
      %p199 = pneg %p37
      %p200 = pneg %p34
      %p201 = pneg %p58
      %p202 = pneg %p55
      %p203 = pneg %p79
      %p204 = pneg %p76
      %p205 = pneg %p100
      %p206 = pneg %p97
      %p207 = pneg %p121
      %p208 = pneg %p118
      %p209 = pneg %p147
      %p210 = pneg %p144
      %s211 = smul.u32 16, %s16
      %p212 = scmp.lt.s32.totalorder %s211, 31
      %s213 = scalar_select %p212, %s211, 31
      %s214 = smul.addr %s213, 8
      %s215 = scalar_lea.vmem %s5, %s214
      %s216 = smul.u32 16, %s16
      %p217 = scmp.lt.s32.totalorder %s216, 31
      %s218 = scalar_select %p217, %s216, 31
      %s219 = smul.addr %s218, 8
      %s220 = scalar_lea.vmem %s0, %s219
      %s221 = smul.u32 16, %s16
      %s222 = smul.u32 16, %s16
      %p223 = scmp.lt.s32.totalorder %s222, 31
      %s224 = scalar_select %p223, %s222, 31
      %s225 = smul.addr %s224, 8
      %s226 = scalar_lea.vmem %s5, %s225
      %s227 = smul.u32 16, %s16
      %v228 = vld [vmem:[%s220] sm:$0xff]
      %v229 = vld [vmem:[%s220 + $0x8] sm:$0xff]
      %v230 = vld [vmem:[%s220 + $0x10] sm:$0xff]
      %v231 = vld [vmem:[%s220 + $0x18] sm:$0xff]
      %v232 = vld [vmem:[%s220 + $0x20] sm:$0xff]
      %v233 = vld [vmem:[%s220 + $0x28] sm:$0xff]
      %v234 = vld [vmem:[%s220 + $0x30] sm:$0xff]
      %v235 = vld [vmem:[%s220 + $0x38] sm:$0xff]
      %v236 = vld [vmem:[%s220 + $0x40] sm:$0xff]
      %v237 = vld [vmem:[%s220 + $0x48] sm:$0xff]
      %v238 = vld [vmem:[%s220 + $0x50] sm:$0xff]
      %v239 = vld [vmem:[%s220 + $0x58] sm:$0xff]
      %v240 = vld [vmem:[%s220 + $0x60] sm:$0xff]
      %v241 = vld [vmem:[%s220 + $0x68] sm:$0xff]
      %v242 = vld [vmem:[%s220 + $0x70] sm:$0xff]
      %v243 = vld [vmem:[%s220 + $0x78] sm:$0xff]
      %v244 = vld [vmem:[%s1] sm:$0xff]
      %v245 = vld [vmem:[%s1 + $0x8] sm:$0xff]
      %v246 = vld [vmem:[%s1 + $0x10] sm:$0xff]
      %v247 = vld [vmem:[%s1 + $0x18] sm:$0xff]
      %s248 = scalar_lea.vmem %s1, 32
      %v249 = vld [vmem:[%s248] sm:$0xff]
      %v250 = vld [vmem:[%s248 + $0x8] sm:$0xff]
      %v251 = vld [vmem:[%s248 + $0x10] sm:$0xff]
      %v252 = vld [vmem:[%s248 + $0x18] sm:$0xff]
      %v253 = vld [vmem:[%s2] sm:$0xff]
      %v254 = vld [vmem:[%s2 + $0x8] sm:$0xff]
      %v255 = vld [vmem:[%s2 + $0x10] sm:$0xff]
      %v256 = vld [vmem:[%s2 + $0x18] sm:$0xff]
      %v257 = vld [vmem:[%s2 + $0x20] sm:$0xff]
      %v258 = vld [vmem:[%s2 + $0x28] sm:$0xff]
      %v259 = vld [vmem:[%s2 + $0x30] sm:$0xff]
      %v260 = vld [vmem:[%s2 + $0x38] sm:$0xff]
      %v261 = vld [vmem:[%s2 + $0x40] sm:$0xff]
      %v262 = vld [vmem:[%s2 + $0x48] sm:$0xff]
      %v263 = vld [vmem:[%s2 + $0x50] sm:$0xff]
      %v264 = vld [vmem:[%s2 + $0x58] sm:$0xff]
      %v265 = vld [vmem:[%s2 + $0x60] sm:$0xff]
      %v266 = vld [vmem:[%s2 + $0x68] sm:$0xff]
      %v267 = vld [vmem:[%s2 + $0x70] sm:$0xff]
      %v268 = vld [vmem:[%s2 + $0x78] sm:$0xff]
      %s269 = scalar_lea.vmem %s2, 128
      %v270 = vld [vmem:[%s269] sm:$0xff]
      %v271 = vld [vmem:[%s269 + $0x8] sm:$0xff]
      %v272 = vld [vmem:[%s269 + $0x10] sm:$0xff]
      %v273 = vld [vmem:[%s269 + $0x18] sm:$0xff]
      %v274 = vld [vmem:[%s269 + $0x20] sm:$0xff]
      %v275 = vld [vmem:[%s269 + $0x28] sm:$0xff]
      %v276 = vld [vmem:[%s269 + $0x30] sm:$0xff]
      %v277 = vld [vmem:[%s269 + $0x38] sm:$0xff]
      %v278 = vld [vmem:[%s269 + $0x40] sm:$0xff]
      %v279 = vld [vmem:[%s269 + $0x48] sm:$0xff]
      %v280 = vld [vmem:[%s269 + $0x50] sm:$0xff]
      %v281 = vld [vmem:[%s269 + $0x58] sm:$0xff]
      %v282 = vld [vmem:[%s269 + $0x60] sm:$0xff]
      %v283 = vld [vmem:[%s269 + $0x68] sm:$0xff]
      %v284 = vld [vmem:[%s269 + $0x70] sm:$0xff]
      %v285 = vld [vmem:[%s269 + $0x78] sm:$0xff]
      %v286 = vld [vmem:[%s3] sm:$0x1]
      %s287 = scalar_lea.vmem %s3, 1
      %v288 = vld [vmem:[%s287] sm:$0x1]
      %v289 = vld [vmem:[%s4] sm:$0x1]
      %s290 = scalar_lea.vmem %s4, 1
      %v291 = vld [vmem:[%s290] sm:$0x1]
      %v293 = vlaneseq
      %v294 = vshrl.u32 %v293, 7
      %v295 = vsub.s32 0, %v294
      %v296 = vrot.slane %v286, %v295
      %vm298 = vcmask 261120
      %v300 = vsel %vm298, %v228, 0
      %v303 = vsel %vm298, %v229, 0
      %v306 = vsel %vm298, %v230, 0
      %v309 = vsel %vm298, %v231, 0
      %v312 = vsel %vm298, %v232, 0
      %v315 = vsel %vm298, %v233, 0
      %v318 = vsel %vm298, %v234, 0
      %v321 = vsel %vm298, %v235, 0
      %v324 = vsel %vm298, %v236, 0
      %v327 = vsel %vm298, %v237, 0
      %v330 = vsel %vm298, %v238, 0
      %v333 = vsel %vm298, %v239, 0
      %v336 = vsel %vm298, %v240, 0
      %v339 = vsel %vm298, %v241, 0
      %v342 = vsel %vm298, %v242, 0
      %v345 = vsel %vm298, %v243, 0
      %347 = vmatprep.subr.mxu0 0.0
      %v348 = vand.u32 %v244, 4294901760
      %349 = vmatpush1.msra.mxu0 %v348
      %350 = vmatprep.subr.mxu0 0.0
      %v351 = vand.u32 %v245, 4294901760
      %352 = vmatpush1.msra.mxu0 %v351
      %353 = vmatprep.subr.mxu0 0.0
      %v354 = vand.u32 %v246, 4294901760
      %355 = vmatpush1.msra.mxu0 %v354
      %356 = vmatprep.subr.mxu0 0.0
      %v357 = vand.u32 %v247, 4294901760
      %358 = vmatpush1.msra.mxu0 %v357
      %359 = vmatprep.subr.mxu0 0.0
      %360 = vmatpush1.msra.mxu0 0.0
      %361 = vmatprep.subr.mxu0 0.0
      %362 = vmatpush1.msra.mxu0 0.0
      %363 = vmatprep.subr.mxu0 0.0
      %364 = vmatpush1.msra.mxu0 0.0
      %365 = vmatprep.subr.mxu0 0.0
      %366 = vmatpush1.msra.mxu0 0.0
      %367 = vmatprep.subr.mxu0 0.0
      %368 = vmatpush1.msra.mxu0 0.0
      %369 = vmatprep.subr.mxu0 0.0
      %370 = vmatpush1.msra.mxu0 0.0
      %371 = vmatprep.subr.mxu0 0.0
      %372 = vmatpush1.msra.mxu0 0.0
      %373 = vmatprep.subr.mxu0 0.0
      %374 = vmatpush1.msra.mxu0 0.0
      %375 = vmatprep.subr.mxu0 0.0
      %376 = vmatpush1.msra.mxu0 0.0
      %377 = vmatprep.subr.mxu0 0.0
      %378 = vmatpush1.msra.mxu0 0.0
      %379 = vmatprep.subr.mxu0 0.0
      %380 = vmatpush1.msra.mxu0 0.0
      %381 = vmatprep.subr.mxu0 0.0
      %382 = vmatpush1.msra.mxu0 0.0
      %383 = vmatprep.subr.mxu0 0.0
      %384 = vmatpush1.msra.mxu0 0.0
      %385 = vmatprep.subr.mxu0 0.0
      %386 = vmatpush1.msra.mxu0 0.0
      %387 = vmatprep.subr.mxu0 0.0
      %388 = vmatpush1.msra.mxu0 0.0
      %389 = vmatprep.subr.mxu0 0.0
      %390 = vmatpush1.msra.mxu0 0.0
      %391 = vmatprep.subr.mxu0 0.0
      %392 = vmatpush1.msra.mxu0 0.0
      %393 = vmatprep.subr.mxu0 0.0
      %394 = vmatpush1.msra.mxu0 0.0
      %395 = vmatprep.subr.mxu0 0.0
      %396 = vmatpush1.msra.mxu0 0.0
      %397 = vmatprep.subr.mxu0 0.0
      %398 = vmatpush1.msra.mxu0 0.0
      %399 = vmatprep.subr.mxu0 0.0
      %400 = vmatpush1.msra.mxu0 0.0
      %401 = vmatprep.subr.mxu0 0.0
      %402 = vmatpush1.msra.mxu0 0.0
      %403 = vmatprep.subr.mxu0 0.0
      %404 = vmatpush1.msra.mxu0 0.0
      %405 = vmatprep.subr.mxu0 0.0
      %406 = vmatpush1.msra.mxu0 0.0
      %407 = vmatprep.subr.mxu0 0.0
      %408 = vmatpush1.msra.mxu0 0.0
      %409 = vmatprep.subr.mxu0 0.0
      %410 = vmatpush1.msra.mxu0 0.0
      %411 = vmatprep.subr.mxu0 0.0
      %412 = vmatpush1.msra.mxu0 0.0
      %413 = vmatprep.subr.mxu0 0.0
      %414 = vmatpush1.msra.mxu0 0.0
      %415 = vmatprep.mubr.f32.mxu0 0.0
      %v416 = vand.u32 %v300, 4294901760
      %v417 = vsub.f32 %v300, %v416
      %v418 = vand.u32 %v417, 4294901760
      %v419 = vsub.f32 %v417, %v418
      %v420 = vand.u32 %v419, 4294901760
      %421 = vmatmul.mubr.f32.gmra.mrb[0].mxu0 %v420
      %v422 = vpop.f32.mrb[0].mxu0
      %v423 = vadd.f32 %v296, %v422
      %v424 = vpop.f32.mrb[0].mxu0
      %425 = vmatprep.mubr.f32.mxu0 0.0
      %v426 = vand.u32 %v303, 4294901760
      %v427 = vsub.f32 %v303, %v426
      %v428 = vand.u32 %v427, 4294901760
      %v429 = vsub.f32 %v427, %v428
      %v430 = vand.u32 %v429, 4294901760
      %431 = vmatmul.mubr.f32.gmra.mrb[0].mxu0 %v430
      %v432 = vpop.f32.mrb[0].mxu0
      %v433 = vadd.f32 %v296, %v432
      %v434 = vpop.f32.mrb[0].mxu0
      %435 = vmatprep.mubr.f32.mxu0 0.0
      %v436 = vand.u32 %v306, 4294901760
      %v437 = vsub.f32 %v306, %v436
      %v438 = vand.u32 %v437, 4294901760
      %v439 = vsub.f32 %v437, %v438
      %v440 = vand.u32 %v439, 4294901760
      %441 = vmatmul.mubr.f32.gmra.mrb[0].mxu0 %v440
      %v442 = vpop.f32.mrb[0].mxu0
      %v443 = vadd.f32 %v296, %v442
      %v444 = vpop.f32.mrb[0].mxu0
      %445 = vmatprep.mubr.f32.mxu0 0.0
      %v446 = vand.u32 %v309, 4294901760
      %v447 = vsub.f32 %v309, %v446
      %v448 = vand.u32 %v447, 4294901760
      %v449 = vsub.f32 %v447, %v448
      %v450 = vand.u32 %v449, 4294901760
      %451 = vmatmul.mubr.f32.gmra.mrb[0].mxu0 %v450
      %v452 = vpop.f32.mrb[0].mxu0
      %v453 = vadd.f32 %v296, %v452
      %v454 = vpop.f32.mrb[0].mxu0
      %455 = vmatprep.mubr.f32.mxu0 0.0
      %v456 = vand.u32 %v312, 4294901760
      %v457 = vsub.f32 %v312, %v456
      %v458 = vand.u32 %v457, 4294901760
      %v459 = vsub.f32 %v457, %v458
      %v460 = vand.u32 %v459, 4294901760
      %461 = vmatmul.mubr.f32.gmra.mrb[0].mxu0 %v460
      %v462 = vpop.f32.mrb[0].mxu0
      %v463 = vadd.f32 %v296, %v462
      %v464 = vpop.f32.mrb[0].mxu0
      %465 = vmatprep.mubr.f32.mxu0 0.0
      %v466 = vand.u32 %v315, 4294901760
      %v467 = vsub.f32 %v315, %v466
      %v468 = vand.u32 %v467, 4294901760
      %v469 = vsub.f32 %v467, %v468
      %v470 = vand.u32 %v469, 4294901760
      %471 = vmatmul.mubr.f32.gmra.mrb[0].mxu0 %v470
      %v472 = vpop.f32.mrb[0].mxu0
      %v473 = vadd.f32 %v296, %v472
      %v474 = vpop.f32.mrb[0].mxu0
      %475 = vmatprep.mubr.f32.mxu0 0.0
      %v476 = vand.u32 %v318, 4294901760
      %v477 = vsub.f32 %v318, %v476
      %v478 = vand.u32 %v477, 4294901760
      %v479 = vsub.f32 %v477, %v478
      %v480 = vand.u32 %v479, 4294901760
      %481 = vmatmul.mubr.f32.gmra.mrb[0].mxu0 %v480
      %v482 = vpop.f32.mrb[0].mxu0
      %v483 = vadd.f32 %v296, %v482
      %v484 = vpop.f32.mrb[0].mxu0
      %485 = vmatprep.mubr.f32.mxu0 0.0
      %v486 = vand.u32 %v321, 4294901760
      %v487 = vsub.f32 %v321, %v486
      %v488 = vand.u32 %v487, 4294901760
      %v489 = vsub.f32 %v487, %v488
      %v490 = vand.u32 %v489, 4294901760
      %491 = vmatmul.mubr.f32.gmra.mrb[0].mxu0 %v490
      %v492 = vpop.f32.mrb[0].mxu0
      %v493 = vadd.f32 %v296, %v492
      %v494 = vpop.f32.mrb[0].mxu0
      %495 = vmatprep.mubr.f32.mxu0 0.0
      %v496 = vand.u32 %v324, 4294901760
      %v497 = vsub.f32 %v324, %v496
      %v498 = vand.u32 %v497, 4294901760
      %v499 = vsub.f32 %v497, %v498
      %v500 = vand.u32 %v499, 4294901760
      %501 = vmatmul.mubr.f32.gmra.mrb[0].mxu0 %v500
      %v502 = vpop.f32.mrb[0].mxu0
      %v503 = vadd.f32 %v296, %v502
      %v504 = vpop.f32.mrb[0].mxu0
      %505 = vmatprep.mubr.f32.mxu0 0.0
      %v506 = vand.u32 %v327, 4294901760
      %v507 = vsub.f32 %v327, %v506
      %v508 = vand.u32 %v507, 4294901760
      %v509 = vsub.f32 %v507, %v508
      %v510 = vand.u32 %v509, 4294901760
      %511 = vmatmul.mubr.f32.gmra.mrb[0].mxu0 %v510
      %v512 = vpop.f32.mrb[0].mxu0
      %v513 = vadd.f32 %v296, %v512
      %v514 = vpop.f32.mrb[0].mxu0
      %515 = vmatprep.mubr.f32.mxu0 0.0
      %v516 = vand.u32 %v330, 4294901760
      %v517 = vsub.f32 %v330, %v516
      %v518 = vand.u32 %v517, 4294901760
      %v519 = vsub.f32 %v517, %v518
      %v520 = vand.u32 %v519, 4294901760
      %521 = vmatmul.mubr.f32.gmra.mrb[0].mxu0 %v520
      %v522 = vpop.f32.mrb[0].mxu0
      %v523 = vadd.f32 %v296, %v522
      %v524 = vpop.f32.mrb[0].mxu0
      %525 = vmatprep.mubr.f32.mxu0 0.0
      %v526 = vand.u32 %v333, 4294901760
      %v527 = vsub.f32 %v333, %v526
      %v528 = vand.u32 %v527, 4294901760
      %v529 = vsub.f32 %v527, %v528
      %v530 = vand.u32 %v529, 4294901760
      %531 = vmatmul.mubr.f32.gmra.mrb[0].mxu0 %v530
      %v532 = vpop.f32.mrb[0].mxu0
      %v533 = vadd.f32 %v296, %v532
      %v534 = vpop.f32.mrb[0].mxu0
      %535 = vmatprep.mubr.f32.mxu0 0.0
      %v536 = vand.u32 %v336, 4294901760
      %v537 = vsub.f32 %v336, %v536
      %v538 = vand.u32 %v537, 4294901760
      %v539 = vsub.f32 %v537, %v538
      %v540 = vand.u32 %v539, 4294901760
      %541 = vmatmul.mubr.f32.gmra.mrb[0].mxu0 %v540
      %v542 = vpop.f32.mrb[0].mxu0
      %v543 = vadd.f32 %v296, %v542
      %v544 = vpop.f32.mrb[0].mxu0
      %545 = vmatprep.mubr.f32.mxu0 0.0
      %v546 = vand.u32 %v339, 4294901760
      %v547 = vsub.f32 %v339, %v546
      %v548 = vand.u32 %v547, 4294901760
      %v549 = vsub.f32 %v547, %v548
      %v550 = vand.u32 %v549, 4294901760
      %551 = vmatmul.mubr.f32.gmra.mrb[0].mxu0 %v550
      %v552 = vpop.f32.mrb[0].mxu0
      %v553 = vadd.f32 %v296, %v552
      %v554 = vpop.f32.mrb[0].mxu0
      %555 = vmatprep.mubr.f32.mxu0 0.0
      %v556 = vand.u32 %v342, 4294901760
      %v557 = vsub.f32 %v342, %v556
      %v558 = vand.u32 %v557, 4294901760
      %v559 = vsub.f32 %v557, %v558
      %v560 = vand.u32 %v559, 4294901760
      %561 = vmatmul.mubr.f32.gmra.mrb[0].mxu0 %v560
      %v562 = vpop.f32.mrb[0].mxu0
      %v563 = vadd.f32 %v296, %v562
      %v564 = vpop.f32.mrb[0].mxu0
      %565 = vmatprep.mubr.f32.mxu0 0.0
      %v566 = vand.u32 %v345, 4294901760
      %v567 = vsub.f32 %v345, %v566
      %v568 = vand.u32 %v567, 4294901760
      %v569 = vsub.f32 %v567, %v568
      %v570 = vand.u32 %v569, 4294901760
      %571 = vmatmul.mubr.f32.gmra.mrb[0].mxu0 %v570
      %v572 = vpop.f32.mrb[0].mxu0
      %v573 = vadd.f32 %v296, %v572
      %v574 = vpop.f32.mrb[0].mxu0
      %575 = vdwg.mxu0
      %576 = vmatprep.subr.mxu0 0.0
      %v577 = vand.u32 %v244, 4294901760
      %v578 = vsub.f32 %v244, %v577
      %v579 = vand.u32 %v578, 4294901760
      %v580 = vsub.f32 %v578, %v579
      %v581 = vand.u32 %v580, 4294901760
      %582 = vmatpush1.msra.mxu0 %v581
      %583 = vmatprep.subr.mxu0 0.0
      %v584 = vand.u32 %v245, 4294901760
      %v585 = vsub.f32 %v245, %v584
      %v586 = vand.u32 %v585, 4294901760
      %v587 = vsub.f32 %v585, %v586
      %v588 = vand.u32 %v587, 4294901760
      %589 = vmatpush1.msra.mxu0 %v588
      %590 = vmatprep.subr.mxu0 0.0
      %v591 = vand.u32 %v246, 4294901760
      %v592 = vsub.f32 %v246, %v591
      %v593 = vand.u32 %v592, 4294901760
      %v594 = vsub.f32 %v592, %v593
      %v595 = vand.u32 %v594, 4294901760
      %596 = vmatpush1.msra.mxu0 %v595
      %597 = vmatprep.subr.mxu0 0.0
      %v598 = vand.u32 %v247, 4294901760
      %v599 = vsub.f32 %v247, %v598
      %v600 = vand.u32 %v599, 4294901760
      %v601 = vsub.f32 %v599, %v600
      %v602 = vand.u32 %v601, 4294901760
      %603 = vmatpush1.msra.mxu0 %v602
      %604 = vmatprep.subr.mxu0 0.0
      %605 = vmatpush1.msra.mxu0 0.0
      %606 = vmatprep.subr.mxu0 0.0
      %607 = vmatpush1.msra.mxu0 0.0
      %608 = vmatprep.subr.mxu0 0.0
      %609 = vmatpush1.msra.mxu0 0.0
      %610 = vmatprep.subr.mxu0 0.0
      %611 = vmatpush1.msra.mxu0 0.0
      %612 = vmatprep.subr.mxu0 0.0
      %613 = vmatpush1.msra.mxu0 0.0
      %614 = vmatprep.subr.mxu0 0.0
      %615 = vmatpush1.msra.mxu0 0.0
      %616 = vmatprep.subr.mxu0 0.0
      %617 = vmatpush1.msra.mxu0 0.0
      %618 = vmatprep.subr.mxu0 0.0
      %619 = vmatpush1.msra.mxu0 0.0
      %620 = vmatprep.subr.mxu0 0.0
      %621 = vmatpush1.msra.mxu0 0.0
      %622 = vmatprep.subr.mxu0 0.0
      %623 = vmatpush1.msra.mxu0 0.0
      %624 = vmatprep.subr.mxu0 0.0
      %625 = vmatpush1.msra.mxu0 0.0
      %626 = vmatprep.subr.mxu0 0.0
      %627 = vmatpush1.msra.mxu0 0.0
      %628 = vmatprep.subr.mxu0 0.0
      %629 = vmatpush1.msra.mxu0 0.0
      %630 = vmatprep.subr.mxu0 0.0
      %631 = vmatpush1.msra.mxu0 0.0
      %632 = vmatprep.subr.mxu0 0.0
      %633 = vmatpush1.msra.mxu0 0.0
      %634 = vmatprep.subr.mxu0 0.0
      %635 = vmatpush1.msra.mxu0 0.0
      %636 = vmatprep.subr.mxu0 0.0
      %637 = vmatpush1.msra.mxu0 0.0
      %638 = vmatprep.subr.mxu0 0.0
      %639 = vmatpush1.msra.mxu0 0.0
      %640 = vmatprep.subr.mxu0 0.0
      %641 = vmatpush1.msra.mxu0 0.0
      %642 = vmatprep.subr.mxu0 0.0
      %643 = vmatpush1.msra.mxu0 0.0
      %644 = vmatprep.subr.mxu0 0.0
      %645 = vmatpush1.msra.mxu0 0.0
      %646 = vmatprep.subr.mxu0 0.0
      %647 = vmatpush1.msra.mxu0 0.0
      %648 = vmatprep.subr.mxu0 0.0
      %649 = vmatpush1.msra.mxu0 0.0
      %650 = vmatprep.subr.mxu0 0.0
      %651 = vmatpush1.msra.mxu0 0.0
      %652 = vmatprep.subr.mxu0 0.0
      %653 = vmatpush1.msra.mxu0 0.0
      %654 = vmatprep.subr.mxu0 0.0
      %655 = vmatpush1.msra.mxu0 0.0
      %656 = vmatprep.subr.mxu0 0.0
      %657 = vmatpush1.msra.mxu0 0.0
      %658 = vmatprep.subr.mxu0 0.0
      %659 = vmatpush1.msra.mxu0 0.0
      %660 = vmatprep.mubr.f32.mxu0 0.0
      %v661 = vand.u32 %v300, 4294901760
      %662 = vmatmul.mubr.f32.gmra.mrb[0].mxu0 %v661
      %v663 = vpop.f32.mrb[0].mxu0
      %v664 = vadd.f32 %v423, %v663
      %v665 = vpop.f32.mrb[0].mxu0
      %666 = vmatprep.mubr.f32.mxu0 0.0
      %v667 = vand.u32 %v303, 4294901760
      %668 = vmatmul.mubr.f32.gmra.mrb[0].mxu0 %v667
      %v669 = vpop.f32.mrb[0].mxu0
      %v670 = vadd.f32 %v433, %v669
      %v671 = vpop.f32.mrb[0].mxu0
      %672 = vmatprep.mubr.f32.mxu0 0.0
      %v673 = vand.u32 %v306, 4294901760
      %674 = vmatmul.mubr.f32.gmra.mrb[0].mxu0 %v673
      %v675 = vpop.f32.mrb[0].mxu0
      %v676 = vadd.f32 %v443, %v675
      %v677 = vpop.f32.mrb[0].mxu0
      %678 = vmatprep.mubr.f32.mxu0 0.0
      %v679 = vand.u32 %v309, 4294901760
      %680 = vmatmul.mubr.f32.gmra.mrb[0].mxu0 %v679
      %v681 = vpop.f32.mrb[0].mxu0
      %v682 = vadd.f32 %v453, %v681
      %v683 = vpop.f32.mrb[0].mxu0
      %684 = vmatprep.mubr.f32.mxu0 0.0
      %v685 = vand.u32 %v312, 4294901760
      %686 = vmatmul.mubr.f32.gmra.mrb[0].mxu0 %v685
      %v687 = vpop.f32.mrb[0].mxu0
      %v688 = vadd.f32 %v463, %v687
      %v689 = vpop.f32.mrb[0].mxu0
      %690 = vmatprep.mubr.f32.mxu0 0.0
      %v691 = vand.u32 %v315, 4294901760
      %692 = vmatmul.mubr.f32.gmra.mrb[0].mxu0 %v691
      %v693 = vpop.f32.mrb[0].mxu0
      %v694 = vadd.f32 %v473, %v693
      %v695 = vpop.f32.mrb[0].mxu0
      %696 = vmatprep.mubr.f32.mxu0 0.0
      %v697 = vand.u32 %v318, 4294901760
      %698 = vmatmul.mubr.f32.gmra.mrb[0].mxu0 %v697
      %v699 = vpop.f32.mrb[0].mxu0
      %v700 = vadd.f32 %v483, %v699
      %v701 = vpop.f32.mrb[0].mxu0
      %702 = vmatprep.mubr.f32.mxu0 0.0
      %v703 = vand.u32 %v321, 4294901760
      %704 = vmatmul.mubr.f32.gmra.mrb[0].mxu0 %v703
      %v705 = vpop.f32.mrb[0].mxu0
      %v706 = vadd.f32 %v493, %v705
      %v707 = vpop.f32.mrb[0].mxu0
      %708 = vmatprep.mubr.f32.mxu0 0.0
      %v709 = vand.u32 %v324, 4294901760
      %710 = vmatmul.mubr.f32.gmra.mrb[0].mxu0 %v709
      %v711 = vpop.f32.mrb[0].mxu0
      %v712 = vadd.f32 %v503, %v711
      %v713 = vpop.f32.mrb[0].mxu0
      %714 = vmatprep.mubr.f32.mxu0 0.0
      %v715 = vand.u32 %v327, 4294901760
      %716 = vmatmul.mubr.f32.gmra.mrb[0].mxu0 %v715
      %v717 = vpop.f32.mrb[0].mxu0
      %v718 = vadd.f32 %v513, %v717
      %v719 = vpop.f32.mrb[0].mxu0
      %720 = vmatprep.mubr.f32.mxu0 0.0
      %v721 = vand.u32 %v330, 4294901760
      %722 = vmatmul.mubr.f32.gmra.mrb[0].mxu0 %v721
      %v723 = vpop.f32.mrb[0].mxu0
      %v724 = vadd.f32 %v523, %v723
      %v725 = vpop.f32.mrb[0].mxu0
      %726 = vmatprep.mubr.f32.mxu0 0.0
      %v727 = vand.u32 %v333, 4294901760
      %728 = vmatmul.mubr.f32.gmra.mrb[0].mxu0 %v727
      %v729 = vpop.f32.mrb[0].mxu0
      %v730 = vadd.f32 %v533, %v729
      %v731 = vpop.f32.mrb[0].mxu0
      %732 = vmatprep.mubr.f32.mxu0 0.0
      %v733 = vand.u32 %v336, 4294901760
      %734 = vmatmul.mubr.f32.gmra.mrb[0].mxu0 %v733
      %v735 = vpop.f32.mrb[0].mxu0
      %v736 = vadd.f32 %v543, %v735
      %v737 = vpop.f32.mrb[0].mxu0
      %738 = vmatprep.mubr.f32.mxu0 0.0
      %v739 = vand.u32 %v339, 4294901760
      %740 = vmatmul.mubr.f32.gmra.mrb[0].mxu0 %v739
      %v741 = vpop.f32.mrb[0].mxu0
      %v742 = vadd.f32 %v553, %v741
      %v743 = vpop.f32.mrb[0].mxu0
      %744 = vmatprep.mubr.f32.mxu0 0.0
      %v745 = vand.u32 %v342, 4294901760
      %746 = vmatmul.mubr.f32.gmra.mrb[0].mxu0 %v745
      %v747 = vpop.f32.mrb[0].mxu0
      %v748 = vadd.f32 %v563, %v747
      %v749 = vpop.f32.mrb[0].mxu0
      %750 = vmatprep.mubr.f32.mxu0 0.0
      %v751 = vand.u32 %v345, 4294901760
      %752 = vmatmul.mubr.f32.gmra.mrb[0].mxu0 %v751
      %v753 = vpop.f32.mrb[0].mxu0
      %v754 = vadd.f32 %v573, %v753
      %v755 = vpop.f32.mrb[0].mxu0
      %756 = vdwg.mxu0
      %757 = vmatprep.subr.mxu0 0.0
      %v758 = vand.u32 %v244, 4294901760
      %v759 = vsub.f32 %v244, %v758
      %760 = vmatpush1.msra.mxu0 %v759
      %761 = vmatprep.subr.mxu0 0.0
      %v762 = vand.u32 %v245, 4294901760
      %v763 = vsub.f32 %v245, %v762
      %764 = vmatpush1.msra.mxu0 %v763
      %765 = vmatprep.subr.mxu0 0.0
      %v766 = vand.u32 %v246, 4294901760
      %v767 = vsub.f32 %v246, %v766
      %768 = vmatpush1.msra.mxu0 %v767
      %769 = vmatprep.subr.mxu0 0.0
      %v770 = vand.u32 %v247, 4294901760
      %v771 = vsub.f32 %v247, %v770
      %772 = vmatpush1.msra.mxu0 %v771
      %773 = vmatprep.subr.mxu0 0.0
      %774 = vmatpush1.msra.mxu0 0.0
      %775 = vmatprep.subr.mxu0 0.0
      %776 = vmatpush1.msra.mxu0 0.0
      %777 = vmatprep.subr.mxu0 0.0
      %778 = vmatpush1.msra.mxu0 0.0
      %779 = vmatprep.subr.mxu0 0.0
      %780 = vmatpush1.msra.mxu0 0.0
      %781 = vmatprep.subr.mxu0 0.0
      %782 = vmatpush1.msra.mxu0 0.0
      %783 = vmatprep.subr.mxu0 0.0
      %784 = vmatpush1.msra.mxu0 0.0
      %785 = vmatprep.subr.mxu0 0.0
      %786 = vmatpush1.msra.mxu0 0.0
      %787 = vmatprep.subr.mxu0 0.0
      %788 = vmatpush1.msra.mxu0 0.0
      %789 = vmatprep.subr.mxu0 0.0
      %790 = vmatpush1.msra.mxu0 0.0
      %791 = vmatprep.subr.mxu0 0.0
      %792 = vmatpush1.msra.mxu0 0.0
      %793 = vmatprep.subr.mxu0 0.0
      %794 = vmatpush1.msra.mxu0 0.0
      %795 = vmatprep.subr.mxu0 0.0
      %796 = vmatpush1.msra.mxu0 0.0
      %797 = vmatprep.subr.mxu0 0.0
      %798 = vmatpush1.msra.mxu0 0.0
      %799 = vmatprep.subr.mxu0 0.0
      %800 = vmatpush1.msra.mxu0 0.0
      %801 = vmatprep.subr.mxu0 0.0
      %802 = vmatpush1.msra.mxu0 0.0
      %803 = vmatprep.subr.mxu0 0.0
      %804 = vmatpush1.msra.mxu0 0.0
      %805 = vmatprep.subr.mxu0 0.0
      %806 = vmatpush1.msra.mxu0 0.0
      %807 = vmatprep.subr.mxu0 0.0
      %808 = vmatpush1.msra.mxu0 0.0
      %809 = vmatprep.subr.mxu0 0.0
      %810 = vmatpush1.msra.mxu0 0.0
      %811 = vmatprep.subr.mxu0 0.0
      %812 = vmatpush1.msra.mxu0 0.0
      %813 = vmatprep.subr.mxu0 0.0
      %814 = vmatpush1.msra.mxu0 0.0
      %815 = vmatprep.subr.mxu0 0.0
      %816 = vmatpush1.msra.mxu0 0.0
      %817 = vmatprep.subr.mxu0 0.0
      %818 = vmatpush1.msra.mxu0 0.0
      %819 = vmatprep.subr.mxu0 0.0
      %820 = vmatpush1.msra.mxu0 0.0
      %821 = vmatprep.subr.mxu0 0.0
      %822 = vmatpush1.msra.mxu0 0.0
      %823 = vmatprep.subr.mxu0 0.0
      %824 = vmatpush1.msra.mxu0 0.0
      %825 = vmatprep.subr.mxu0 0.0
      %826 = vmatpush1.msra.mxu0 0.0
      %827 = vmatprep.subr.mxu0 0.0
      %828 = vmatpush1.msra.mxu0 0.0
      %829 = vmatprep.mubr.f32.mxu0 0.0
      %v830 = vand.u32 %v300, 4294901760
      %v831 = vsub.f32 %v300, %v830
      %832 = vmatmul.mubr.f32.gmra.mrb[0].mxu0 %v831
      %v833 = vpop.f32.mrb[0].mxu0
      %v834 = vadd.f32 %v664, %v833
      %v835 = vpop.f32.mrb[0].mxu0
      %836 = vmatprep.mubr.f32.mxu0 0.0
      %v837 = vand.u32 %v303, 4294901760
      %v838 = vsub.f32 %v303, %v837
      %839 = vmatmul.mubr.f32.gmra.mrb[0].mxu0 %v838
      %v840 = vpop.f32.mrb[0].mxu0
      %v841 = vadd.f32 %v670, %v840
      %v842 = vpop.f32.mrb[0].mxu0
      %843 = vmatprep.mubr.f32.mxu0 0.0
      %v844 = vand.u32 %v306, 4294901760
      %v845 = vsub.f32 %v306, %v844
      %846 = vmatmul.mubr.f32.gmra.mrb[0].mxu0 %v845
      %v847 = vpop.f32.mrb[0].mxu0
      %v848 = vadd.f32 %v676, %v847
      %v849 = vpop.f32.mrb[0].mxu0
      %850 = vmatprep.mubr.f32.mxu0 0.0
      %v851 = vand.u32 %v309, 4294901760
      %v852 = vsub.f32 %v309, %v851
      %853 = vmatmul.mubr.f32.gmra.mrb[0].mxu0 %v852
      %v854 = vpop.f32.mrb[0].mxu0
      %v855 = vadd.f32 %v682, %v854
      %v856 = vpop.f32.mrb[0].mxu0
      %857 = vmatprep.mubr.f32.mxu0 0.0
      %v858 = vand.u32 %v312, 4294901760
      %v859 = vsub.f32 %v312, %v858
      %860 = vmatmul.mubr.f32.gmra.mrb[0].mxu0 %v859
      %v861 = vpop.f32.mrb[0].mxu0
      %v862 = vadd.f32 %v688, %v861
      %v863 = vpop.f32.mrb[0].mxu0
      %864 = vmatprep.mubr.f32.mxu0 0.0
      %v865 = vand.u32 %v315, 4294901760
      %v866 = vsub.f32 %v315, %v865
      %867 = vmatmul.mubr.f32.gmra.mrb[0].mxu0 %v866
      %v868 = vpop.f32.mrb[0].mxu0
      %v869 = vadd.f32 %v694, %v868
      %v870 = vpop.f32.mrb[0].mxu0
      %871 = vmatprep.mubr.f32.mxu0 0.0
      %v872 = vand.u32 %v318, 4294901760
      %v873 = vsub.f32 %v318, %v872
      %874 = vmatmul.mubr.f32.gmra.mrb[0].mxu0 %v873
      %v875 = vpop.f32.mrb[0].mxu0
      %v876 = vadd.f32 %v700, %v875
      %v877 = vpop.f32.mrb[0].mxu0
      %878 = vmatprep.mubr.f32.mxu0 0.0
      %v879 = vand.u32 %v321, 4294901760
      %v880 = vsub.f32 %v321, %v879
      %881 = vmatmul.mubr.f32.gmra.mrb[0].mxu0 %v880
      %v882 = vpop.f32.mrb[0].mxu0
      %v883 = vadd.f32 %v706, %v882
      %v884 = vpop.f32.mrb[0].mxu0
      %885 = vmatprep.mubr.f32.mxu0 0.0
      %v886 = vand.u32 %v324, 4294901760
      %v887 = vsub.f32 %v324, %v886
      %888 = vmatmul.mubr.f32.gmra.mrb[0].mxu0 %v887
      %v889 = vpop.f32.mrb[0].mxu0
      %v890 = vadd.f32 %v712, %v889
      %v891 = vpop.f32.mrb[0].mxu0
      %892 = vmatprep.mubr.f32.mxu0 0.0
      %v893 = vand.u32 %v327, 4294901760
      %v894 = vsub.f32 %v327, %v893
      %895 = vmatmul.mubr.f32.gmra.mrb[0].mxu0 %v894
      %v896 = vpop.f32.mrb[0].mxu0
      %v897 = vadd.f32 %v718, %v896
      %v898 = vpop.f32.mrb[0].mxu0
      %899 = vmatprep.mubr.f32.mxu0 0.0
      %v900 = vand.u32 %v330, 4294901760
      %v901 = vsub.f32 %v330, %v900
      %902 = vmatmul.mubr.f32.gmra.mrb[0].mxu0 %v901
      %v903 = vpop.f32.mrb[0].mxu0
      %v904 = vadd.f32 %v724, %v903
      %v905 = vpop.f32.mrb[0].mxu0
      %906 = vmatprep.mubr.f32.mxu0 0.0
      %v907 = vand.u32 %v333, 4294901760
      %v908 = vsub.f32 %v333, %v907
      %909 = vmatmul.mubr.f32.gmra.mrb[0].mxu0 %v908
      %v910 = vpop.f32.mrb[0].mxu0
      %v911 = vadd.f32 %v730, %v910
      %v912 = vpop.f32.mrb[0].mxu0
      %913 = vmatprep.mubr.f32.mxu0 0.0
      %v914 = vand.u32 %v336, 4294901760
      %v915 = vsub.f32 %v336, %v914
      %916 = vmatmul.mubr.f32.gmra.mrb[0].mxu0 %v915
      %v917 = vpop.f32.mrb[0].mxu0
      %v918 = vadd.f32 %v736, %v917
      %v919 = vpop.f32.mrb[0].mxu0
      %920 = vmatprep.mubr.f32.mxu0 0.0
      %v921 = vand.u32 %v339, 4294901760
      %v922 = vsub.f32 %v339, %v921
      %923 = vmatmul.mubr.f32.gmra.mrb[0].mxu0 %v922
      %v924 = vpop.f32.mrb[0].mxu0
      %v925 = vadd.f32 %v742, %v924
      %v926 = vpop.f32.mrb[0].mxu0
      %927 = vmatprep.mubr.f32.mxu0 0.0
      %v928 = vand.u32 %v342, 4294901760
      %v929 = vsub.f32 %v342, %v928
      %930 = vmatmul.mubr.f32.gmra.mrb[0].mxu0 %v929
      %v931 = vpop.f32.mrb[0].mxu0
      %v932 = vadd.f32 %v748, %v931
      %v933 = vpop.f32.mrb[0].mxu0
      %934 = vmatprep.mubr.f32.mxu0 0.0
      %v935 = vand.u32 %v345, 4294901760
      %v936 = vsub.f32 %v345, %v935
      %937 = vmatmul.mubr.f32.gmra.mrb[0].mxu0 %v936
      %v938 = vpop.f32.mrb[0].mxu0
      %v939 = vadd.f32 %v754, %v938
      %v940 = vpop.f32.mrb[0].mxu0
      %941 = vdwg.mxu0
      %942 = vmatprep.subr.mxu0 0.0
      %v943 = vand.u32 %v244, 4294901760
      %944 = vmatpush1.msra.mxu0 %v943
      %945 = vmatprep.subr.mxu0 0.0
      %v946 = vand.u32 %v245, 4294901760
      %947 = vmatpush1.msra.mxu0 %v946
      %948 = vmatprep.subr.mxu0 0.0
      %v949 = vand.u32 %v246, 4294901760
      %950 = vmatpush1.msra.mxu0 %v949
      %951 = vmatprep.subr.mxu0 0.0
      %v952 = vand.u32 %v247, 4294901760
      %953 = vmatpush1.msra.mxu0 %v952
      %954 = vmatprep.subr.mxu0 0.0
      %955 = vmatpush1.msra.mxu0 0.0
      %956 = vmatprep.subr.mxu0 0.0
      %957 = vmatpush1.msra.mxu0 0.0
      %958 = vmatprep.subr.mxu0 0.0
      %959 = vmatpush1.msra.mxu0 0.0
      %960 = vmatprep.subr.mxu0 0.0
      %961 = vmatpush1.msra.mxu0 0.0
      %962 = vmatprep.subr.mxu0 0.0
      %963 = vmatpush1.msra.mxu0 0.0
      %964 = vmatprep.subr.mxu0 0.0
      %965 = vmatpush1.msra.mxu0 0.0
      %966 = vmatprep.subr.mxu0 0.0
      %967 = vmatpush1.msra.mxu0 0.0
      %968 = vmatprep.subr.mxu0 0.0
      %969 = vmatpush1.msra.mxu0 0.0
      %970 = vmatprep.subr.mxu0 0.0
      %971 = vmatpush1.msra.mxu0 0.0
      %972 = vmatprep.subr.mxu0 0.0
      %973 = vmatpush1.msra.mxu0 0.0
      %974 = vmatprep.subr.mxu0 0.0
      %975 = vmatpush1.msra.mxu0 0.0
      %976 = vmatprep.subr.mxu0 0.0
      %977 = vmatpush1.msra.mxu0 0.0
      %978 = vmatprep.subr.mxu0 0.0
      %979 = vmatpush1.msra.mxu0 0.0
      %980 = vmatprep.subr.mxu0 0.0
      %981 = vmatpush1.msra.mxu0 0.0
      %982 = vmatprep.subr.mxu0 0.0
      %983 = vmatpush1.msra.mxu0 0.0
      %984 = vmatprep.subr.mxu0 0.0
      %985 = vmatpush1.msra.mxu0 0.0
      %986 = vmatprep.subr.mxu0 0.0
      %987 = vmatpush1.msra.mxu0 0.0
      %988 = vmatprep.subr.mxu0 0.0
      %989 = vmatpush1.msra.mxu0 0.0
      %990 = vmatprep.subr.mxu0 0.0
      %991 = vmatpush1.msra.mxu0 0.0
      %992 = vmatprep.subr.mxu0 0.0
      %993 = vmatpush1.msra.mxu0 0.0
      %994 = vmatprep.subr.mxu0 0.0
      %995 = vmatpush1.msra.mxu0 0.0
      %996 = vmatprep.subr.mxu0 0.0
      %997 = vmatpush1.msra.mxu0 0.0
      %998 = vmatprep.subr.mxu0 0.0
      %999 = vmatpush1.msra.mxu0 0.0
      %1000 = vmatprep.subr.mxu0 0.0
      %1001 = vmatpush1.msra.mxu0 0.0
      %1002 = vmatprep.subr.mxu0 0.0
      %1003 = vmatpush1.msra.mxu0 0.0
      %1004 = vmatprep.subr.mxu0 0.0
      %1005 = vmatpush1.msra.mxu0 0.0
      %1006 = vmatprep.subr.mxu0 0.0
      %1007 = vmatpush1.msra.mxu0 0.0
      %1008 = vmatprep.subr.mxu0 0.0
      %1009 = vmatpush1.msra.mxu0 0.0
      %1010 = vmatprep.mubr.f32.mxu0 0.0
      %v1011 = vand.u32 %v300, 4294901760
      %v1012 = vsub.f32 %v300, %v1011
      %v1013 = vand.u32 %v1012, 4294901760
      %1014 = vmatmul.mubr.f32.gmra.mrb[0].mxu0 %v1013
      %v1015 = vpop.f32.mrb[0].mxu0
      %v1016 = vadd.f32 %v834, %v1015
      %v1017 = vpop.f32.mrb[0].mxu0
      %1018 = vmatprep.mubr.f32.mxu0 0.0
      %v1019 = vand.u32 %v303, 4294901760
      %v1020 = vsub.f32 %v303, %v1019
      %v1021 = vand.u32 %v1020, 4294901760
      %1022 = vmatmul.mubr.f32.gmra.mrb[0].mxu0 %v1021
      %v1023 = vpop.f32.mrb[0].mxu0
      %v1024 = vadd.f32 %v841, %v1023
      %v1025 = vpop.f32.mrb[0].mxu0
      %1026 = vmatprep.mubr.f32.mxu0 0.0
      %v1027 = vand.u32 %v306, 4294901760
      %v1028 = vsub.f32 %v306, %v1027
      %v1029 = vand.u32 %v1028, 4294901760
      %1030 = vmatmul.mubr.f32.gmra.mrb[0].mxu0 %v1029
      %v1031 = vpop.f32.mrb[0].mxu0
      %v1032 = vadd.f32 %v848, %v1031
      %v1033 = vpop.f32.mrb[0].mxu0
      %1034 = vmatprep.mubr.f32.mxu0 0.0
      %v1035 = vand.u32 %v309, 4294901760
      %v1036 = vsub.f32 %v309, %v1035
      %v1037 = vand.u32 %v1036, 4294901760
      %1038 = vmatmul.mubr.f32.gmra.mrb[0].mxu0 %v1037
      %v1039 = vpop.f32.mrb[0].mxu0
      %v1040 = vadd.f32 %v855, %v1039
      %v1041 = vpop.f32.mrb[0].mxu0
      %1042 = vmatprep.mubr.f32.mxu0 0.0
      %v1043 = vand.u32 %v312, 4294901760
      %v1044 = vsub.f32 %v312, %v1043
      %v1045 = vand.u32 %v1044, 4294901760
      %1046 = vmatmul.mubr.f32.gmra.mrb[0].mxu0 %v1045
      %v1047 = vpop.f32.mrb[0].mxu0
      %v1048 = vadd.f32 %v862, %v1047
      %v1049 = vpop.f32.mrb[0].mxu0
      %1050 = vmatprep.mubr.f32.mxu0 0.0
      %v1051 = vand.u32 %v315, 4294901760
      %v1052 = vsub.f32 %v315, %v1051
      %v1053 = vand.u32 %v1052, 4294901760
      %1054 = vmatmul.mubr.f32.gmra.mrb[0].mxu0 %v1053
      %v1055 = vpop.f32.mrb[0].mxu0
      %v1056 = vadd.f32 %v869, %v1055
      %v1057 = vpop.f32.mrb[0].mxu0
      %1058 = vmatprep.mubr.f32.mxu0 0.0
      %v1059 = vand.u32 %v318, 4294901760
      %v1060 = vsub.f32 %v318, %v1059
      %v1061 = vand.u32 %v1060, 4294901760
      %1062 = vmatmul.mubr.f32.gmra.mrb[0].mxu0 %v1061
      %v1063 = vpop.f32.mrb[0].mxu0
      %v1064 = vadd.f32 %v876, %v1063
      %v1065 = vpop.f32.mrb[0].mxu0
      %1066 = vmatprep.mubr.f32.mxu0 0.0
      %v1067 = vand.u32 %v321, 4294901760
      %v1068 = vsub.f32 %v321, %v1067
      %v1069 = vand.u32 %v1068, 4294901760
      %1070 = vmatmul.mubr.f32.gmra.mrb[0].mxu0 %v1069
      %v1071 = vpop.f32.mrb[0].mxu0
      %v1072 = vadd.f32 %v883, %v1071
      %v1073 = vpop.f32.mrb[0].mxu0
      %1074 = vmatprep.mubr.f32.mxu0 0.0
      %v1075 = vand.u32 %v324, 4294901760
      %v1076 = vsub.f32 %v324, %v1075
      %v1077 = vand.u32 %v1076, 4294901760
      %1078 = vmatmul.mubr.f32.gmra.mrb[0].mxu0 %v1077
      %v1079 = vpop.f32.mrb[0].mxu0
      %v1080 = vadd.f32 %v890, %v1079
      %v1081 = vpop.f32.mrb[0].mxu0
      %1082 = vmatprep.mubr.f32.mxu0 0.0
      %v1083 = vand.u32 %v327, 4294901760
      %v1084 = vsub.f32 %v327, %v1083
      %v1085 = vand.u32 %v1084, 4294901760
      %1086 = vmatmul.mubr.f32.gmra.mrb[0].mxu0 %v1085
      %v1087 = vpop.f32.mrb[0].mxu0
      %v1088 = vadd.f32 %v897, %v1087
      %v1089 = vpop.f32.mrb[0].mxu0
      %1090 = vmatprep.mubr.f32.mxu0 0.0
      %v1091 = vand.u32 %v330, 4294901760
      %v1092 = vsub.f32 %v330, %v1091
      %v1093 = vand.u32 %v1092, 4294901760
      %1094 = vmatmul.mubr.f32.gmra.mrb[0].mxu0 %v1093
      %v1095 = vpop.f32.mrb[0].mxu0
      %v1096 = vadd.f32 %v904, %v1095
      %v1097 = vpop.f32.mrb[0].mxu0
      %1098 = vmatprep.mubr.f32.mxu0 0.0
      %v1099 = vand.u32 %v333, 4294901760
      %v1100 = vsub.f32 %v333, %v1099
      %v1101 = vand.u32 %v1100, 4294901760
      %1102 = vmatmul.mubr.f32.gmra.mrb[0].mxu0 %v1101
      %v1103 = vpop.f32.mrb[0].mxu0
      %v1104 = vadd.f32 %v911, %v1103
      %v1105 = vpop.f32.mrb[0].mxu0
      %1106 = vmatprep.mubr.f32.mxu0 0.0
      %v1107 = vand.u32 %v336, 4294901760
      %v1108 = vsub.f32 %v336, %v1107
      %v1109 = vand.u32 %v1108, 4294901760
      %1110 = vmatmul.mubr.f32.gmra.mrb[0].mxu0 %v1109
      %v1111 = vpop.f32.mrb[0].mxu0
      %v1112 = vadd.f32 %v918, %v1111
      %v1113 = vpop.f32.mrb[0].mxu0
      %1114 = vmatprep.mubr.f32.mxu0 0.0
      %v1115 = vand.u32 %v339, 4294901760
      %v1116 = vsub.f32 %v339, %v1115
      %v1117 = vand.u32 %v1116, 4294901760
      %1118 = vmatmul.mubr.f32.gmra.mrb[0].mxu0 %v1117
      %v1119 = vpop.f32.mrb[0].mxu0
      %v1120 = vadd.f32 %v925, %v1119
      %v1121 = vpop.f32.mrb[0].mxu0
      %1122 = vmatprep.mubr.f32.mxu0 0.0
      %v1123 = vand.u32 %v342, 4294901760
      %v1124 = vsub.f32 %v342, %v1123
      %v1125 = vand.u32 %v1124, 4294901760
      %1126 = vmatmul.mubr.f32.gmra.mrb[0].mxu0 %v1125
      %v1127 = vpop.f32.mrb[0].mxu0
      %v1128 = vadd.f32 %v932, %v1127
      %v1129 = vpop.f32.mrb[0].mxu0
      %1130 = vmatprep.mubr.f32.mxu0 0.0
      %v1131 = vand.u32 %v345, 4294901760
      %v1132 = vsub.f32 %v345, %v1131
      %v1133 = vand.u32 %v1132, 4294901760
      %1134 = vmatmul.mubr.f32.gmra.mrb[0].mxu0 %v1133
      %v1135 = vpop.f32.mrb[0].mxu0
      %v1136 = vadd.f32 %v939, %v1135
      %v1137 = vpop.f32.mrb[0].mxu0
      %1138 = vdwg.mxu0
      %1139 = vmatprep.subr.mxu0 0.0
      %v1140 = vand.u32 %v244, 4294901760
      %v1141 = vsub.f32 %v244, %v1140
      %v1142 = vand.u32 %v1141, 4294901760
      %1143 = vmatpush1.msra.mxu0 %v1142
      %1144 = vmatprep.subr.mxu0 0.0
      %v1145 = vand.u32 %v245, 4294901760
      %v1146 = vsub.f32 %v245, %v1145
      %v1147 = vand.u32 %v1146, 4294901760
      %1148 = vmatpush1.msra.mxu0 %v1147
      %1149 = vmatprep.subr.mxu0 0.0
      %v1150 = vand.u32 %v246, 4294901760
      %v1151 = vsub.f32 %v246, %v1150
      %v1152 = vand.u32 %v1151, 4294901760
      %1153 = vmatpush1.msra.mxu0 %v1152
      %1154 = vmatprep.subr.mxu0 0.0
      %v1155 = vand.u32 %v247, 4294901760
      %v1156 = vsub.f32 %v247, %v1155
      %v1157 = vand.u32 %v1156, 4294901760
      %1158 = vmatpush1.msra.mxu0 %v1157
      %1159 = vmatprep.subr.mxu0 0.0
      %1160 = vmatpush1.msra.mxu0 0.0
      %1161 = vmatprep.subr.mxu0 0.0
      %1162 = vmatpush1.msra.mxu0 0.0
      %1163 = vmatprep.subr.mxu0 0.0
      %1164 = vmatpush1.msra.mxu0 0.0
      %1165 = vmatprep.subr.mxu0 0.0
      %1166 = vmatpush1.msra.mxu0 0.0
      %1167 = vmatprep.subr.mxu0 0.0
      %1168 = vmatpush1.msra.mxu0 0.0
      %1169 = vmatprep.subr.mxu0 0.0
      %1170 = vmatpush1.msra.mxu0 0.0
      %1171 = vmatprep.subr.mxu0 0.0
      %1172 = vmatpush1.msra.mxu0 0.0
      %1173 = vmatprep.subr.mxu0 0.0
      %1174 = vmatpush1.msra.mxu0 0.0
      %1175 = vmatprep.subr.mxu0 0.0
      %1176 = vmatpush1.msra.mxu0 0.0
      %1177 = vmatprep.subr.mxu0 0.0
      %1178 = vmatpush1.msra.mxu0 0.0
      %1179 = vmatprep.subr.mxu0 0.0
      %1180 = vmatpush1.msra.mxu0 0.0
      %1181 = vmatprep.subr.mxu0 0.0
      %1182 = vmatpush1.msra.mxu0 0.0
      %1183 = vmatprep.subr.mxu0 0.0
      %1184 = vmatpush1.msra.mxu0 0.0
      %1185 = vmatprep.subr.mxu0 0.0
      %1186 = vmatpush1.msra.mxu0 0.0
      %1187 = vmatprep.subr.mxu0 0.0
      %1188 = vmatpush1.msra.mxu0 0.0
      %1189 = vmatprep.subr.mxu0 0.0
      %1190 = vmatpush1.msra.mxu0 0.0
      %1191 = vmatprep.subr.mxu0 0.0
      %1192 = vmatpush1.msra.mxu0 0.0
      %1193 = vmatprep.subr.mxu0 0.0
      %1194 = vmatpush1.msra.mxu0 0.0
      %1195 = vmatprep.subr.mxu0 0.0
      %1196 = vmatpush1.msra.mxu0 0.0
      %1197 = vmatprep.subr.mxu0 0.0
      %1198 = vmatpush1.msra.mxu0 0.0
      %1199 = vmatprep.subr.mxu0 0.0
      %1200 = vmatpush1.msra.mxu0 0.0
      %1201 = vmatprep.subr.mxu0 0.0
      %1202 = vmatpush1.msra.mxu0 0.0
      %1203 = vmatprep.subr.mxu0 0.0
      %1204 = vmatpush1.msra.mxu0 0.0
      %1205 = vmatprep.subr.mxu0 0.0
      %1206 = vmatpush1.msra.mxu0 0.0
      %1207 = vmatprep.subr.mxu0 0.0
      %1208 = vmatpush1.msra.mxu0 0.0
      %1209 = vmatprep.subr.mxu0 0.0
      %1210 = vmatpush1.msra.mxu0 0.0
      %1211 = vmatprep.subr.mxu0 0.0
      %1212 = vmatpush1.msra.mxu0 0.0
      %1213 = vmatprep.subr.mxu0 0.0
      %1214 = vmatpush1.msra.mxu0 0.0
      %1215 = vmatprep.mubr.f32.mxu0 0.0
      %v1216 = vand.u32 %v300, 4294901760
      %1217 = vmatmul.mubr.f32.gmra.mrb[0].mxu0 %v1216
      %v1218 = vpop.f32.mrb[0].mxu0
      %v1219 = vadd.f32 %v1016, %v1218
      %v1220 = vpop.f32.mrb[0].mxu0
      %1221 = vmatprep.mubr.f32.mxu0 0.0
      %v1222 = vand.u32 %v303, 4294901760
      %1223 = vmatmul.mubr.f32.gmra.mrb[0].mxu0 %v1222
      %v1224 = vpop.f32.mrb[0].mxu0
      %v1225 = vadd.f32 %v1024, %v1224
      %v1226 = vpop.f32.mrb[0].mxu0
      %1227 = vmatprep.mubr.f32.mxu0 0.0
      %v1228 = vand.u32 %v306, 4294901760
      %1229 = vmatmul.mubr.f32.gmra.mrb[0].mxu0 %v1228
      %v1230 = vpop.f32.mrb[0].mxu0
      %v1231 = vadd.f32 %v1032, %v1230
      %v1232 = vpop.f32.mrb[0].mxu0
      %1233 = vmatprep.mubr.f32.mxu0 0.0
      %v1234 = vand.u32 %v309, 4294901760
      %1235 = vmatmul.mubr.f32.gmra.mrb[0].mxu0 %v1234
      %v1236 = vpop.f32.mrb[0].mxu0
      %v1237 = vadd.f32 %v1040, %v1236
      %v1238 = vpop.f32.mrb[0].mxu0
      %1239 = vmatprep.mubr.f32.mxu0 0.0
      %v1240 = vand.u32 %v312, 4294901760
      %1241 = vmatmul.mubr.f32.gmra.mrb[0].mxu0 %v1240
      %v1242 = vpop.f32.mrb[0].mxu0
      %v1243 = vadd.f32 %v1048, %v1242
      %v1244 = vpop.f32.mrb[0].mxu0
      %1245 = vmatprep.mubr.f32.mxu0 0.0
      %v1246 = vand.u32 %v315, 4294901760
      %1247 = vmatmul.mubr.f32.gmra.mrb[0].mxu0 %v1246
      %v1248 = vpop.f32.mrb[0].mxu0
      %v1249 = vadd.f32 %v1056, %v1248
      %v1250 = vpop.f32.mrb[0].mxu0
      %1251 = vmatprep.mubr.f32.mxu0 0.0
      %v1252 = vand.u32 %v318, 4294901760
      %1253 = vmatmul.mubr.f32.gmra.mrb[0].mxu0 %v1252
      %v1254 = vpop.f32.mrb[0].mxu0
      %v1255 = vadd.f32 %v1064, %v1254
      %v1256 = vpop.f32.mrb[0].mxu0
      %1257 = vmatprep.mubr.f32.mxu0 0.0
      %v1258 = vand.u32 %v321, 4294901760
      %1259 = vmatmul.mubr.f32.gmra.mrb[0].mxu0 %v1258
      %v1260 = vpop.f32.mrb[0].mxu0
      %v1261 = vadd.f32 %v1072, %v1260
      %v1262 = vpop.f32.mrb[0].mxu0
      %1263 = vmatprep.mubr.f32.mxu0 0.0
      %v1264 = vand.u32 %v324, 4294901760
      %1265 = vmatmul.mubr.f32.gmra.mrb[0].mxu0 %v1264
      %v1266 = vpop.f32.mrb[0].mxu0
      %v1267 = vadd.f32 %v1080, %v1266
      %v1268 = vpop.f32.mrb[0].mxu0
      %1269 = vmatprep.mubr.f32.mxu0 0.0
      %v1270 = vand.u32 %v327, 4294901760
      %1271 = vmatmul.mubr.f32.gmra.mrb[0].mxu0 %v1270
      %v1272 = vpop.f32.mrb[0].mxu0
      %v1273 = vadd.f32 %v1088, %v1272
      %v1274 = vpop.f32.mrb[0].mxu0
      %1275 = vmatprep.mubr.f32.mxu0 0.0
      %v1276 = vand.u32 %v330, 4294901760
      %1277 = vmatmul.mubr.f32.gmra.mrb[0].mxu0 %v1276
      %v1278 = vpop.f32.mrb[0].mxu0
      %v1279 = vadd.f32 %v1096, %v1278
      %v1280 = vpop.f32.mrb[0].mxu0
      %1281 = vmatprep.mubr.f32.mxu0 0.0
      %v1282 = vand.u32 %v333, 4294901760
      %1283 = vmatmul.mubr.f32.gmra.mrb[0].mxu0 %v1282
      %v1284 = vpop.f32.mrb[0].mxu0
      %v1285 = vadd.f32 %v1104, %v1284
      %v1286 = vpop.f32.mrb[0].mxu0
      %1287 = vmatprep.mubr.f32.mxu0 0.0
      %v1288 = vand.u32 %v336, 4294901760
      %1289 = vmatmul.mubr.f32.gmra.mrb[0].mxu0 %v1288
      %v1290 = vpop.f32.mrb[0].mxu0
      %v1291 = vadd.f32 %v1112, %v1290
      %v1292 = vpop.f32.mrb[0].mxu0
      %1293 = vmatprep.mubr.f32.mxu0 0.0
      %v1294 = vand.u32 %v339, 4294901760
      %1295 = vmatmul.mubr.f32.gmra.mrb[0].mxu0 %v1294
      %v1296 = vpop.f32.mrb[0].mxu0
      %v1297 = vadd.f32 %v1120, %v1296
      %v1298 = vpop.f32.mrb[0].mxu0
      %1299 = vmatprep.mubr.f32.mxu0 0.0
      %v1300 = vand.u32 %v342, 4294901760
      %1301 = vmatmul.mubr.f32.gmra.mrb[0].mxu0 %v1300
      %v1302 = vpop.f32.mrb[0].mxu0
      %v1303 = vadd.f32 %v1128, %v1302
      %v1304 = vpop.f32.mrb[0].mxu0
      %1305 = vmatprep.mubr.f32.mxu0 0.0
      %v1306 = vand.u32 %v345, 4294901760
      %1307 = vmatmul.mubr.f32.gmra.mrb[0].mxu0 %v1306
      %v1308 = vpop.f32.mrb[0].mxu0
      %v1309 = vadd.f32 %v1136, %v1308
      %v1310 = vpop.f32.mrb[0].mxu0
      %1311 = vdwg.mxu0
      %1312 = vmatprep.subr.mxu0 0.0
      %v1313 = vand.u32 %v244, 4294901760
      %1314 = vmatpush1.msra.mxu0 %v1313
      %1315 = vmatprep.subr.mxu0 0.0
      %v1316 = vand.u32 %v245, 4294901760
      %1317 = vmatpush1.msra.mxu0 %v1316
      %1318 = vmatprep.subr.mxu0 0.0
      %v1319 = vand.u32 %v246, 4294901760
      %1320 = vmatpush1.msra.mxu0 %v1319
      %1321 = vmatprep.subr.mxu0 0.0
      %v1322 = vand.u32 %v247, 4294901760
      %1323 = vmatpush1.msra.mxu0 %v1322
      %1324 = vmatprep.subr.mxu0 0.0
      %1325 = vmatpush1.msra.mxu0 0.0
      %1326 = vmatprep.subr.mxu0 0.0
      %1327 = vmatpush1.msra.mxu0 0.0
      %1328 = vmatprep.subr.mxu0 0.0
      %1329 = vmatpush1.msra.mxu0 0.0
      %1330 = vmatprep.subr.mxu0 0.0
      %1331 = vmatpush1.msra.mxu0 0.0
      %1332 = vmatprep.subr.mxu0 0.0
      %1333 = vmatpush1.msra.mxu0 0.0
      %1334 = vmatprep.subr.mxu0 0.0
      %1335 = vmatpush1.msra.mxu0 0.0
      %1336 = vmatprep.subr.mxu0 0.0
      %1337 = vmatpush1.msra.mxu0 0.0
      %1338 = vmatprep.subr.mxu0 0.0
      %1339 = vmatpush1.msra.mxu0 0.0
      %1340 = vmatprep.subr.mxu0 0.0
      %1341 = vmatpush1.msra.mxu0 0.0
      %1342 = vmatprep.subr.mxu0 0.0
      %1343 = vmatpush1.msra.mxu0 0.0
      %1344 = vmatprep.subr.mxu0 0.0
      %1345 = vmatpush1.msra.mxu0 0.0
      %1346 = vmatprep.subr.mxu0 0.0
      %1347 = vmatpush1.msra.mxu0 0.0
      %1348 = vmatprep.subr.mxu0 0.0
      %1349 = vmatpush1.msra.mxu0 0.0
      %1350 = vmatprep.subr.mxu0 0.0
      %1351 = vmatpush1.msra.mxu0 0.0
      %1352 = vmatprep.subr.mxu0 0.0
      %1353 = vmatpush1.msra.mxu0 0.0
      %1354 = vmatprep.subr.mxu0 0.0
      %1355 = vmatpush1.msra.mxu0 0.0
      %1356 = vmatprep.subr.mxu0 0.0
      %1357 = vmatpush1.msra.mxu0 0.0
      %1358 = vmatprep.subr.mxu0 0.0
      %1359 = vmatpush1.msra.mxu0 0.0
      %1360 = vmatprep.subr.mxu0 0.0
      %1361 = vmatpush1.msra.mxu0 0.0
      %1362 = vmatprep.subr.mxu0 0.0
      %1363 = vmatpush1.msra.mxu0 0.0
      %1364 = vmatprep.subr.mxu0 0.0
      %1365 = vmatpush1.msra.mxu0 0.0
      %1366 = vmatprep.subr.mxu0 0.0
      %1367 = vmatpush1.msra.mxu0 0.0
      %1368 = vmatprep.subr.mxu0 0.0
      %1369 = vmatpush1.msra.mxu0 0.0
      %1370 = vmatprep.subr.mxu0 0.0
      %1371 = vmatpush1.msra.mxu0 0.0
      %1372 = vmatprep.subr.mxu0 0.0
      %1373 = vmatpush1.msra.mxu0 0.0
      %1374 = vmatprep.subr.mxu0 0.0
      %1375 = vmatpush1.msra.mxu0 0.0
      %1376 = vmatprep.subr.mxu0 0.0
      %1377 = vmatpush1.msra.mxu0 0.0
      %1378 = vmatprep.subr.mxu0 0.0
      %1379 = vmatpush1.msra.mxu0 0.0
      %1380 = vmatprep.mubr.f32.mxu0 0.0
      %v1381 = vand.u32 %v300, 4294901760
      %1382 = vmatmul.mubr.f32.gmra.mrb[0].mxu0 %v1381
      %v1383 = vpop.f32.mrb[0].mxu0
      %v1384 = vadd.f32 %v1219, %v1383
      %v1385 = vpop.f32.mrb[0].mxu0
      %1386 = vmatprep.mubr.f32.mxu0 0.0
      %v1387 = vand.u32 %v303, 4294901760
      %1388 = vmatmul.mubr.f32.gmra.mrb[0].mxu0 %v1387
      %v1389 = vpop.f32.mrb[0].mxu0
      %v1390 = vadd.f32 %v1225, %v1389
      %v1391 = vpop.f32.mrb[0].mxu0
      %1392 = vmatprep.mubr.f32.mxu0 0.0
      %v1393 = vand.u32 %v306, 4294901760
      %1394 = vmatmul.mubr.f32.gmra.mrb[0].mxu0 %v1393
      %v1395 = vpop.f32.mrb[0].mxu0
      %v1396 = vadd.f32 %v1231, %v1395
      %v1397 = vpop.f32.mrb[0].mxu0
      %1398 = vmatprep.mubr.f32.mxu0 0.0
      %v1399 = vand.u32 %v309, 4294901760
      %1400 = vmatmul.mubr.f32.gmra.mrb[0].mxu0 %v1399
      %v1401 = vpop.f32.mrb[0].mxu0
      %v1402 = vadd.f32 %v1237, %v1401
      %v1403 = vpop.f32.mrb[0].mxu0
      %1404 = vmatprep.mubr.f32.mxu0 0.0
      %v1405 = vand.u32 %v312, 4294901760
      %1406 = vmatmul.mubr.f32.gmra.mrb[0].mxu0 %v1405
      %v1407 = vpop.f32.mrb[0].mxu0
      %v1408 = vadd.f32 %v1243, %v1407
      %v1409 = vpop.f32.mrb[0].mxu0
      %1410 = vmatprep.mubr.f32.mxu0 0.0
      %v1411 = vand.u32 %v315, 4294901760
      %1412 = vmatmul.mubr.f32.gmra.mrb[0].mxu0 %v1411
      %v1413 = vpop.f32.mrb[0].mxu0
      %v1414 = vadd.f32 %v1249, %v1413
      %v1415 = vpop.f32.mrb[0].mxu0
      %1416 = vmatprep.mubr.f32.mxu0 0.0
      %v1417 = vand.u32 %v318, 4294901760
      %1418 = vmatmul.mubr.f32.gmra.mrb[0].mxu0 %v1417
      %v1419 = vpop.f32.mrb[0].mxu0
      %v1420 = vadd.f32 %v1255, %v1419
      %v1421 = vpop.f32.mrb[0].mxu0
      %1422 = vmatprep.mubr.f32.mxu0 0.0
      %v1423 = vand.u32 %v321, 4294901760
      %1424 = vmatmul.mubr.f32.gmra.mrb[0].mxu0 %v1423
      %v1425 = vpop.f32.mrb[0].mxu0
      %v1426 = vadd.f32 %v1261, %v1425
      %v1427 = vpop.f32.mrb[0].mxu0
      %1428 = vmatprep.mubr.f32.mxu0 0.0
      %v1429 = vand.u32 %v324, 4294901760
      %1430 = vmatmul.mubr.f32.gmra.mrb[0].mxu0 %v1429
      %v1431 = vpop.f32.mrb[0].mxu0
      %v1432 = vadd.f32 %v1267, %v1431
      %v1433 = vpop.f32.mrb[0].mxu0
      %1434 = vmatprep.mubr.f32.mxu0 0.0
      %v1435 = vand.u32 %v327, 4294901760
      %1436 = vmatmul.mubr.f32.gmra.mrb[0].mxu0 %v1435
      %v1437 = vpop.f32.mrb[0].mxu0
      %v1438 = vadd.f32 %v1273, %v1437
      %v1439 = vpop.f32.mrb[0].mxu0
      %1440 = vmatprep.mubr.f32.mxu0 0.0
      %v1441 = vand.u32 %v330, 4294901760
      %1442 = vmatmul.mubr.f32.gmra.mrb[0].mxu0 %v1441
      %v1443 = vpop.f32.mrb[0].mxu0
      %v1444 = vadd.f32 %v1279, %v1443
      %v1445 = vpop.f32.mrb[0].mxu0
      %1446 = vmatprep.mubr.f32.mxu0 0.0
      %v1447 = vand.u32 %v333, 4294901760
      %1448 = vmatmul.mubr.f32.gmra.mrb[0].mxu0 %v1447
      %v1449 = vpop.f32.mrb[0].mxu0
      %v1450 = vadd.f32 %v1285, %v1449
      %v1451 = vpop.f32.mrb[0].mxu0
      %1452 = vmatprep.mubr.f32.mxu0 0.0
      %v1453 = vand.u32 %v336, 4294901760
      %1454 = vmatmul.mubr.f32.gmra.mrb[0].mxu0 %v1453
      %v1455 = vpop.f32.mrb[0].mxu0
      %v1456 = vadd.f32 %v1291, %v1455
      %v1457 = vpop.f32.mrb[0].mxu0
      %1458 = vmatprep.mubr.f32.mxu0 0.0
      %v1459 = vand.u32 %v339, 4294901760
      %1460 = vmatmul.mubr.f32.gmra.mrb[0].mxu0 %v1459
      %v1461 = vpop.f32.mrb[0].mxu0
      %v1462 = vadd.f32 %v1297, %v1461
      %v1463 = vpop.f32.mrb[0].mxu0
      %1464 = vmatprep.mubr.f32.mxu0 0.0
      %v1465 = vand.u32 %v342, 4294901760
      %1466 = vmatmul.mubr.f32.gmra.mrb[0].mxu0 %v1465
      %v1467 = vpop.f32.mrb[0].mxu0
      %v1468 = vadd.f32 %v1303, %v1467
      %v1469 = vpop.f32.mrb[0].mxu0
      %1470 = vmatprep.mubr.f32.mxu0 0.0
      %v1471 = vand.u32 %v345, 4294901760
      %1472 = vmatmul.mubr.f32.gmra.mrb[0].mxu0 %v1471
      %v1473 = vpop.f32.mrb[0].mxu0
      %v1474 = vadd.f32 %v1309, %v1473
      %v1475 = vpop.f32.mrb[0].mxu0
      %1476 = vdwg.mxu0
      %v1477 = vmax.f32 %v1384, 0.0
      %v1478 = vmax.f32 %v1390, 0.0
      %v1479 = vmax.f32 %v1396, 0.0
      %v1480 = vmax.f32 %v1402, 0.0
      %v1481 = vmax.f32 %v1408, 0.0
      %v1482 = vmax.f32 %v1414, 0.0
      %v1483 = vmax.f32 %v1420, 0.0
      %v1484 = vmax.f32 %v1426, 0.0
      %v1485 = vmax.f32 %v1432, 0.0
      %v1486 = vmax.f32 %v1438, 0.0
      %v1487 = vmax.f32 %v1444, 0.0
      %v1488 = vmax.f32 %v1450, 0.0
      %v1489 = vmax.f32 %v1456, 0.0
      %v1490 = vmax.f32 %v1462, 0.0
      %v1491 = vmax.f32 %v1468, 0.0
      %v1492 = vmax.f32 %v1474, 0.0
      %v1494 = vlaneseq
      %v1495 = vshrl.u32 %v1494, 7
      %v1496 = vsub.s32 0, %v1495
      %v1497 = vrot.slane %v289, %v1496
      %1499 = vmatprep.subr.mxu0 0.0
      %v1500 = vand.u32 %v253, 4294901760
      %1501 = vmatpush1.msra.mxu0 %v1500
      %1502 = vmatprep.subr.mxu0 0.0
      %v1503 = vand.u32 %v254, 4294901760
      %1504 = vmatpush1.msra.mxu0 %v1503
      %1505 = vmatprep.subr.mxu0 0.0
      %v1506 = vand.u32 %v255, 4294901760
      %1507 = vmatpush1.msra.mxu0 %v1506
      %1508 = vmatprep.subr.mxu0 0.0
      %v1509 = vand.u32 %v256, 4294901760
      %1510 = vmatpush1.msra.mxu0 %v1509
      %1511 = vmatprep.subr.mxu0 0.0
      %v1512 = vand.u32 %v257, 4294901760
      %1513 = vmatpush1.msra.mxu0 %v1512
      %1514 = vmatprep.subr.mxu0 0.0
      %v1515 = vand.u32 %v258, 4294901760
      %1516 = vmatpush1.msra.mxu0 %v1515
      %1517 = vmatprep.subr.mxu0 0.0
      %v1518 = vand.u32 %v259, 4294901760
      %1519 = vmatpush1.msra.mxu0 %v1518
      %1520 = vmatprep.subr.mxu0 0.0
      %v1521 = vand.u32 %v260, 4294901760
      %1522 = vmatpush1.msra.mxu0 %v1521
      %1523 = vmatprep.subr.mxu0 0.0
      %v1524 = vand.u32 %v261, 4294901760
      %1525 = vmatpush1.msra.mxu0 %v1524
      %1526 = vmatprep.subr.mxu0 0.0
      %v1527 = vand.u32 %v262, 4294901760
      %1528 = vmatpush1.msra.mxu0 %v1527
      %1529 = vmatprep.subr.mxu0 0.0
      %v1530 = vand.u32 %v263, 4294901760
      %1531 = vmatpush1.msra.mxu0 %v1530
      %1532 = vmatprep.subr.mxu0 0.0
      %v1533 = vand.u32 %v264, 4294901760
      %1534 = vmatpush1.msra.mxu0 %v1533
      %1535 = vmatprep.subr.mxu0 0.0
      %v1536 = vand.u32 %v265, 4294901760
      %1537 = vmatpush1.msra.mxu0 %v1536
      %1538 = vmatprep.subr.mxu0 0.0
      %v1539 = vand.u32 %v266, 4294901760
      %1540 = vmatpush1.msra.mxu0 %v1539
      %1541 = vmatprep.subr.mxu0 0.0
      %v1542 = vand.u32 %v267, 4294901760
      %1543 = vmatpush1.msra.mxu0 %v1542
      %1544 = vmatprep.subr.mxu0 0.0
      %v1545 = vand.u32 %v268, 4294901760
      %1546 = vmatpush1.msra.mxu0 %v1545
      %1547 = vmatprep.subr.mxu0 0.0
      %1548 = vmatpush1.msra.mxu0 0.0
      %1549 = vmatprep.subr.mxu0 0.0
      %1550 = vmatpush1.msra.mxu0 0.0
      %1551 = vmatprep.subr.mxu0 0.0
      %1552 = vmatpush1.msra.mxu0 0.0
      %1553 = vmatprep.subr.mxu0 0.0
      %1554 = vmatpush1.msra.mxu0 0.0
      %1555 = vmatprep.subr.mxu0 0.0
      %1556 = vmatpush1.msra.mxu0 0.0
      %1557 = vmatprep.subr.mxu0 0.0
      %1558 = vmatpush1.msra.mxu0 0.0
      %1559 = vmatprep.subr.mxu0 0.0
      %1560 = vmatpush1.msra.mxu0 0.0
      %1561 = vmatprep.subr.mxu0 0.0
      %1562 = vmatpush1.msra.mxu0 0.0
      %1563 = vmatprep.subr.mxu0 0.0
      %1564 = vmatpush1.msra.mxu0 0.0
      %1565 = vmatprep.subr.mxu0 0.0
      %1566 = vmatpush1.msra.mxu0 0.0
      %1567 = vmatprep.subr.mxu0 0.0
      %1568 = vmatpush1.msra.mxu0 0.0
      %1569 = vmatprep.subr.mxu0 0.0
      %1570 = vmatpush1.msra.mxu0 0.0
      %1571 = vmatprep.subr.mxu0 0.0
      %1572 = vmatpush1.msra.mxu0 0.0
      %1573 = vmatprep.subr.mxu0 0.0
      %1574 = vmatpush1.msra.mxu0 0.0
      %1575 = vmatprep.subr.mxu0 0.0
      %1576 = vmatpush1.msra.mxu0 0.0
      %1577 = vmatprep.subr.mxu0 0.0
      %1578 = vmatpush1.msra.mxu0 0.0
      %1579 = vmatprep.mubr.f32.mxu0 0.0
      %v1580 = vand.u32 %v1477, 4294901760
      %v1581 = vsub.f32 %v1477, %v1580
      %v1582 = vand.u32 %v1581, 4294901760
      %v1583 = vsub.f32 %v1581, %v1582
      %v1584 = vand.u32 %v1583, 4294901760
      %1585 = vmatmul.mubr.f32.gmra.mrb[0].mxu0 %v1584
      %v1586 = vpop.f32.mrb[0].mxu0
      %v1587 = vadd.f32 %v1497, %v1586
      %v1588 = vpop.f32.mrb[0].mxu0
      %1589 = vmatprep.mubr.f32.mxu0 0.0
      %v1590 = vand.u32 %v1478, 4294901760
      %v1591 = vsub.f32 %v1478, %v1590
      %v1592 = vand.u32 %v1591, 4294901760
      %v1593 = vsub.f32 %v1591, %v1592
      %v1594 = vand.u32 %v1593, 4294901760
      %1595 = vmatmul.mubr.f32.gmra.mrb[0].mxu0 %v1594
      %v1596 = vpop.f32.mrb[0].mxu0
      %v1597 = vadd.f32 %v1497, %v1596
      %v1598 = vpop.f32.mrb[0].mxu0
      %1599 = vmatprep.mubr.f32.mxu0 0.0
      %v1600 = vand.u32 %v1479, 4294901760
      %v1601 = vsub.f32 %v1479, %v1600
      %v1602 = vand.u32 %v1601, 4294901760
      %v1603 = vsub.f32 %v1601, %v1602
      %v1604 = vand.u32 %v1603, 4294901760
      %1605 = vmatmul.mubr.f32.gmra.mrb[0].mxu0 %v1604
      %v1606 = vpop.f32.mrb[0].mxu0
      %v1607 = vadd.f32 %v1497, %v1606
      %v1608 = vpop.f32.mrb[0].mxu0
      %1609 = vmatprep.mubr.f32.mxu0 0.0
      %v1610 = vand.u32 %v1480, 4294901760
      %v1611 = vsub.f32 %v1480, %v1610
      %v1612 = vand.u32 %v1611, 4294901760
      %v1613 = vsub.f32 %v1611, %v1612
      %v1614 = vand.u32 %v1613, 4294901760
      %1615 = vmatmul.mubr.f32.gmra.mrb[0].mxu0 %v1614
      %v1616 = vpop.f32.mrb[0].mxu0
      %v1617 = vadd.f32 %v1497, %v1616
      %v1618 = vpop.f32.mrb[0].mxu0
      %1619 = vmatprep.mubr.f32.mxu0 0.0
      %v1620 = vand.u32 %v1481, 4294901760
      %v1621 = vsub.f32 %v1481, %v1620
      %v1622 = vand.u32 %v1621, 4294901760
      %v1623 = vsub.f32 %v1621, %v1622
      %v1624 = vand.u32 %v1623, 4294901760
      %1625 = vmatmul.mubr.f32.gmra.mrb[0].mxu0 %v1624
      %v1626 = vpop.f32.mrb[0].mxu0
      %v1627 = vadd.f32 %v1497, %v1626
      %v1628 = vpop.f32.mrb[0].mxu0
      %1629 = vmatprep.mubr.f32.mxu0 0.0
      %v1630 = vand.u32 %v1482, 4294901760
      %v1631 = vsub.f32 %v1482, %v1630
      %v1632 = vand.u32 %v1631, 4294901760
      %v1633 = vsub.f32 %v1631, %v1632
      %v1634 = vand.u32 %v1633, 4294901760
      %1635 = vmatmul.mubr.f32.gmra.mrb[0].mxu0 %v1634
      %v1636 = vpop.f32.mrb[0].mxu0
      %v1637 = vadd.f32 %v1497, %v1636
      %v1638 = vpop.f32.mrb[0].mxu0
      %1639 = vmatprep.mubr.f32.mxu0 0.0
      %v1640 = vand.u32 %v1483, 4294901760
      %v1641 = vsub.f32 %v1483, %v1640
      %v1642 = vand.u32 %v1641, 4294901760
      %v1643 = vsub.f32 %v1641, %v1642
      %v1644 = vand.u32 %v1643, 4294901760
      %1645 = vmatmul.mubr.f32.gmra.mrb[0].mxu0 %v1644
      %v1646 = vpop.f32.mrb[0].mxu0
      %v1647 = vadd.f32 %v1497, %v1646
      %v1648 = vpop.f32.mrb[0].mxu0
      %1649 = vmatprep.mubr.f32.mxu0 0.0
      %v1650 = vand.u32 %v1484, 4294901760
      %v1651 = vsub.f32 %v1484, %v1650
      %v1652 = vand.u32 %v1651, 4294901760
      %v1653 = vsub.f32 %v1651, %v1652
      %v1654 = vand.u32 %v1653, 4294901760
      %1655 = vmatmul.mubr.f32.gmra.mrb[0].mxu0 %v1654
      %v1656 = vpop.f32.mrb[0].mxu0
      %v1657 = vadd.f32 %v1497, %v1656
      %v1658 = vpop.f32.mrb[0].mxu0
      %1659 = vmatprep.mubr.f32.mxu0 0.0
      %v1660 = vand.u32 %v1485, 4294901760
      %v1661 = vsub.f32 %v1485, %v1660
      %v1662 = vand.u32 %v1661, 4294901760
      %v1663 = vsub.f32 %v1661, %v1662
      %v1664 = vand.u32 %v1663, 4294901760
      %1665 = vmatmul.mubr.f32.gmra.mrb[0].mxu0 %v1664
      %v1666 = vpop.f32.mrb[0].mxu0
      %v1667 = vadd.f32 %v1497, %v1666
      %v1668 = vpop.f32.mrb[0].mxu0
      %1669 = vmatprep.mubr.f32.mxu0 0.0
      %v1670 = vand.u32 %v1486, 4294901760
      %v1671 = vsub.f32 %v1486, %v1670
      %v1672 = vand.u32 %v1671, 4294901760
      %v1673 = vsub.f32 %v1671, %v1672
      %v1674 = vand.u32 %v1673, 4294901760
      %1675 = vmatmul.mubr.f32.gmra.mrb[0].mxu0 %v1674
      %v1676 = vpop.f32.mrb[0].mxu0
      %v1677 = vadd.f32 %v1497, %v1676
      %v1678 = vpop.f32.mrb[0].mxu0
      %1679 = vmatprep.mubr.f32.mxu0 0.0
      %v1680 = vand.u32 %v1487, 4294901760
      %v1681 = vsub.f32 %v1487, %v1680
      %v1682 = vand.u32 %v1681, 4294901760
      %v1683 = vsub.f32 %v1681, %v1682
      %v1684 = vand.u32 %v1683, 4294901760
      %1685 = vmatmul.mubr.f32.gmra.mrb[0].mxu0 %v1684
      %v1686 = vpop.f32.mrb[0].mxu0
      %v1687 = vadd.f32 %v1497, %v1686
      %v1688 = vpop.f32.mrb[0].mxu0
      %1689 = vmatprep.mubr.f32.mxu0 0.0
      %v1690 = vand.u32 %v1488, 4294901760
      %v1691 = vsub.f32 %v1488, %v1690
      %v1692 = vand.u32 %v1691, 4294901760
      %v1693 = vsub.f32 %v1691, %v1692
      %v1694 = vand.u32 %v1693, 4294901760
      %1695 = vmatmul.mubr.f32.gmra.mrb[0].mxu0 %v1694
      %v1696 = vpop.f32.mrb[0].mxu0
      %v1697 = vadd.f32 %v1497, %v1696
      %v1698 = vpop.f32.mrb[0].mxu0
      %1699 = vmatprep.mubr.f32.mxu0 0.0
      %v1700 = vand.u32 %v1489, 4294901760
      %v1701 = vsub.f32 %v1489, %v1700
      %v1702 = vand.u32 %v1701, 4294901760
      %v1703 = vsub.f32 %v1701, %v1702
      %v1704 = vand.u32 %v1703, 4294901760
      %1705 = vmatmul.mubr.f32.gmra.mrb[0].mxu0 %v1704
      %v1706 = vpop.f32.mrb[0].mxu0
      %v1707 = vadd.f32 %v1497, %v1706
      %v1708 = vpop.f32.mrb[0].mxu0
      %1709 = vmatprep.mubr.f32.mxu0 0.0
      %v1710 = vand.u32 %v1490, 4294901760
      %v1711 = vsub.f32 %v1490, %v1710
      %v1712 = vand.u32 %v1711, 4294901760
      %v1713 = vsub.f32 %v1711, %v1712
      %v1714 = vand.u32 %v1713, 4294901760
      %1715 = vmatmul.mubr.f32.gmra.mrb[0].mxu0 %v1714
      %v1716 = vpop.f32.mrb[0].mxu0
      %v1717 = vadd.f32 %v1497, %v1716
      %v1718 = vpop.f32.mrb[0].mxu0
      %1719 = vmatprep.mubr.f32.mxu0 0.0
      %v1720 = vand.u32 %v1491, 4294901760
      %v1721 = vsub.f32 %v1491, %v1720
      %v1722 = vand.u32 %v1721, 4294901760
      %v1723 = vsub.f32 %v1721, %v1722
      %v1724 = vand.u32 %v1723, 4294901760
      %1725 = vmatmul.mubr.f32.gmra.mrb[0].mxu0 %v1724
      %v1726 = vpop.f32.mrb[0].mxu0
      %v1727 = vadd.f32 %v1497, %v1726
      %v1728 = vpop.f32.mrb[0].mxu0
      %1729 = vmatprep.mubr.f32.mxu0 0.0
      %v1730 = vand.u32 %v1492, 4294901760
      %v1731 = vsub.f32 %v1492, %v1730
      %v1732 = vand.u32 %v1731, 4294901760
      %v1733 = vsub.f32 %v1731, %v1732
      %v1734 = vand.u32 %v1733, 4294901760
      %1735 = vmatmul.mubr.f32.gmra.mrb[0].mxu0 %v1734
      %v1736 = vpop.f32.mrb[0].mxu0
      %v1737 = vadd.f32 %v1497, %v1736
      %v1738 = vpop.f32.mrb[0].mxu0
      %1739 = vdwg.mxu0
      %1740 = vmatprep.subr.mxu0 0.0
      %v1741 = vand.u32 %v253, 4294901760
      %v1742 = vsub.f32 %v253, %v1741
      %v1743 = vand.u32 %v1742, 4294901760
      %v1744 = vsub.f32 %v1742, %v1743
      %v1745 = vand.u32 %v1744, 4294901760
      %1746 = vmatpush1.msra.mxu0 %v1745
      %1747 = vmatprep.subr.mxu0 0.0
      %v1748 = vand.u32 %v254, 4294901760
      %v1749 = vsub.f32 %v254, %v1748
      %v1750 = vand.u32 %v1749, 4294901760
      %v1751 = vsub.f32 %v1749, %v1750
      %v1752 = vand.u32 %v1751, 4294901760
      %1753 = vmatpush1.msra.mxu0 %v1752
      %1754 = vmatprep.subr.mxu0 0.0
      %v1755 = vand.u32 %v255, 4294901760
      %v1756 = vsub.f32 %v255, %v1755
      %v1757 = vand.u32 %v1756, 4294901760
      %v1758 = vsub.f32 %v1756, %v1757
      %v1759 = vand.u32 %v1758, 4294901760
      %1760 = vmatpush1.msra.mxu0 %v1759
      %1761 = vmatprep.subr.mxu0 0.0
      %v1762 = vand.u32 %v256, 4294901760
      %v1763 = vsub.f32 %v256, %v1762
      %v1764 = vand.u32 %v1763, 4294901760
      %v1765 = vsub.f32 %v1763, %v1764
      %v1766 = vand.u32 %v1765, 4294901760
      %1767 = vmatpush1.msra.mxu0 %v1766
      %1768 = vmatprep.subr.mxu0 0.0
      %v1769 = vand.u32 %v257, 4294901760
      %v1770 = vsub.f32 %v257, %v1769
      %v1771 = vand.u32 %v1770, 4294901760
      %v1772 = vsub.f32 %v1770, %v1771
      %v1773 = vand.u32 %v1772, 4294901760
      %1774 = vmatpush1.msra.mxu0 %v1773
      %1775 = vmatprep.subr.mxu0 0.0
      %v1776 = vand.u32 %v258, 4294901760
      %v1777 = vsub.f32 %v258, %v1776
      %v1778 = vand.u32 %v1777, 4294901760
      %v1779 = vsub.f32 %v1777, %v1778
      %v1780 = vand.u32 %v1779, 4294901760
      %1781 = vmatpush1.msra.mxu0 %v1780
      %1782 = vmatprep.subr.mxu0 0.0
      %v1783 = vand.u32 %v259, 4294901760
      %v1784 = vsub.f32 %v259, %v1783
      %v1785 = vand.u32 %v1784, 4294901760
      %v1786 = vsub.f32 %v1784, %v1785
      %v1787 = vand.u32 %v1786, 4294901760
      %1788 = vmatpush1.msra.mxu0 %v1787
      %1789 = vmatprep.subr.mxu0 0.0
      %v1790 = vand.u32 %v260, 4294901760
      %v1791 = vsub.f32 %v260, %v1790
      %v1792 = vand.u32 %v1791, 4294901760
      %v1793 = vsub.f32 %v1791, %v1792
      %v1794 = vand.u32 %v1793, 4294901760
      %1795 = vmatpush1.msra.mxu0 %v1794
      %1796 = vmatprep.subr.mxu0 0.0
      %v1797 = vand.u32 %v261, 4294901760
      %v1798 = vsub.f32 %v261, %v1797
      %v1799 = vand.u32 %v1798, 4294901760
      %v1800 = vsub.f32 %v1798, %v1799
      %v1801 = vand.u32 %v1800, 4294901760
      %1802 = vmatpush1.msra.mxu0 %v1801
      %1803 = vmatprep.subr.mxu0 0.0
      %v1804 = vand.u32 %v262, 4294901760
      %v1805 = vsub.f32 %v262, %v1804
      %v1806 = vand.u32 %v1805, 4294901760
      %v1807 = vsub.f32 %v1805, %v1806
      %v1808 = vand.u32 %v1807, 4294901760
      %1809 = vmatpush1.msra.mxu0 %v1808
      %1810 = vmatprep.subr.mxu0 0.0
      %v1811 = vand.u32 %v263, 4294901760
      %v1812 = vsub.f32 %v263, %v1811
      %v1813 = vand.u32 %v1812, 4294901760
      %v1814 = vsub.f32 %v1812, %v1813
      %v1815 = vand.u32 %v1814, 4294901760
      %1816 = vmatpush1.msra.mxu0 %v1815
      %1817 = vmatprep.subr.mxu0 0.0
      %v1818 = vand.u32 %v264, 4294901760
      %v1819 = vsub.f32 %v264, %v1818
      %v1820 = vand.u32 %v1819, 4294901760
      %v1821 = vsub.f32 %v1819, %v1820
      %v1822 = vand.u32 %v1821, 4294901760
      %1823 = vmatpush1.msra.mxu0 %v1822
      %1824 = vmatprep.subr.mxu0 0.0
      %v1825 = vand.u32 %v265, 4294901760
      %v1826 = vsub.f32 %v265, %v1825
      %v1827 = vand.u32 %v1826, 4294901760
      %v1828 = vsub.f32 %v1826, %v1827
      %v1829 = vand.u32 %v1828, 4294901760
      %1830 = vmatpush1.msra.mxu0 %v1829
      %1831 = vmatprep.subr.mxu0 0.0
      %v1832 = vand.u32 %v266, 4294901760
      %v1833 = vsub.f32 %v266, %v1832
      %v1834 = vand.u32 %v1833, 4294901760
      %v1835 = vsub.f32 %v1833, %v1834
      %v1836 = vand.u32 %v1835, 4294901760
      %1837 = vmatpush1.msra.mxu0 %v1836
      %1838 = vmatprep.subr.mxu0 0.0
      %v1839 = vand.u32 %v267, 4294901760
      %v1840 = vsub.f32 %v267, %v1839
      %v1841 = vand.u32 %v1840, 4294901760
      %v1842 = vsub.f32 %v1840, %v1841
      %v1843 = vand.u32 %v1842, 4294901760
      %1844 = vmatpush1.msra.mxu0 %v1843
      %1845 = vmatprep.subr.mxu0 0.0
      %v1846 = vand.u32 %v268, 4294901760
      %v1847 = vsub.f32 %v268, %v1846
      %v1848 = vand.u32 %v1847, 4294901760
      %v1849 = vsub.f32 %v1847, %v1848
      %v1850 = vand.u32 %v1849, 4294901760
      %1851 = vmatpush1.msra.mxu0 %v1850
      %1852 = vmatprep.subr.mxu0 0.0
      %1853 = vmatpush1.msra.mxu0 0.0
      %1854 = vmatprep.subr.mxu0 0.0
      %1855 = vmatpush1.msra.mxu0 0.0
      %1856 = vmatprep.subr.mxu0 0.0
      %1857 = vmatpush1.msra.mxu0 0.0
      %1858 = vmatprep.subr.mxu0 0.0
      %1859 = vmatpush1.msra.mxu0 0.0
      %1860 = vmatprep.subr.mxu0 0.0
      %1861 = vmatpush1.msra.mxu0 0.0
      %1862 = vmatprep.subr.mxu0 0.0
      %1863 = vmatpush1.msra.mxu0 0.0
      %1864 = vmatprep.subr.mxu0 0.0
      %1865 = vmatpush1.msra.mxu0 0.0
      %1866 = vmatprep.subr.mxu0 0.0
      %1867 = vmatpush1.msra.mxu0 0.0
      %1868 = vmatprep.subr.mxu0 0.0
      %1869 = vmatpush1.msra.mxu0 0.0
      %1870 = vmatprep.subr.mxu0 0.0
      %1871 = vmatpush1.msra.mxu0 0.0
      %1872 = vmatprep.subr.mxu0 0.0
      %1873 = vmatpush1.msra.mxu0 0.0
      %1874 = vmatprep.subr.mxu0 0.0
      %1875 = vmatpush1.msra.mxu0 0.0
      %1876 = vmatprep.subr.mxu0 0.0
      %1877 = vmatpush1.msra.mxu0 0.0
      %1878 = vmatprep.subr.mxu0 0.0
      %1879 = vmatpush1.msra.mxu0 0.0
      %1880 = vmatprep.subr.mxu0 0.0
      %1881 = vmatpush1.msra.mxu0 0.0
      %1882 = vmatprep.subr.mxu0 0.0
      %1883 = vmatpush1.msra.mxu0 0.0
      %1884 = vmatprep.mubr.f32.mxu0 0.0
      %v1885 = vand.u32 %v1477, 4294901760
      %1886 = vmatmul.mubr.f32.gmra.mrb[0].mxu0 %v1885
      %v1887 = vpop.f32.mrb[0].mxu0
      %v1888 = vadd.f32 %v1587, %v1887
      %v1889 = vpop.f32.mrb[0].mxu0
      %1890 = vmatprep.mubr.f32.mxu0 0.0
      %v1891 = vand.u32 %v1478, 4294901760
      %1892 = vmatmul.mubr.f32.gmra.mrb[0].mxu0 %v1891
      %v1893 = vpop.f32.mrb[0].mxu0
      %v1894 = vadd.f32 %v1597, %v1893
      %v1895 = vpop.f32.mrb[0].mxu0
      %1896 = vmatprep.mubr.f32.mxu0 0.0
      %v1897 = vand.u32 %v1479, 4294901760
      %1898 = vmatmul.mubr.f32.gmra.mrb[0].mxu0 %v1897
      %v1899 = vpop.f32.mrb[0].mxu0
      %v1900 = vadd.f32 %v1607, %v1899
      %v1901 = vpop.f32.mrb[0].mxu0
      %1902 = vmatprep.mubr.f32.mxu0 0.0
      %v1903 = vand.u32 %v1480, 4294901760
      %1904 = vmatmul.mubr.f32.gmra.mrb[0].mxu0 %v1903
      %v1905 = vpop.f32.mrb[0].mxu0
      %v1906 = vadd.f32 %v1617, %v1905
      %v1907 = vpop.f32.mrb[0].mxu0
      %1908 = vmatprep.mubr.f32.mxu0 0.0
      %v1909 = vand.u32 %v1481, 4294901760
      %1910 = vmatmul.mubr.f32.gmra.mrb[0].mxu0 %v1909
      %v1911 = vpop.f32.mrb[0].mxu0
      %v1912 = vadd.f32 %v1627, %v1911
      %v1913 = vpop.f32.mrb[0].mxu0
      %1914 = vmatprep.mubr.f32.mxu0 0.0
      %v1915 = vand.u32 %v1482, 4294901760
      %1916 = vmatmul.mubr.f32.gmra.mrb[0].mxu0 %v1915
      %v1917 = vpop.f32.mrb[0].mxu0
      %v1918 = vadd.f32 %v1637, %v1917
      %v1919 = vpop.f32.mrb[0].mxu0
      %1920 = vmatprep.mubr.f32.mxu0 0.0
      %v1921 = vand.u32 %v1483, 4294901760
      %1922 = vmatmul.mubr.f32.gmra.mrb[0].mxu0 %v1921
      %v1923 = vpop.f32.mrb[0].mxu0
      %v1924 = vadd.f32 %v1647, %v1923
      %v1925 = vpop.f32.mrb[0].mxu0
      %1926 = vmatprep.mubr.f32.mxu0 0.0
      %v1927 = vand.u32 %v1484, 4294901760
      %1928 = vmatmul.mubr.f32.gmra.mrb[0].mxu0 %v1927
      %v1929 = vpop.f32.mrb[0].mxu0
      %v1930 = vadd.f32 %v1657, %v1929
      %v1931 = vpop.f32.mrb[0].mxu0
      %1932 = vmatprep.mubr.f32.mxu0 0.0
      %v1933 = vand.u32 %v1485, 4294901760
      %1934 = vmatmul.mubr.f32.gmra.mrb[0].mxu0 %v1933
      %v1935 = vpop.f32.mrb[0].mxu0
      %v1936 = vadd.f32 %v1667, %v1935
      %v1937 = vpop.f32.mrb[0].mxu0
      %1938 = vmatprep.mubr.f32.mxu0 0.0
      %v1939 = vand.u32 %v1486, 4294901760
      %1940 = vmatmul.mubr.f32.gmra.mrb[0].mxu0 %v1939
      %v1941 = vpop.f32.mrb[0].mxu0
      %v1942 = vadd.f32 %v1677, %v1941
      %v1943 = vpop.f32.mrb[0].mxu0
      %1944 = vmatprep.mubr.f32.mxu0 0.0
      %v1945 = vand.u32 %v1487, 4294901760
      %1946 = vmatmul.mubr.f32.gmra.mrb[0].mxu0 %v1945
      %v1947 = vpop.f32.mrb[0].mxu0
      %v1948 = vadd.f32 %v1687, %v1947
      %v1949 = vpop.f32.mrb[0].mxu0
      %1950 = vmatprep.mubr.f32.mxu0 0.0
      %v1951 = vand.u32 %v1488, 4294901760
      %1952 = vmatmul.mubr.f32.gmra.mrb[0].mxu0 %v1951
      %v1953 = vpop.f32.mrb[0].mxu0
      %v1954 = vadd.f32 %v1697, %v1953
      %v1955 = vpop.f32.mrb[0].mxu0
      %1956 = vmatprep.mubr.f32.mxu0 0.0
      %v1957 = vand.u32 %v1489, 4294901760
      %1958 = vmatmul.mubr.f32.gmra.mrb[0].mxu0 %v1957
      %v1959 = vpop.f32.mrb[0].mxu0
      %v1960 = vadd.f32 %v1707, %v1959
      %v1961 = vpop.f32.mrb[0].mxu0
      %1962 = vmatprep.mubr.f32.mxu0 0.0
      %v1963 = vand.u32 %v1490, 4294901760
      %1964 = vmatmul.mubr.f32.gmra.mrb[0].mxu0 %v1963
      %v1965 = vpop.f32.mrb[0].mxu0
      %v1966 = vadd.f32 %v1717, %v1965
      %v1967 = vpop.f32.mrb[0].mxu0
      %1968 = vmatprep.mubr.f32.mxu0 0.0
      %v1969 = vand.u32 %v1491, 4294901760
      %1970 = vmatmul.mubr.f32.gmra.mrb[0].mxu0 %v1969
      %v1971 = vpop.f32.mrb[0].mxu0
      %v1972 = vadd.f32 %v1727, %v1971
      %v1973 = vpop.f32.mrb[0].mxu0
      %1974 = vmatprep.mubr.f32.mxu0 0.0
      %v1975 = vand.u32 %v1492, 4294901760
      %1976 = vmatmul.mubr.f32.gmra.mrb[0].mxu0 %v1975
      %v1977 = vpop.f32.mrb[0].mxu0
      %v1978 = vadd.f32 %v1737, %v1977
      %v1979 = vpop.f32.mrb[0].mxu0
      %1980 = vdwg.mxu0
      %1981 = vmatprep.subr.mxu0 0.0
      %v1982 = vand.u32 %v253, 4294901760
      %v1983 = vsub.f32 %v253, %v1982
      %1984 = vmatpush1.msra.mxu0 %v1983
      %1985 = vmatprep.subr.mxu0 0.0
      %v1986 = vand.u32 %v254, 4294901760
      %v1987 = vsub.f32 %v254, %v1986
      %1988 = vmatpush1.msra.mxu0 %v1987
      %1989 = vmatprep.subr.mxu0 0.0
      %v1990 = vand.u32 %v255, 4294901760
      %v1991 = vsub.f32 %v255, %v1990
      %1992 = vmatpush1.msra.mxu0 %v1991
      %1993 = vmatprep.subr.mxu0 0.0
      %v1994 = vand.u32 %v256, 4294901760
      %v1995 = vsub.f32 %v256, %v1994
      %1996 = vmatpush1.msra.mxu0 %v1995
      %1997 = vmatprep.subr.mxu0 0.0
      %v1998 = vand.u32 %v257, 4294901760
      %v1999 = vsub.f32 %v257, %v1998
      %2000 = vmatpush1.msra.mxu0 %v1999
      %2001 = vmatprep.subr.mxu0 0.0
      %v2002 = vand.u32 %v258, 4294901760
      %v2003 = vsub.f32 %v258, %v2002
      %2004 = vmatpush1.msra.mxu0 %v2003
      %2005 = vmatprep.subr.mxu0 0.0
      %v2006 = vand.u32 %v259, 4294901760
      %v2007 = vsub.f32 %v259, %v2006
      %2008 = vmatpush1.msra.mxu0 %v2007
      %2009 = vmatprep.subr.mxu0 0.0
      %v2010 = vand.u32 %v260, 4294901760
      %v2011 = vsub.f32 %v260, %v2010
      %2012 = vmatpush1.msra.mxu0 %v2011
      %2013 = vmatprep.subr.mxu0 0.0
      %v2014 = vand.u32 %v261, 4294901760
      %v2015 = vsub.f32 %v261, %v2014
      %2016 = vmatpush1.msra.mxu0 %v2015
      %2017 = vmatprep.subr.mxu0 0.0
      %v2018 = vand.u32 %v262, 4294901760
      %v2019 = vsub.f32 %v262, %v2018
      %2020 = vmatpush1.msra.mxu0 %v2019
      %2021 = vmatprep.subr.mxu0 0.0
      %v2022 = vand.u32 %v263, 4294901760
      %v2023 = vsub.f32 %v263, %v2022
      %2024 = vmatpush1.msra.mxu0 %v2023
      %2025 = vmatprep.subr.mxu0 0.0
      %v2026 = vand.u32 %v264, 4294901760
      %v2027 = vsub.f32 %v264, %v2026
      %2028 = vmatpush1.msra.mxu0 %v2027
      %2029 = vmatprep.subr.mxu0 0.0
      %v2030 = vand.u32 %v265, 4294901760
      %v2031 = vsub.f32 %v265, %v2030
      %2032 = vmatpush1.msra.mxu0 %v2031
      %2033 = vmatprep.subr.mxu0 0.0
      %v2034 = vand.u32 %v266, 4294901760
      %v2035 = vsub.f32 %v266, %v2034
      %2036 = vmatpush1.msra.mxu0 %v2035
      %2037 = vmatprep.subr.mxu0 0.0
      %v2038 = vand.u32 %v267, 4294901760
      %v2039 = vsub.f32 %v267, %v2038
      %2040 = vmatpush1.msra.mxu0 %v2039
      %2041 = vmatprep.subr.mxu0 0.0
      %v2042 = vand.u32 %v268, 4294901760
      %v2043 = vsub.f32 %v268, %v2042
      %2044 = vmatpush1.msra.mxu0 %v2043
      %2045 = vmatprep.subr.mxu0 0.0
      %2046 = vmatpush1.msra.mxu0 0.0
      %2047 = vmatprep.subr.mxu0 0.0
      %2048 = vmatpush1.msra.mxu0 0.0
      %2049 = vmatprep.subr.mxu0 0.0
      %2050 = vmatpush1.msra.mxu0 0.0
      %2051 = vmatprep.subr.mxu0 0.0
      %2052 = vmatpush1.msra.mxu0 0.0
      %2053 = vmatprep.subr.mxu0 0.0
      %2054 = vmatpush1.msra.mxu0 0.0
      %2055 = vmatprep.subr.mxu0 0.0
      %2056 = vmatpush1.msra.mxu0 0.0
      %2057 = vmatprep.subr.mxu0 0.0
      %2058 = vmatpush1.msra.mxu0 0.0
      %2059 = vmatprep.subr.mxu0 0.0
      %2060 = vmatpush1.msra.mxu0 0.0
      %2061 = vmatprep.subr.mxu0 0.0
      %2062 = vmatpush1.msra.mxu0 0.0
      %2063 = vmatprep.subr.mxu0 0.0
      %2064 = vmatpush1.msra.mxu0 0.0
      %2065 = vmatprep.subr.mxu0 0.0
      %2066 = vmatpush1.msra.mxu0 0.0
      %2067 = vmatprep.subr.mxu0 0.0
      %2068 = vmatpush1.msra.mxu0 0.0
      %2069 = vmatprep.subr.mxu0 0.0
      %2070 = vmatpush1.msra.mxu0 0.0
      %2071 = vmatprep.subr.mxu0 0.0
      %2072 = vmatpush1.msra.mxu0 0.0
      %2073 = vmatprep.subr.mxu0 0.0
      %2074 = vmatpush1.msra.mxu0 0.0
      %2075 = vmatprep.subr.mxu0 0.0
      %2076 = vmatpush1.msra.mxu0 0.0
      %2077 = vmatprep.mubr.f32.mxu0 0.0
      %v2078 = vand.u32 %v1477, 4294901760
      %v2079 = vsub.f32 %v1477, %v2078
      %2080 = vmatmul.mubr.f32.gmra.mrb[0].mxu0 %v2079
      %v2081 = vpop.f32.mrb[0].mxu0
      %v2082 = vadd.f32 %v1888, %v2081
      %v2083 = vpop.f32.mrb[0].mxu0
      %2084 = vmatprep.mubr.f32.mxu0 0.0
      %v2085 = vand.u32 %v1478, 4294901760
      %v2086 = vsub.f32 %v1478, %v2085
      %2087 = vmatmul.mubr.f32.gmra.mrb[0].mxu0 %v2086
      %v2088 = vpop.f32.mrb[0].mxu0
      %v2089 = vadd.f32 %v1894, %v2088
      %v2090 = vpop.f32.mrb[0].mxu0
      %2091 = vmatprep.mubr.f32.mxu0 0.0
      %v2092 = vand.u32 %v1479, 4294901760
      %v2093 = vsub.f32 %v1479, %v2092
      %2094 = vmatmul.mubr.f32.gmra.mrb[0].mxu0 %v2093
      %v2095 = vpop.f32.mrb[0].mxu0
      %v2096 = vadd.f32 %v1900, %v2095
      %v2097 = vpop.f32.mrb[0].mxu0
      %2098 = vmatprep.mubr.f32.mxu0 0.0
      %v2099 = vand.u32 %v1480, 4294901760
      %v2100 = vsub.f32 %v1480, %v2099
      %2101 = vmatmul.mubr.f32.gmra.mrb[0].mxu0 %v2100
      %v2102 = vpop.f32.mrb[0].mxu0
      %v2103 = vadd.f32 %v1906, %v2102
      %v2104 = vpop.f32.mrb[0].mxu0
      %2105 = vmatprep.mubr.f32.mxu0 0.0
      %v2106 = vand.u32 %v1481, 4294901760
      %v2107 = vsub.f32 %v1481, %v2106
      %2108 = vmatmul.mubr.f32.gmra.mrb[0].mxu0 %v2107
      %v2109 = vpop.f32.mrb[0].mxu0
      %v2110 = vadd.f32 %v1912, %v2109
      %v2111 = vpop.f32.mrb[0].mxu0
      %2112 = vmatprep.mubr.f32.mxu0 0.0
      %v2113 = vand.u32 %v1482, 4294901760
      %v2114 = vsub.f32 %v1482, %v2113
      %2115 = vmatmul.mubr.f32.gmra.mrb[0].mxu0 %v2114
      %v2116 = vpop.f32.mrb[0].mxu0
      %v2117 = vadd.f32 %v1918, %v2116
      %v2118 = vpop.f32.mrb[0].mxu0
      %2119 = vmatprep.mubr.f32.mxu0 0.0
      %v2120 = vand.u32 %v1483, 4294901760
      %v2121 = vsub.f32 %v1483, %v2120
      %2122 = vmatmul.mubr.f32.gmra.mrb[0].mxu0 %v2121
      %v2123 = vpop.f32.mrb[0].mxu0
      %v2124 = vadd.f32 %v1924, %v2123
      %v2125 = vpop.f32.mrb[0].mxu0
      %2126 = vmatprep.mubr.f32.mxu0 0.0
      %v2127 = vand.u32 %v1484, 4294901760
      %v2128 = vsub.f32 %v1484, %v2127
      %2129 = vmatmul.mubr.f32.gmra.mrb[0].mxu0 %v2128
      %v2130 = vpop.f32.mrb[0].mxu0
      %v2131 = vadd.f32 %v1930, %v2130
      %v2132 = vpop.f32.mrb[0].mxu0
      %2133 = vmatprep.mubr.f32.mxu0 0.0
      %v2134 = vand.u32 %v1485, 4294901760
      %v2135 = vsub.f32 %v1485, %v2134
      %2136 = vmatmul.mubr.f32.gmra.mrb[0].mxu0 %v2135
      %v2137 = vpop.f32.mrb[0].mxu0
      %v2138 = vadd.f32 %v1936, %v2137
      %v2139 = vpop.f32.mrb[0].mxu0
      %2140 = vmatprep.mubr.f32.mxu0 0.0
      %v2141 = vand.u32 %v1486, 4294901760
      %v2142 = vsub.f32 %v1486, %v2141
      %2143 = vmatmul.mubr.f32.gmra.mrb[0].mxu0 %v2142
      %v2144 = vpop.f32.mrb[0].mxu0
      %v2145 = vadd.f32 %v1942, %v2144
      %v2146 = vpop.f32.mrb[0].mxu0
      %2147 = vmatprep.mubr.f32.mxu0 0.0
      %v2148 = vand.u32 %v1487, 4294901760
      %v2149 = vsub.f32 %v1487, %v2148
      %2150 = vmatmul.mubr.f32.gmra.mrb[0].mxu0 %v2149
      %v2151 = vpop.f32.mrb[0].mxu0
      %v2152 = vadd.f32 %v1948, %v2151
      %v2153 = vpop.f32.mrb[0].mxu0
      %2154 = vmatprep.mubr.f32.mxu0 0.0
      %v2155 = vand.u32 %v1488, 4294901760
      %v2156 = vsub.f32 %v1488, %v2155
      %2157 = vmatmul.mubr.f32.gmra.mrb[0].mxu0 %v2156
      %v2158 = vpop.f32.mrb[0].mxu0
      %v2159 = vadd.f32 %v1954, %v2158
      %v2160 = vpop.f32.mrb[0].mxu0
      %2161 = vmatprep.mubr.f32.mxu0 0.0
      %v2162 = vand.u32 %v1489, 4294901760
      %v2163 = vsub.f32 %v1489, %v2162
      %2164 = vmatmul.mubr.f32.gmra.mrb[0].mxu0 %v2163
      %v2165 = vpop.f32.mrb[0].mxu0
      %v2166 = vadd.f32 %v1960, %v2165
      %v2167 = vpop.f32.mrb[0].mxu0
      %2168 = vmatprep.mubr.f32.mxu0 0.0
      %v2169 = vand.u32 %v1490, 4294901760
      %v2170 = vsub.f32 %v1490, %v2169
      %2171 = vmatmul.mubr.f32.gmra.mrb[0].mxu0 %v2170
      %v2172 = vpop.f32.mrb[0].mxu0
      %v2173 = vadd.f32 %v1966, %v2172
      %v2174 = vpop.f32.mrb[0].mxu0
      %2175 = vmatprep.mubr.f32.mxu0 0.0
      %v2176 = vand.u32 %v1491, 4294901760
      %v2177 = vsub.f32 %v1491, %v2176
      %2178 = vmatmul.mubr.f32.gmra.mrb[0].mxu0 %v2177
      %v2179 = vpop.f32.mrb[0].mxu0
      %v2180 = vadd.f32 %v1972, %v2179
      %v2181 = vpop.f32.mrb[0].mxu0
      %2182 = vmatprep.mubr.f32.mxu0 0.0
      %v2183 = vand.u32 %v1492, 4294901760
      %v2184 = vsub.f32 %v1492, %v2183
      %2185 = vmatmul.mubr.f32.gmra.mrb[0].mxu0 %v2184
      %v2186 = vpop.f32.mrb[0].mxu0
      %v2187 = vadd.f32 %v1978, %v2186
      %v2188 = vpop.f32.mrb[0].mxu0
      %2189 = vdwg.mxu0
      %2190 = vmatprep.subr.mxu0 0.0
      %v2191 = vand.u32 %v253, 4294901760
      %2192 = vmatpush1.msra.mxu0 %v2191
      %2193 = vmatprep.subr.mxu0 0.0
      %v2194 = vand.u32 %v254, 4294901760
      %2195 = vmatpush1.msra.mxu0 %v2194
      %2196 = vmatprep.subr.mxu0 0.0
      %v2197 = vand.u32 %v255, 4294901760
      %2198 = vmatpush1.msra.mxu0 %v2197
      %2199 = vmatprep.subr.mxu0 0.0
      %v2200 = vand.u32 %v256, 4294901760
      %2201 = vmatpush1.msra.mxu0 %v2200
      %2202 = vmatprep.subr.mxu0 0.0
      %v2203 = vand.u32 %v257, 4294901760
      %2204 = vmatpush1.msra.mxu0 %v2203
      %2205 = vmatprep.subr.mxu0 0.0
      %v2206 = vand.u32 %v258, 4294901760
      %2207 = vmatpush1.msra.mxu0 %v2206
      %2208 = vmatprep.subr.mxu0 0.0
      %v2209 = vand.u32 %v259, 4294901760
      %2210 = vmatpush1.msra.mxu0 %v2209
      %2211 = vmatprep.subr.mxu0 0.0
      %v2212 = vand.u32 %v260, 4294901760
      %2213 = vmatpush1.msra.mxu0 %v2212
      %2214 = vmatprep.subr.mxu0 0.0
      %v2215 = vand.u32 %v261, 4294901760
      %2216 = vmatpush1.msra.mxu0 %v2215
      %2217 = vmatprep.subr.mxu0 0.0
      %v2218 = vand.u32 %v262, 4294901760
      %2219 = vmatpush1.msra.mxu0 %v2218
      %2220 = vmatprep.subr.mxu0 0.0
      %v2221 = vand.u32 %v263, 4294901760
      %2222 = vmatpush1.msra.mxu0 %v2221
      %2223 = vmatprep.subr.mxu0 0.0
      %v2224 = vand.u32 %v264, 4294901760
      %2225 = vmatpush1.msra.mxu0 %v2224
      %2226 = vmatprep.subr.mxu0 0.0
      %v2227 = vand.u32 %v265, 4294901760
      %2228 = vmatpush1.msra.mxu0 %v2227
      %2229 = vmatprep.subr.mxu0 0.0
      %v2230 = vand.u32 %v266, 4294901760
      %2231 = vmatpush1.msra.mxu0 %v2230
      %2232 = vmatprep.subr.mxu0 0.0
      %v2233 = vand.u32 %v267, 4294901760
      %2234 = vmatpush1.msra.mxu0 %v2233
      %2235 = vmatprep.subr.mxu0 0.0
      %v2236 = vand.u32 %v268, 4294901760
      %2237 = vmatpush1.msra.mxu0 %v2236
      %2238 = vmatprep.subr.mxu0 0.0
      %2239 = vmatpush1.msra.mxu0 0.0
      %2240 = vmatprep.subr.mxu0 0.0
      %2241 = vmatpush1.msra.mxu0 0.0
      %2242 = vmatprep.subr.mxu0 0.0
      %2243 = vmatpush1.msra.mxu0 0.0
      %2244 = vmatprep.subr.mxu0 0.0
      %2245 = vmatpush1.msra.mxu0 0.0
      %2246 = vmatprep.subr.mxu0 0.0
      %2247 = vmatpush1.msra.mxu0 0.0
      %2248 = vmatprep.subr.mxu0 0.0
      %2249 = vmatpush1.msra.mxu0 0.0
      %2250 = vmatprep.subr.mxu0 0.0
      %2251 = vmatpush1.msra.mxu0 0.0
      %2252 = vmatprep.subr.mxu0 0.0
      %2253 = vmatpush1.msra.mxu0 0.0
      %2254 = vmatprep.subr.mxu0 0.0
      %2255 = vmatpush1.msra.mxu0 0.0
      %2256 = vmatprep.subr.mxu0 0.0
      %2257 = vmatpush1.msra.mxu0 0.0
      %2258 = vmatprep.subr.mxu0 0.0
      %2259 = vmatpush1.msra.mxu0 0.0
      %2260 = vmatprep.subr.mxu0 0.0
      %2261 = vmatpush1.msra.mxu0 0.0
      %2262 = vmatprep.subr.mxu0 0.0
      %2263 = vmatpush1.msra.mxu0 0.0
      %2264 = vmatprep.subr.mxu0 0.0
      %2265 = vmatpush1.msra.mxu0 0.0
      %2266 = vmatprep.subr.mxu0 0.0
      %2267 = vmatpush1.msra.mxu0 0.0
      %2268 = vmatprep.subr.mxu0 0.0
      %2269 = vmatpush1.msra.mxu0 0.0
      %2270 = vmatprep.mubr.f32.mxu0 0.0
      %v2271 = vand.u32 %v1477, 4294901760
      %v2272 = vsub.f32 %v1477, %v2271
      %v2273 = vand.u32 %v2272, 4294901760
      %2274 = vmatmul.mubr.f32.gmra.mrb[0].mxu0 %v2273
      %v2275 = vpop.f32.mrb[0].mxu0
      %v2276 = vadd.f32 %v2082, %v2275
      %v2277 = vpop.f32.mrb[0].mxu0
      %2278 = vmatprep.mubr.f32.mxu0 0.0
      %v2279 = vand.u32 %v1478, 4294901760
      %v2280 = vsub.f32 %v1478, %v2279
      %v2281 = vand.u32 %v2280, 4294901760
      %2282 = vmatmul.mubr.f32.gmra.mrb[0].mxu0 %v2281
      %v2283 = vpop.f32.mrb[0].mxu0
      %v2284 = vadd.f32 %v2089, %v2283
      %v2285 = vpop.f32.mrb[0].mxu0
      %2286 = vmatprep.mubr.f32.mxu0 0.0
      %v2287 = vand.u32 %v1479, 4294901760
      %v2288 = vsub.f32 %v1479, %v2287
      %v2289 = vand.u32 %v2288, 4294901760
      %2290 = vmatmul.mubr.f32.gmra.mrb[0].mxu0 %v2289
      %v2291 = vpop.f32.mrb[0].mxu0
      %v2292 = vadd.f32 %v2096, %v2291
      %v2293 = vpop.f32.mrb[0].mxu0
      %2294 = vmatprep.mubr.f32.mxu0 0.0
      %v2295 = vand.u32 %v1480, 4294901760
      %v2296 = vsub.f32 %v1480, %v2295
      %v2297 = vand.u32 %v2296, 4294901760
      %2298 = vmatmul.mubr.f32.gmra.mrb[0].mxu0 %v2297
      %v2299 = vpop.f32.mrb[0].mxu0
      %v2300 = vadd.f32 %v2103, %v2299
      %v2301 = vpop.f32.mrb[0].mxu0
      %2302 = vmatprep.mubr.f32.mxu0 0.0
      %v2303 = vand.u32 %v1481, 4294901760
      %v2304 = vsub.f32 %v1481, %v2303
      %v2305 = vand.u32 %v2304, 4294901760
      %2306 = vmatmul.mubr.f32.gmra.mrb[0].mxu0 %v2305
      %v2307 = vpop.f32.mrb[0].mxu0
      %v2308 = vadd.f32 %v2110, %v2307
      %v2309 = vpop.f32.mrb[0].mxu0
      %2310 = vmatprep.mubr.f32.mxu0 0.0
      %v2311 = vand.u32 %v1482, 4294901760
      %v2312 = vsub.f32 %v1482, %v2311
      %v2313 = vand.u32 %v2312, 4294901760
      %2314 = vmatmul.mubr.f32.gmra.mrb[0].mxu0 %v2313
      %v2315 = vpop.f32.mrb[0].mxu0
      %v2316 = vadd.f32 %v2117, %v2315
      %v2317 = vpop.f32.mrb[0].mxu0
      %2318 = vmatprep.mubr.f32.mxu0 0.0
      %v2319 = vand.u32 %v1483, 4294901760
      %v2320 = vsub.f32 %v1483, %v2319
      %v2321 = vand.u32 %v2320, 4294901760
      %2322 = vmatmul.mubr.f32.gmra.mrb[0].mxu0 %v2321
      %v2323 = vpop.f32.mrb[0].mxu0
      %v2324 = vadd.f32 %v2124, %v2323
      %v2325 = vpop.f32.mrb[0].mxu0
      %2326 = vmatprep.mubr.f32.mxu0 0.0
      %v2327 = vand.u32 %v1484, 4294901760
      %v2328 = vsub.f32 %v1484, %v2327
      %v2329 = vand.u32 %v2328, 4294901760
      %2330 = vmatmul.mubr.f32.gmra.mrb[0].mxu0 %v2329
      %v2331 = vpop.f32.mrb[0].mxu0
      %v2332 = vadd.f32 %v2131, %v2331
      %v2333 = vpop.f32.mrb[0].mxu0
      %2334 = vmatprep.mubr.f32.mxu0 0.0
      %v2335 = vand.u32 %v1485, 4294901760
      %v2336 = vsub.f32 %v1485, %v2335
      %v2337 = vand.u32 %v2336, 4294901760
      %2338 = vmatmul.mubr.f32.gmra.mrb[0].mxu0 %v2337
      %v2339 = vpop.f32.mrb[0].mxu0
      %v2340 = vadd.f32 %v2138, %v2339
      %v2341 = vpop.f32.mrb[0].mxu0
      %2342 = vmatprep.mubr.f32.mxu0 0.0
      %v2343 = vand.u32 %v1486, 4294901760
      %v2344 = vsub.f32 %v1486, %v2343
      %v2345 = vand.u32 %v2344, 4294901760
      %2346 = vmatmul.mubr.f32.gmra.mrb[0].mxu0 %v2345
      %v2347 = vpop.f32.mrb[0].mxu0
      %v2348 = vadd.f32 %v2145, %v2347
      %v2349 = vpop.f32.mrb[0].mxu0
      %2350 = vmatprep.mubr.f32.mxu0 0.0
      %v2351 = vand.u32 %v1487, 4294901760
      %v2352 = vsub.f32 %v1487, %v2351
      %v2353 = vand.u32 %v2352, 4294901760
      %2354 = vmatmul.mubr.f32.gmra.mrb[0].mxu0 %v2353
      %v2355 = vpop.f32.mrb[0].mxu0
      %v2356 = vadd.f32 %v2152, %v2355
      %v2357 = vpop.f32.mrb[0].mxu0
      %2358 = vmatprep.mubr.f32.mxu0 0.0
      %v2359 = vand.u32 %v1488, 4294901760
      %v2360 = vsub.f32 %v1488, %v2359
      %v2361 = vand.u32 %v2360, 4294901760
      %2362 = vmatmul.mubr.f32.gmra.mrb[0].mxu0 %v2361
      %v2363 = vpop.f32.mrb[0].mxu0
      %v2364 = vadd.f32 %v2159, %v2363
      %v2365 = vpop.f32.mrb[0].mxu0
      %2366 = vmatprep.mubr.f32.mxu0 0.0
      %v2367 = vand.u32 %v1489, 4294901760
      %v2368 = vsub.f32 %v1489, %v2367
      %v2369 = vand.u32 %v2368, 4294901760
      %2370 = vmatmul.mubr.f32.gmra.mrb[0].mxu0 %v2369
      %v2371 = vpop.f32.mrb[0].mxu0
      %v2372 = vadd.f32 %v2166, %v2371
      %v2373 = vpop.f32.mrb[0].mxu0
      %2374 = vmatprep.mubr.f32.mxu0 0.0
      %v2375 = vand.u32 %v1490, 4294901760
      %v2376 = vsub.f32 %v1490, %v2375
      %v2377 = vand.u32 %v2376, 4294901760
      %2378 = vmatmul.mubr.f32.gmra.mrb[0].mxu0 %v2377
      %v2379 = vpop.f32.mrb[0].mxu0
      %v2380 = vadd.f32 %v2173, %v2379
      %v2381 = vpop.f32.mrb[0].mxu0
      %2382 = vmatprep.mubr.f32.mxu0 0.0
      %v2383 = vand.u32 %v1491, 4294901760
      %v2384 = vsub.f32 %v1491, %v2383
      %v2385 = vand.u32 %v2384, 4294901760
      %2386 = vmatmul.mubr.f32.gmra.mrb[0].mxu0 %v2385
      %v2387 = vpop.f32.mrb[0].mxu0
      %v2388 = vadd.f32 %v2180, %v2387
      %v2389 = vpop.f32.mrb[0].mxu0
      %2390 = vmatprep.mubr.f32.mxu0 0.0
      %v2391 = vand.u32 %v1492, 4294901760
      %v2392 = vsub.f32 %v1492, %v2391
      %v2393 = vand.u32 %v2392, 4294901760
      %2394 = vmatmul.mubr.f32.gmra.mrb[0].mxu0 %v2393
      %v2395 = vpop.f32.mrb[0].mxu0
      %v2396 = vadd.f32 %v2187, %v2395
      %v2397 = vpop.f32.mrb[0].mxu0
      %2398 = vdwg.mxu0
      %2399 = vmatprep.subr.mxu0 0.0
      %v2400 = vand.u32 %v253, 4294901760
      %v2401 = vsub.f32 %v253, %v2400
      %v2402 = vand.u32 %v2401, 4294901760
      %2403 = vmatpush1.msra.mxu0 %v2402
      %2404 = vmatprep.subr.mxu0 0.0
      %v2405 = vand.u32 %v254, 4294901760
      %v2406 = vsub.f32 %v254, %v2405
      %v2407 = vand.u32 %v2406, 4294901760
      %2408 = vmatpush1.msra.mxu0 %v2407
      %2409 = vmatprep.subr.mxu0 0.0
      %v2410 = vand.u32 %v255, 4294901760
      %v2411 = vsub.f32 %v255, %v2410
      %v2412 = vand.u32 %v2411, 4294901760
      %2413 = vmatpush1.msra.mxu0 %v2412
      %2414 = vmatprep.subr.mxu0 0.0
      %v2415 = vand.u32 %v256, 4294901760
      %v2416 = vsub.f32 %v256, %v2415
      %v2417 = vand.u32 %v2416, 4294901760
      %2418 = vmatpush1.msra.mxu0 %v2417
      %2419 = vmatprep.subr.mxu0 0.0
      %v2420 = vand.u32 %v257, 4294901760
      %v2421 = vsub.f32 %v257, %v2420
      %v2422 = vand.u32 %v2421, 4294901760
      %2423 = vmatpush1.msra.mxu0 %v2422
      %2424 = vmatprep.subr.mxu0 0.0
      %v2425 = vand.u32 %v258, 4294901760
      %v2426 = vsub.f32 %v258, %v2425
      %v2427 = vand.u32 %v2426, 4294901760
      %2428 = vmatpush1.msra.mxu0 %v2427
      %2429 = vmatprep.subr.mxu0 0.0
      %v2430 = vand.u32 %v259, 4294901760
      %v2431 = vsub.f32 %v259, %v2430
      %v2432 = vand.u32 %v2431, 4294901760
      %2433 = vmatpush1.msra.mxu0 %v2432
      %2434 = vmatprep.subr.mxu0 0.0
      %v2435 = vand.u32 %v260, 4294901760
      %v2436 = vsub.f32 %v260, %v2435
      %v2437 = vand.u32 %v2436, 4294901760
      %2438 = vmatpush1.msra.mxu0 %v2437
      %2439 = vmatprep.subr.mxu0 0.0
      %v2440 = vand.u32 %v261, 4294901760
      %v2441 = vsub.f32 %v261, %v2440
      %v2442 = vand.u32 %v2441, 4294901760
      %2443 = vmatpush1.msra.mxu0 %v2442
      %2444 = vmatprep.subr.mxu0 0.0
      %v2445 = vand.u32 %v262, 4294901760
      %v2446 = vsub.f32 %v262, %v2445
      %v2447 = vand.u32 %v2446, 4294901760
      %2448 = vmatpush1.msra.mxu0 %v2447
      %2449 = vmatprep.subr.mxu0 0.0
      %v2450 = vand.u32 %v263, 4294901760
      %v2451 = vsub.f32 %v263, %v2450
      %v2452 = vand.u32 %v2451, 4294901760
      %2453 = vmatpush1.msra.mxu0 %v2452
      %2454 = vmatprep.subr.mxu0 0.0
      %v2455 = vand.u32 %v264, 4294901760
      %v2456 = vsub.f32 %v264, %v2455
      %v2457 = vand.u32 %v2456, 4294901760
      %2458 = vmatpush1.msra.mxu0 %v2457
      %2459 = vmatprep.subr.mxu0 0.0
      %v2460 = vand.u32 %v265, 4294901760
      %v2461 = vsub.f32 %v265, %v2460
      %v2462 = vand.u32 %v2461, 4294901760
      %2463 = vmatpush1.msra.mxu0 %v2462
      %2464 = vmatprep.subr.mxu0 0.0
      %v2465 = vand.u32 %v266, 4294901760
      %v2466 = vsub.f32 %v266, %v2465
      %v2467 = vand.u32 %v2466, 4294901760
      %2468 = vmatpush1.msra.mxu0 %v2467
      %2469 = vmatprep.subr.mxu0 0.0
      %v2470 = vand.u32 %v267, 4294901760
      %v2471 = vsub.f32 %v267, %v2470
      %v2472 = vand.u32 %v2471, 4294901760
      %2473 = vmatpush1.msra.mxu0 %v2472
      %2474 = vmatprep.subr.mxu0 0.0
      %v2475 = vand.u32 %v268, 4294901760
      %v2476 = vsub.f32 %v268, %v2475
      %v2477 = vand.u32 %v2476, 4294901760
      %2478 = vmatpush1.msra.mxu0 %v2477
      %2479 = vmatprep.subr.mxu0 0.0
      %2480 = vmatpush1.msra.mxu0 0.0
      %2481 = vmatprep.subr.mxu0 0.0
      %2482 = vmatpush1.msra.mxu0 0.0
      %2483 = vmatprep.subr.mxu0 0.0
      %2484 = vmatpush1.msra.mxu0 0.0
      %2485 = vmatprep.subr.mxu0 0.0
      %2486 = vmatpush1.msra.mxu0 0.0
      %2487 = vmatprep.subr.mxu0 0.0
      %2488 = vmatpush1.msra.mxu0 0.0
      %2489 = vmatprep.subr.mxu0 0.0
      %2490 = vmatpush1.msra.mxu0 0.0
      %2491 = vmatprep.subr.mxu0 0.0
      %2492 = vmatpush1.msra.mxu0 0.0
      %2493 = vmatprep.subr.mxu0 0.0
      %2494 = vmatpush1.msra.mxu0 0.0
      %2495 = vmatprep.subr.mxu0 0.0
      %2496 = vmatpush1.msra.mxu0 0.0
      %2497 = vmatprep.subr.mxu0 0.0
      %2498 = vmatpush1.msra.mxu0 0.0
      %2499 = vmatprep.subr.mxu0 0.0
      %2500 = vmatpush1.msra.mxu0 0.0
      %2501 = vmatprep.subr.mxu0 0.0
      %2502 = vmatpush1.msra.mxu0 0.0
      %2503 = vmatprep.subr.mxu0 0.0
      %2504 = vmatpush1.msra.mxu0 0.0
      %2505 = vmatprep.subr.mxu0 0.0
      %2506 = vmatpush1.msra.mxu0 0.0
      %2507 = vmatprep.subr.mxu0 0.0
      %2508 = vmatpush1.msra.mxu0 0.0
      %2509 = vmatprep.subr.mxu0 0.0
      %2510 = vmatpush1.msra.mxu0 0.0
      %2511 = vmatprep.mubr.f32.mxu0 0.0
      %v2512 = vand.u32 %v1477, 4294901760
      %2513 = vmatmul.mubr.f32.gmra.mrb[0].mxu0 %v2512
      %v2514 = vpop.f32.mrb[0].mxu0
      %v2515 = vadd.f32 %v2276, %v2514
      %v2516 = vpop.f32.mrb[0].mxu0
      %2517 = vmatprep.mubr.f32.mxu0 0.0
      %v2518 = vand.u32 %v1478, 4294901760
      %2519 = vmatmul.mubr.f32.gmra.mrb[0].mxu0 %v2518
      %v2520 = vpop.f32.mrb[0].mxu0
      %v2521 = vadd.f32 %v2284, %v2520
      %v2522 = vpop.f32.mrb[0].mxu0
      %2523 = vmatprep.mubr.f32.mxu0 0.0
      %v2524 = vand.u32 %v1479, 4294901760
      %2525 = vmatmul.mubr.f32.gmra.mrb[0].mxu0 %v2524
      %v2526 = vpop.f32.mrb[0].mxu0
      %v2527 = vadd.f32 %v2292, %v2526
      %v2528 = vpop.f32.mrb[0].mxu0
      %2529 = vmatprep.mubr.f32.mxu0 0.0
      %v2530 = vand.u32 %v1480, 4294901760
      %2531 = vmatmul.mubr.f32.gmra.mrb[0].mxu0 %v2530
      %v2532 = vpop.f32.mrb[0].mxu0
      %v2533 = vadd.f32 %v2300, %v2532
      %v2534 = vpop.f32.mrb[0].mxu0
      %2535 = vmatprep.mubr.f32.mxu0 0.0
      %v2536 = vand.u32 %v1481, 4294901760
      %2537 = vmatmul.mubr.f32.gmra.mrb[0].mxu0 %v2536
      %v2538 = vpop.f32.mrb[0].mxu0
      %v2539 = vadd.f32 %v2308, %v2538
      %v2540 = vpop.f32.mrb[0].mxu0
      %2541 = vmatprep.mubr.f32.mxu0 0.0
      %v2542 = vand.u32 %v1482, 4294901760
      %2543 = vmatmul.mubr.f32.gmra.mrb[0].mxu0 %v2542
      %v2544 = vpop.f32.mrb[0].mxu0
      %v2545 = vadd.f32 %v2316, %v2544
      %v2546 = vpop.f32.mrb[0].mxu0
      %2547 = vmatprep.mubr.f32.mxu0 0.0
      %v2548 = vand.u32 %v1483, 4294901760
      %2549 = vmatmul.mubr.f32.gmra.mrb[0].mxu0 %v2548
      %v2550 = vpop.f32.mrb[0].mxu0
      %v2551 = vadd.f32 %v2324, %v2550
      %v2552 = vpop.f32.mrb[0].mxu0
      %2553 = vmatprep.mubr.f32.mxu0 0.0
      %v2554 = vand.u32 %v1484, 4294901760
      %2555 = vmatmul.mubr.f32.gmra.mrb[0].mxu0 %v2554
      %v2556 = vpop.f32.mrb[0].mxu0
      %v2557 = vadd.f32 %v2332, %v2556
      %v2558 = vpop.f32.mrb[0].mxu0
      %2559 = vmatprep.mubr.f32.mxu0 0.0
      %v2560 = vand.u32 %v1485, 4294901760
      %2561 = vmatmul.mubr.f32.gmra.mrb[0].mxu0 %v2560
      %v2562 = vpop.f32.mrb[0].mxu0
      %v2563 = vadd.f32 %v2340, %v2562
      %v2564 = vpop.f32.mrb[0].mxu0
      %2565 = vmatprep.mubr.f32.mxu0 0.0
      %v2566 = vand.u32 %v1486, 4294901760
      %2567 = vmatmul.mubr.f32.gmra.mrb[0].mxu0 %v2566
      %v2568 = vpop.f32.mrb[0].mxu0
      %v2569 = vadd.f32 %v2348, %v2568
      %v2570 = vpop.f32.mrb[0].mxu0
      %2571 = vmatprep.mubr.f32.mxu0 0.0
      %v2572 = vand.u32 %v1487, 4294901760
      %2573 = vmatmul.mubr.f32.gmra.mrb[0].mxu0 %v2572
      %v2574 = vpop.f32.mrb[0].mxu0
      %v2575 = vadd.f32 %v2356, %v2574
      %v2576 = vpop.f32.mrb[0].mxu0
      %2577 = vmatprep.mubr.f32.mxu0 0.0
      %v2578 = vand.u32 %v1488, 4294901760
      %2579 = vmatmul.mubr.f32.gmra.mrb[0].mxu0 %v2578
      %v2580 = vpop.f32.mrb[0].mxu0
      %v2581 = vadd.f32 %v2364, %v2580
      %v2582 = vpop.f32.mrb[0].mxu0
      %2583 = vmatprep.mubr.f32.mxu0 0.0
      %v2584 = vand.u32 %v1489, 4294901760
      %2585 = vmatmul.mubr.f32.gmra.mrb[0].mxu0 %v2584
      %v2586 = vpop.f32.mrb[0].mxu0
      %v2587 = vadd.f32 %v2372, %v2586
      %v2588 = vpop.f32.mrb[0].mxu0
      %2589 = vmatprep.mubr.f32.mxu0 0.0
      %v2590 = vand.u32 %v1490, 4294901760
      %2591 = vmatmul.mubr.f32.gmra.mrb[0].mxu0 %v2590
      %v2592 = vpop.f32.mrb[0].mxu0
      %v2593 = vadd.f32 %v2380, %v2592
      %v2594 = vpop.f32.mrb[0].mxu0
      %2595 = vmatprep.mubr.f32.mxu0 0.0
      %v2596 = vand.u32 %v1491, 4294901760
      %2597 = vmatmul.mubr.f32.gmra.mrb[0].mxu0 %v2596
      %v2598 = vpop.f32.mrb[0].mxu0
      %v2599 = vadd.f32 %v2388, %v2598
      %v2600 = vpop.f32.mrb[0].mxu0
      %2601 = vmatprep.mubr.f32.mxu0 0.0
      %v2602 = vand.u32 %v1492, 4294901760
      %2603 = vmatmul.mubr.f32.gmra.mrb[0].mxu0 %v2602
      %v2604 = vpop.f32.mrb[0].mxu0
      %v2605 = vadd.f32 %v2396, %v2604
      %v2606 = vpop.f32.mrb[0].mxu0
      %2607 = vdwg.mxu0
      %2608 = vmatprep.subr.mxu0 0.0
      %v2609 = vand.u32 %v253, 4294901760
      %2610 = vmatpush1.msra.mxu0 %v2609
      %2611 = vmatprep.subr.mxu0 0.0
      %v2612 = vand.u32 %v254, 4294901760
      %2613 = vmatpush1.msra.mxu0 %v2612
      %2614 = vmatprep.subr.mxu0 0.0
      %v2615 = vand.u32 %v255, 4294901760
      %2616 = vmatpush1.msra.mxu0 %v2615
      %2617 = vmatprep.subr.mxu0 0.0
      %v2618 = vand.u32 %v256, 4294901760
      %2619 = vmatpush1.msra.mxu0 %v2618
      %2620 = vmatprep.subr.mxu0 0.0
      %v2621 = vand.u32 %v257, 4294901760
      %2622 = vmatpush1.msra.mxu0 %v2621
      %2623 = vmatprep.subr.mxu0 0.0
      %v2624 = vand.u32 %v258, 4294901760
      %2625 = vmatpush1.msra.mxu0 %v2624
      %2626 = vmatprep.subr.mxu0 0.0
      %v2627 = vand.u32 %v259, 4294901760
      %2628 = vmatpush1.msra.mxu0 %v2627
      %2629 = vmatprep.subr.mxu0 0.0
      %v2630 = vand.u32 %v260, 4294901760
      %2631 = vmatpush1.msra.mxu0 %v2630
      %2632 = vmatprep.subr.mxu0 0.0
      %v2633 = vand.u32 %v261, 4294901760
      %2634 = vmatpush1.msra.mxu0 %v2633
      %2635 = vmatprep.subr.mxu0 0.0
      %v2636 = vand.u32 %v262, 4294901760
      %2637 = vmatpush1.msra.mxu0 %v2636
      %2638 = vmatprep.subr.mxu0 0.0
      %v2639 = vand.u32 %v263, 4294901760
      %2640 = vmatpush1.msra.mxu0 %v2639
      %2641 = vmatprep.subr.mxu0 0.0
      %v2642 = vand.u32 %v264, 4294901760
      %2643 = vmatpush1.msra.mxu0 %v2642
      %2644 = vmatprep.subr.mxu0 0.0
      %v2645 = vand.u32 %v265, 4294901760
      %2646 = vmatpush1.msra.mxu0 %v2645
      %2647 = vmatprep.subr.mxu0 0.0
      %v2648 = vand.u32 %v266, 4294901760
      %2649 = vmatpush1.msra.mxu0 %v2648
      %2650 = vmatprep.subr.mxu0 0.0
      %v2651 = vand.u32 %v267, 4294901760
      %2652 = vmatpush1.msra.mxu0 %v2651
      %2653 = vmatprep.subr.mxu0 0.0
      %v2654 = vand.u32 %v268, 4294901760
      %2655 = vmatpush1.msra.mxu0 %v2654
      %2656 = vmatprep.subr.mxu0 0.0
      %2657 = vmatpush1.msra.mxu0 0.0
      %2658 = vmatprep.subr.mxu0 0.0
      %2659 = vmatpush1.msra.mxu0 0.0
      %2660 = vmatprep.subr.mxu0 0.0
      %2661 = vmatpush1.msra.mxu0 0.0
      %2662 = vmatprep.subr.mxu0 0.0
      %2663 = vmatpush1.msra.mxu0 0.0
      %2664 = vmatprep.subr.mxu0 0.0
      %2665 = vmatpush1.msra.mxu0 0.0
      %2666 = vmatprep.subr.mxu0 0.0
      %2667 = vmatpush1.msra.mxu0 0.0
      %2668 = vmatprep.subr.mxu0 0.0
      %2669 = vmatpush1.msra.mxu0 0.0
      %2670 = vmatprep.subr.mxu0 0.0
      %2671 = vmatpush1.msra.mxu0 0.0
      %2672 = vmatprep.subr.mxu0 0.0
      %2673 = vmatpush1.msra.mxu0 0.0
      %2674 = vmatprep.subr.mxu0 0.0
      %2675 = vmatpush1.msra.mxu0 0.0
      %2676 = vmatprep.subr.mxu0 0.0
      %2677 = vmatpush1.msra.mxu0 0.0
      %2678 = vmatprep.subr.mxu0 0.0
      %2679 = vmatpush1.msra.mxu0 0.0
      %2680 = vmatprep.subr.mxu0 0.0
      %2681 = vmatpush1.msra.mxu0 0.0
      %2682 = vmatprep.subr.mxu0 0.0
      %2683 = vmatpush1.msra.mxu0 0.0
      %2684 = vmatprep.subr.mxu0 0.0
      %2685 = vmatpush1.msra.mxu0 0.0
      %2686 = vmatprep.subr.mxu0 0.0
      %2687 = vmatpush1.msra.mxu0 0.0
      %2688 = vmatprep.mubr.f32.mxu0 0.0
      %v2689 = vand.u32 %v1477, 4294901760
      %2690 = vmatmul.mubr.f32.gmra.mrb[0].mxu0 %v2689
      %v2691 = vpop.f32.mrb[0].mxu0
      %v2692 = vadd.f32 %v2515, %v2691
      %v2693 = vpop.f32.mrb[0].mxu0
      %2694 = vmatprep.mubr.f32.mxu0 0.0
      %v2695 = vand.u32 %v1478, 4294901760
      %2696 = vmatmul.mubr.f32.gmra.mrb[0].mxu0 %v2695
      %v2697 = vpop.f32.mrb[0].mxu0
      %v2698 = vadd.f32 %v2521, %v2697
      %v2699 = vpop.f32.mrb[0].mxu0
      %2700 = vmatprep.mubr.f32.mxu0 0.0
      %v2701 = vand.u32 %v1479, 4294901760
      %2702 = vmatmul.mubr.f32.gmra.mrb[0].mxu0 %v2701
      %v2703 = vpop.f32.mrb[0].mxu0
      %v2704 = vadd.f32 %v2527, %v2703
      %v2705 = vpop.f32.mrb[0].mxu0
      %2706 = vmatprep.mubr.f32.mxu0 0.0
      %v2707 = vand.u32 %v1480, 4294901760
      %2708 = vmatmul.mubr.f32.gmra.mrb[0].mxu0 %v2707
      %v2709 = vpop.f32.mrb[0].mxu0
      %v2710 = vadd.f32 %v2533, %v2709
      %v2711 = vpop.f32.mrb[0].mxu0
      %2712 = vmatprep.mubr.f32.mxu0 0.0
      %v2713 = vand.u32 %v1481, 4294901760
      %2714 = vmatmul.mubr.f32.gmra.mrb[0].mxu0 %v2713
      %v2715 = vpop.f32.mrb[0].mxu0
      %v2716 = vadd.f32 %v2539, %v2715
      %v2717 = vpop.f32.mrb[0].mxu0
      %2718 = vmatprep.mubr.f32.mxu0 0.0
      %v2719 = vand.u32 %v1482, 4294901760
      %2720 = vmatmul.mubr.f32.gmra.mrb[0].mxu0 %v2719
      %v2721 = vpop.f32.mrb[0].mxu0
      %v2722 = vadd.f32 %v2545, %v2721
      %v2723 = vpop.f32.mrb[0].mxu0
      %2724 = vmatprep.mubr.f32.mxu0 0.0
      %v2725 = vand.u32 %v1483, 4294901760
      %2726 = vmatmul.mubr.f32.gmra.mrb[0].mxu0 %v2725
      %v2727 = vpop.f32.mrb[0].mxu0
      %v2728 = vadd.f32 %v2551, %v2727
      %v2729 = vpop.f32.mrb[0].mxu0
      %2730 = vmatprep.mubr.f32.mxu0 0.0
      %v2731 = vand.u32 %v1484, 4294901760
      %2732 = vmatmul.mubr.f32.gmra.mrb[0].mxu0 %v2731
      %v2733 = vpop.f32.mrb[0].mxu0
      %v2734 = vadd.f32 %v2557, %v2733
      %v2735 = vpop.f32.mrb[0].mxu0
      %2736 = vmatprep.mubr.f32.mxu0 0.0
      %v2737 = vand.u32 %v1485, 4294901760
      %2738 = vmatmul.mubr.f32.gmra.mrb[0].mxu0 %v2737
      %v2739 = vpop.f32.mrb[0].mxu0
      %v2740 = vadd.f32 %v2563, %v2739
      %v2741 = vpop.f32.mrb[0].mxu0
      %2742 = vmatprep.mubr.f32.mxu0 0.0
      %v2743 = vand.u32 %v1486, 4294901760
      %2744 = vmatmul.mubr.f32.gmra.mrb[0].mxu0 %v2743
      %v2745 = vpop.f32.mrb[0].mxu0
      %v2746 = vadd.f32 %v2569, %v2745
      %v2747 = vpop.f32.mrb[0].mxu0
      %2748 = vmatprep.mubr.f32.mxu0 0.0
      %v2749 = vand.u32 %v1487, 4294901760
      %2750 = vmatmul.mubr.f32.gmra.mrb[0].mxu0 %v2749
      %v2751 = vpop.f32.mrb[0].mxu0
      %v2752 = vadd.f32 %v2575, %v2751
      %v2753 = vpop.f32.mrb[0].mxu0
      %2754 = vmatprep.mubr.f32.mxu0 0.0
      %v2755 = vand.u32 %v1488, 4294901760
      %2756 = vmatmul.mubr.f32.gmra.mrb[0].mxu0 %v2755
      %v2757 = vpop.f32.mrb[0].mxu0
      %v2758 = vadd.f32 %v2581, %v2757
      %v2759 = vpop.f32.mrb[0].mxu0
      %2760 = vmatprep.mubr.f32.mxu0 0.0
      %v2761 = vand.u32 %v1489, 4294901760
      %2762 = vmatmul.mubr.f32.gmra.mrb[0].mxu0 %v2761
      %v2763 = vpop.f32.mrb[0].mxu0
      %v2764 = vadd.f32 %v2587, %v2763
      %v2765 = vpop.f32.mrb[0].mxu0
      %2766 = vmatprep.mubr.f32.mxu0 0.0
      %v2767 = vand.u32 %v1490, 4294901760
      %2768 = vmatmul.mubr.f32.gmra.mrb[0].mxu0 %v2767
      %v2769 = vpop.f32.mrb[0].mxu0
      %v2770 = vadd.f32 %v2593, %v2769
      %v2771 = vpop.f32.mrb[0].mxu0
      %2772 = vmatprep.mubr.f32.mxu0 0.0
      %v2773 = vand.u32 %v1491, 4294901760
      %2774 = vmatmul.mubr.f32.gmra.mrb[0].mxu0 %v2773
      %v2775 = vpop.f32.mrb[0].mxu0
      %v2776 = vadd.f32 %v2599, %v2775
      %v2777 = vpop.f32.mrb[0].mxu0
      %2778 = vmatprep.mubr.f32.mxu0 0.0
      %v2779 = vand.u32 %v1492, 4294901760
      %2780 = vmatmul.mubr.f32.gmra.mrb[0].mxu0 %v2779
      %v2781 = vpop.f32.mrb[0].mxu0
      %v2782 = vadd.f32 %v2605, %v2781
      %v2783 = vpop.f32.mrb[0].mxu0
      %2784 = vdwg.mxu0
      %v2785 = vadd.f32 %v228, %v2692
      %v2786 = vadd.f32 %v229, %v2698
      %v2787 = vadd.f32 %v230, %v2704
      %v2788 = vadd.f32 %v231, %v2710
      %v2789 = vadd.f32 %v232, %v2716
      %v2790 = vadd.f32 %v233, %v2722
      %v2791 = vadd.f32 %v234, %v2728
      %v2792 = vadd.f32 %v235, %v2734
      %v2793 = vadd.f32 %v236, %v2740
      %v2794 = vadd.f32 %v237, %v2746
      %v2795 = vadd.f32 %v238, %v2752
      %v2796 = vadd.f32 %v239, %v2758
      %v2797 = vadd.f32 %v240, %v2764
      %v2798 = vadd.f32 %v241, %v2770
      %v2799 = vadd.f32 %v242, %v2776
      %v2800 = vadd.f32 %v243, %v2782
      %v2801 = vmul.f32 %v2785, %v2785
      %v2802 = vmul.f32 %v2786, %v2786
      %v2803 = vmul.f32 %v2787, %v2787
      %v2804 = vmul.f32 %v2788, %v2788
      %v2805 = vmul.f32 %v2789, %v2789
      %v2806 = vmul.f32 %v2790, %v2790
      %v2807 = vmul.f32 %v2791, %v2791
      %v2808 = vmul.f32 %v2792, %v2792
      %v2809 = vmul.f32 %v2793, %v2793
      %v2810 = vmul.f32 %v2794, %v2794
      %v2811 = vmul.f32 %v2795, %v2795
      %v2812 = vmul.f32 %v2796, %v2796
      %v2813 = vmul.f32 %v2797, %v2797
      %v2814 = vmul.f32 %v2798, %v2798
      %v2815 = vmul.f32 %v2799, %v2799
      %v2816 = vmul.f32 %v2800, %v2800
      %v2817 = vsel %vm298, %v2801, 0.0
      %2818 = vadd.xlane.f32.xlu0 %v2817
      %v2819 = vpop.xlane.xlu0 %2818
      %v2820 = vsel %vm298, %v2802, 0.0
      %2821 = vadd.xlane.f32.xlu0 %v2820
      %v2822 = vpop.xlane.xlu0 %2821
      %v2823 = vsel %vm298, %v2803, 0.0
      %2824 = vadd.xlane.f32.xlu0 %v2823
      %v2825 = vpop.xlane.xlu0 %2824
      %v2826 = vsel %vm298, %v2804, 0.0
      %2827 = vadd.xlane.f32.xlu0 %v2826
      %v2828 = vpop.xlane.xlu0 %2827
      %v2829 = vsel %vm298, %v2805, 0.0
      %2830 = vadd.xlane.f32.xlu0 %v2829
      %v2831 = vpop.xlane.xlu0 %2830
      %v2832 = vsel %vm298, %v2806, 0.0
      %2833 = vadd.xlane.f32.xlu0 %v2832
      %v2834 = vpop.xlane.xlu0 %2833
      %v2835 = vsel %vm298, %v2807, 0.0
      %2836 = vadd.xlane.f32.xlu0 %v2835
      %v2837 = vpop.xlane.xlu0 %2836
      %v2838 = vsel %vm298, %v2808, 0.0
      %2839 = vadd.xlane.f32.xlu0 %v2838
      %v2840 = vpop.xlane.xlu0 %2839
      %v2841 = vsel %vm298, %v2809, 0.0
      %2842 = vadd.xlane.f32.xlu0 %v2841
      %v2843 = vpop.xlane.xlu0 %2842
      %v2844 = vsel %vm298, %v2810, 0.0
      %2845 = vadd.xlane.f32.xlu0 %v2844
      %v2846 = vpop.xlane.xlu0 %2845
      %v2847 = vsel %vm298, %v2811, 0.0
      %2848 = vadd.xlane.f32.xlu0 %v2847
      %v2849 = vpop.xlane.xlu0 %2848
      %v2850 = vsel %vm298, %v2812, 0.0
      %2851 = vadd.xlane.f32.xlu0 %v2850
      %v2852 = vpop.xlane.xlu0 %2851
      %v2853 = vsel %vm298, %v2813, 0.0
      %2854 = vadd.xlane.f32.xlu0 %v2853
      %v2855 = vpop.xlane.xlu0 %2854
      %v2856 = vsel %vm298, %v2814, 0.0
      %2857 = vadd.xlane.f32.xlu0 %v2856
      %v2858 = vpop.xlane.xlu0 %2857
      %v2859 = vsel %vm298, %v2815, 0.0
      %2860 = vadd.xlane.f32.xlu0 %v2859
      %v2861 = vpop.xlane.xlu0 %2860
      %v2862 = vsel %vm298, %v2816, 0.0
      %2863 = vadd.xlane.f32.xlu0 %v2862
      %v2864 = vpop.xlane.xlu0 %2863
      %v2865 = vrsqrt.pop %v2819
      %v2866 = vrsqrt.pop %v2822
      %v2867 = vrsqrt.pop %v2825
      %v2868 = vrsqrt.pop %v2828
      %v2869 = vrsqrt.pop %v2831
      %v2870 = vrsqrt.pop %v2834
      %v2871 = vrsqrt.pop %v2837
      %v2872 = vrsqrt.pop %v2840
      %v2873 = vrsqrt.pop %v2843
      %v2874 = vrsqrt.pop %v2846
      %v2875 = vrsqrt.pop %v2849
      %v2876 = vrsqrt.pop %v2852
      %v2877 = vrsqrt.pop %v2855
      %v2878 = vrsqrt.pop %v2858
      %v2879 = vrsqrt.pop %v2861
      %v2880 = vrsqrt.pop %v2864
      %v2881 = vmul.f32 %v2785, %v2865
      %v2882 = vmul.f32 %v2786, %v2866
      %v2883 = vmul.f32 %v2787, %v2867
      %v2884 = vmul.f32 %v2788, %v2868
      %v2885 = vmul.f32 %v2789, %v2869
      %v2886 = vmul.f32 %v2790, %v2870
      %v2887 = vmul.f32 %v2791, %v2871
      %v2888 = vmul.f32 %v2792, %v2872
      %v2889 = vmul.f32 %v2793, %v2873
      %v2890 = vmul.f32 %v2794, %v2874
      %v2891 = vmul.f32 %v2795, %v2875
      %v2892 = vmul.f32 %v2796, %v2876
      %v2893 = vmul.f32 %v2797, %v2877
      %v2894 = vmul.f32 %v2798, %v2878
      %v2895 = vmul.f32 %v2799, %v2879
      %v2896 = vmul.f32 %v2800, %v2880
      %v2898 = vlaneseq
      %v2899 = vshrl.u32 %v2898, 7
      %v2900 = vsub.s32 0, %v2899
      %v2901 = vrot.slane %v288, %v2900
      %v2904 = vsel %vm298, %v2881, 0
      %v2907 = vsel %vm298, %v2882, 0
      %v2910 = vsel %vm298, %v2883, 0
      %v2913 = vsel %vm298, %v2884, 0
      %v2916 = vsel %vm298, %v2885, 0
      %v2919 = vsel %vm298, %v2886, 0
      %v2922 = vsel %vm298, %v2887, 0
      %v2925 = vsel %vm298, %v2888, 0
      %v2928 = vsel %vm298, %v2889, 0
      %v2931 = vsel %vm298, %v2890, 0
      %v2934 = vsel %vm298, %v2891, 0
      %v2937 = vsel %vm298, %v2892, 0
      %v2940 = vsel %vm298, %v2893, 0
      %v2943 = vsel %vm298, %v2894, 0
      %v2946 = vsel %vm298, %v2895, 0
      %v2949 = vsel %vm298, %v2896, 0
      %2951 = vmatprep.subr.mxu0 0.0
      %v2952 = vand.u32 %v249, 4294901760
      %2953 = vmatpush1.msra.mxu0 %v2952
      %2954 = vmatprep.subr.mxu0 0.0
      %v2955 = vand.u32 %v250, 4294901760
      %2956 = vmatpush1.msra.mxu0 %v2955
      %2957 = vmatprep.subr.mxu0 0.0
      %v2958 = vand.u32 %v251, 4294901760
      %2959 = vmatpush1.msra.mxu0 %v2958
      %2960 = vmatprep.subr.mxu0 0.0
      %v2961 = vand.u32 %v252, 4294901760
      %2962 = vmatpush1.msra.mxu0 %v2961
      %2963 = vmatprep.subr.mxu0 0.0
      %2964 = vmatpush1.msra.mxu0 0.0
      %2965 = vmatprep.subr.mxu0 0.0
      %2966 = vmatpush1.msra.mxu0 0.0
      %2967 = vmatprep.subr.mxu0 0.0
      %2968 = vmatpush1.msra.mxu0 0.0
      %2969 = vmatprep.subr.mxu0 0.0
      %2970 = vmatpush1.msra.mxu0 0.0
      %2971 = vmatprep.subr.mxu0 0.0
      %2972 = vmatpush1.msra.mxu0 0.0
      %2973 = vmatprep.subr.mxu0 0.0
      %2974 = vmatpush1.msra.mxu0 0.0
      %2975 = vmatprep.subr.mxu0 0.0
      %2976 = vmatpush1.msra.mxu0 0.0
      %2977 = vmatprep.subr.mxu0 0.0
      %2978 = vmatpush1.msra.mxu0 0.0
      %2979 = vmatprep.subr.mxu0 0.0
      %2980 = vmatpush1.msra.mxu0 0.0
      %2981 = vmatprep.subr.mxu0 0.0
      %2982 = vmatpush1.msra.mxu0 0.0
      %2983 = vmatprep.subr.mxu0 0.0
      %2984 = vmatpush1.msra.mxu0 0.0
      %2985 = vmatprep.subr.mxu0 0.0
      %2986 = vmatpush1.msra.mxu0 0.0
      %2987 = vmatprep.subr.mxu0 0.0
      %2988 = vmatpush1.msra.mxu0 0.0
      %2989 = vmatprep.subr.mxu0 0.0
      %2990 = vmatpush1.msra.mxu0 0.0
      %2991 = vmatprep.subr.mxu0 0.0
      %2992 = vmatpush1.msra.mxu0 0.0
      %2993 = vmatprep.subr.mxu0 0.0
      %2994 = vmatpush1.msra.mxu0 0.0
      %2995 = vmatprep.subr.mxu0 0.0
      %2996 = vmatpush1.msra.mxu0 0.0
      %2997 = vmatprep.subr.mxu0 0.0
      %2998 = vmatpush1.msra.mxu0 0.0
      %2999 = vmatprep.subr.mxu0 0.0
      %3000 = vmatpush1.msra.mxu0 0.0
      %3001 = vmatprep.subr.mxu0 0.0
      %3002 = vmatpush1.msra.mxu0 0.0
      %3003 = vmatprep.subr.mxu0 0.0
      %3004 = vmatpush1.msra.mxu0 0.0
      %3005 = vmatprep.subr.mxu0 0.0
      %3006 = vmatpush1.msra.mxu0 0.0
      %3007 = vmatprep.subr.mxu0 0.0
      %3008 = vmatpush1.msra.mxu0 0.0
      %3009 = vmatprep.subr.mxu0 0.0
      %3010 = vmatpush1.msra.mxu0 0.0
      %3011 = vmatprep.subr.mxu0 0.0
      %3012 = vmatpush1.msra.mxu0 0.0
      %3013 = vmatprep.subr.mxu0 0.0
      %3014 = vmatpush1.msra.mxu0 0.0
      %3015 = vmatprep.subr.mxu0 0.0
      %3016 = vmatpush1.msra.mxu0 0.0
      %3017 = vmatprep.subr.mxu0 0.0
      %3018 = vmatpush1.msra.mxu0 0.0
      %3019 = vmatprep.mubr.f32.mxu0 0.0
      %v3020 = vand.u32 %v2904, 4294901760
      %v3021 = vsub.f32 %v2904, %v3020
      %v3022 = vand.u32 %v3021, 4294901760
      %v3023 = vsub.f32 %v3021, %v3022
      %v3024 = vand.u32 %v3023, 4294901760
      %3025 = vmatmul.mubr.f32.gmra.mrb[0].mxu0 %v3024
      %v3026 = vpop.f32.mrb[0].mxu0
      %v3027 = vadd.f32 %v2901, %v3026
      %v3028 = vpop.f32.mrb[0].mxu0
      %3029 = vmatprep.mubr.f32.mxu0 0.0
      %v3030 = vand.u32 %v2907, 4294901760
      %v3031 = vsub.f32 %v2907, %v3030
      %v3032 = vand.u32 %v3031, 4294901760
      %v3033 = vsub.f32 %v3031, %v3032
      %v3034 = vand.u32 %v3033, 4294901760
      %3035 = vmatmul.mubr.f32.gmra.mrb[0].mxu0 %v3034
      %v3036 = vpop.f32.mrb[0].mxu0
      %v3037 = vadd.f32 %v2901, %v3036
      %v3038 = vpop.f32.mrb[0].mxu0
      %3039 = vmatprep.mubr.f32.mxu0 0.0
      %v3040 = vand.u32 %v2910, 4294901760
      %v3041 = vsub.f32 %v2910, %v3040
      %v3042 = vand.u32 %v3041, 4294901760
      %v3043 = vsub.f32 %v3041, %v3042
      %v3044 = vand.u32 %v3043, 4294901760
      %3045 = vmatmul.mubr.f32.gmra.mrb[0].mxu0 %v3044
      %v3046 = vpop.f32.mrb[0].mxu0
      %v3047 = vadd.f32 %v2901, %v3046
      %v3048 = vpop.f32.mrb[0].mxu0
      %3049 = vmatprep.mubr.f32.mxu0 0.0
      %v3050 = vand.u32 %v2913, 4294901760
      %v3051 = vsub.f32 %v2913, %v3050
      %v3052 = vand.u32 %v3051, 4294901760
      %v3053 = vsub.f32 %v3051, %v3052
      %v3054 = vand.u32 %v3053, 4294901760
      %3055 = vmatmul.mubr.f32.gmra.mrb[0].mxu0 %v3054
      %v3056 = vpop.f32.mrb[0].mxu0
      %v3057 = vadd.f32 %v2901, %v3056
      %v3058 = vpop.f32.mrb[0].mxu0
      %3059 = vmatprep.mubr.f32.mxu0 0.0
      %v3060 = vand.u32 %v2916, 4294901760
      %v3061 = vsub.f32 %v2916, %v3060
      %v3062 = vand.u32 %v3061, 4294901760
      %v3063 = vsub.f32 %v3061, %v3062
      %v3064 = vand.u32 %v3063, 4294901760
      %3065 = vmatmul.mubr.f32.gmra.mrb[0].mxu0 %v3064
      %v3066 = vpop.f32.mrb[0].mxu0
      %v3067 = vadd.f32 %v2901, %v3066
      %v3068 = vpop.f32.mrb[0].mxu0
      %3069 = vmatprep.mubr.f32.mxu0 0.0
      %v3070 = vand.u32 %v2919, 4294901760
      %v3071 = vsub.f32 %v2919, %v3070
      %v3072 = vand.u32 %v3071, 4294901760
      %v3073 = vsub.f32 %v3071, %v3072
      %v3074 = vand.u32 %v3073, 4294901760
      %3075 = vmatmul.mubr.f32.gmra.mrb[0].mxu0 %v3074
      %v3076 = vpop.f32.mrb[0].mxu0
      %v3077 = vadd.f32 %v2901, %v3076
      %v3078 = vpop.f32.mrb[0].mxu0
      %3079 = vmatprep.mubr.f32.mxu0 0.0
      %v3080 = vand.u32 %v2922, 4294901760
      %v3081 = vsub.f32 %v2922, %v3080
      %v3082 = vand.u32 %v3081, 4294901760
      %v3083 = vsub.f32 %v3081, %v3082
      %v3084 = vand.u32 %v3083, 4294901760
      %3085 = vmatmul.mubr.f32.gmra.mrb[0].mxu0 %v3084
      %v3086 = vpop.f32.mrb[0].mxu0
      %v3087 = vadd.f32 %v2901, %v3086
      %v3088 = vpop.f32.mrb[0].mxu0
      %3089 = vmatprep.mubr.f32.mxu0 0.0
      %v3090 = vand.u32 %v2925, 4294901760
      %v3091 = vsub.f32 %v2925, %v3090
      %v3092 = vand.u32 %v3091, 4294901760
      %v3093 = vsub.f32 %v3091, %v3092
      %v3094 = vand.u32 %v3093, 4294901760
      %3095 = vmatmul.mubr.f32.gmra.mrb[0].mxu0 %v3094
      %v3096 = vpop.f32.mrb[0].mxu0
      %v3097 = vadd.f32 %v2901, %v3096
      %v3098 = vpop.f32.mrb[0].mxu0
      %3099 = vmatprep.mubr.f32.mxu0 0.0
      %v3100 = vand.u32 %v2928, 4294901760
      %v3101 = vsub.f32 %v2928, %v3100
      %v3102 = vand.u32 %v3101, 4294901760
      %v3103 = vsub.f32 %v3101, %v3102
      %v3104 = vand.u32 %v3103, 4294901760
      %3105 = vmatmul.mubr.f32.gmra.mrb[0].mxu0 %v3104
      %v3106 = vpop.f32.mrb[0].mxu0
      %v3107 = vadd.f32 %v2901, %v3106
      %v3108 = vpop.f32.mrb[0].mxu0
      %3109 = vmatprep.mubr.f32.mxu0 0.0
      %v3110 = vand.u32 %v2931, 4294901760
      %v3111 = vsub.f32 %v2931, %v3110
      %v3112 = vand.u32 %v3111, 4294901760
      %v3113 = vsub.f32 %v3111, %v3112
      %v3114 = vand.u32 %v3113, 4294901760
      %3115 = vmatmul.mubr.f32.gmra.mrb[0].mxu0 %v3114
      %v3116 = vpop.f32.mrb[0].mxu0
      %v3117 = vadd.f32 %v2901, %v3116
      %v3118 = vpop.f32.mrb[0].mxu0
      %3119 = vmatprep.mubr.f32.mxu0 0.0
      %v3120 = vand.u32 %v2934, 4294901760
      %v3121 = vsub.f32 %v2934, %v3120
      %v3122 = vand.u32 %v3121, 4294901760
      %v3123 = vsub.f32 %v3121, %v3122
      %v3124 = vand.u32 %v3123, 4294901760
      %3125 = vmatmul.mubr.f32.gmra.mrb[0].mxu0 %v3124
      %v3126 = vpop.f32.mrb[0].mxu0
      %v3127 = vadd.f32 %v2901, %v3126
      %v3128 = vpop.f32.mrb[0].mxu0
      %3129 = vmatprep.mubr.f32.mxu0 0.0
      %v3130 = vand.u32 %v2937, 4294901760
      %v3131 = vsub.f32 %v2937, %v3130
      %v3132 = vand.u32 %v3131, 4294901760
      %v3133 = vsub.f32 %v3131, %v3132
      %v3134 = vand.u32 %v3133, 4294901760
      %3135 = vmatmul.mubr.f32.gmra.mrb[0].mxu0 %v3134
      %v3136 = vpop.f32.mrb[0].mxu0
      %v3137 = vadd.f32 %v2901, %v3136
      %v3138 = vpop.f32.mrb[0].mxu0
      %3139 = vmatprep.mubr.f32.mxu0 0.0
      %v3140 = vand.u32 %v2940, 4294901760
      %v3141 = vsub.f32 %v2940, %v3140
      %v3142 = vand.u32 %v3141, 4294901760
      %v3143 = vsub.f32 %v3141, %v3142
      %v3144 = vand.u32 %v3143, 4294901760
      %3145 = vmatmul.mubr.f32.gmra.mrb[0].mxu0 %v3144
      %v3146 = vpop.f32.mrb[0].mxu0
      %v3147 = vadd.f32 %v2901, %v3146
      %v3148 = vpop.f32.mrb[0].mxu0
      %3149 = vmatprep.mubr.f32.mxu0 0.0
      %v3150 = vand.u32 %v2943, 4294901760
      %v3151 = vsub.f32 %v2943, %v3150
      %v3152 = vand.u32 %v3151, 4294901760
      %v3153 = vsub.f32 %v3151, %v3152
      %v3154 = vand.u32 %v3153, 4294901760
      %3155 = vmatmul.mubr.f32.gmra.mrb[0].mxu0 %v3154
      %v3156 = vpop.f32.mrb[0].mxu0
      %v3157 = vadd.f32 %v2901, %v3156
      %v3158 = vpop.f32.mrb[0].mxu0
      %3159 = vmatprep.mubr.f32.mxu0 0.0
      %v3160 = vand.u32 %v2946, 4294901760
      %v3161 = vsub.f32 %v2946, %v3160
      %v3162 = vand.u32 %v3161, 4294901760
      %v3163 = vsub.f32 %v3161, %v3162
      %v3164 = vand.u32 %v3163, 4294901760
      %3165 = vmatmul.mubr.f32.gmra.mrb[0].mxu0 %v3164
      %v3166 = vpop.f32.mrb[0].mxu0
      %v3167 = vadd.f32 %v2901, %v3166
      %v3168 = vpop.f32.mrb[0].mxu0
      %3169 = vmatprep.mubr.f32.mxu0 0.0
      %v3170 = vand.u32 %v2949, 4294901760
      %v3171 = vsub.f32 %v2949, %v3170
      %v3172 = vand.u32 %v3171, 4294901760
      %v3173 = vsub.f32 %v3171, %v3172
      %v3174 = vand.u32 %v3173, 4294901760
      %3175 = vmatmul.mubr.f32.gmra.mrb[0].mxu0 %v3174
      %v3176 = vpop.f32.mrb[0].mxu0
      %v3177 = vadd.f32 %v2901, %v3176
      %v3178 = vpop.f32.mrb[0].mxu0
      %3179 = vdwg.mxu0
      %3180 = vmatprep.subr.mxu0 0.0
      %v3181 = vand.u32 %v249, 4294901760
      %v3182 = vsub.f32 %v249, %v3181
      %v3183 = vand.u32 %v3182, 4294901760
      %v3184 = vsub.f32 %v3182, %v3183
      %v3185 = vand.u32 %v3184, 4294901760
      %3186 = vmatpush1.msra.mxu0 %v3185
      %3187 = vmatprep.subr.mxu0 0.0
      %v3188 = vand.u32 %v250, 4294901760
      %v3189 = vsub.f32 %v250, %v3188
      %v3190 = vand.u32 %v3189, 4294901760
      %v3191 = vsub.f32 %v3189, %v3190
      %v3192 = vand.u32 %v3191, 4294901760
      %3193 = vmatpush1.msra.mxu0 %v3192
      %3194 = vmatprep.subr.mxu0 0.0
      %v3195 = vand.u32 %v251, 4294901760
      %v3196 = vsub.f32 %v251, %v3195
      %v3197 = vand.u32 %v3196, 4294901760
      %v3198 = vsub.f32 %v3196, %v3197
      %v3199 = vand.u32 %v3198, 4294901760
      %3200 = vmatpush1.msra.mxu0 %v3199
      %3201 = vmatprep.subr.mxu0 0.0
      %v3202 = vand.u32 %v252, 4294901760
      %v3203 = vsub.f32 %v252, %v3202
      %v3204 = vand.u32 %v3203, 4294901760
      %v3205 = vsub.f32 %v3203, %v3204
      %v3206 = vand.u32 %v3205, 4294901760
      %3207 = vmatpush1.msra.mxu0 %v3206
      %3208 = vmatprep.subr.mxu0 0.0
      %3209 = vmatpush1.msra.mxu0 0.0
      %3210 = vmatprep.subr.mxu0 0.0
      %3211 = vmatpush1.msra.mxu0 0.0
      %3212 = vmatprep.subr.mxu0 0.0
      %3213 = vmatpush1.msra.mxu0 0.0
      %3214 = vmatprep.subr.mxu0 0.0
      %3215 = vmatpush1.msra.mxu0 0.0
      %3216 = vmatprep.subr.mxu0 0.0
      %3217 = vmatpush1.msra.mxu0 0.0
      %3218 = vmatprep.subr.mxu0 0.0
      %3219 = vmatpush1.msra.mxu0 0.0
      %3220 = vmatprep.subr.mxu0 0.0
      %3221 = vmatpush1.msra.mxu0 0.0
      %3222 = vmatprep.subr.mxu0 0.0
      %3223 = vmatpush1.msra.mxu0 0.0
      %3224 = vmatprep.subr.mxu0 0.0
      %3225 = vmatpush1.msra.mxu0 0.0
      %3226 = vmatprep.subr.mxu0 0.0
      %3227 = vmatpush1.msra.mxu0 0.0
      %3228 = vmatprep.subr.mxu0 0.0
      %3229 = vmatpush1.msra.mxu0 0.0
      %3230 = vmatprep.subr.mxu0 0.0
      %3231 = vmatpush1.msra.mxu0 0.0
      %3232 = vmatprep.subr.mxu0 0.0
      %3233 = vmatpush1.msra.mxu0 0.0
      %3234 = vmatprep.subr.mxu0 0.0
      %3235 = vmatpush1.msra.mxu0 0.0
      %3236 = vmatprep.subr.mxu0 0.0
      %3237 = vmatpush1.msra.mxu0 0.0
      %3238 = vmatprep.subr.mxu0 0.0
      %3239 = vmatpush1.msra.mxu0 0.0
      %3240 = vmatprep.subr.mxu0 0.0
      %3241 = vmatpush1.msra.mxu0 0.0
      %3242 = vmatprep.subr.mxu0 0.0
      %3243 = vmatpush1.msra.mxu0 0.0
      %3244 = vmatprep.subr.mxu0 0.0
      %3245 = vmatpush1.msra.mxu0 0.0
      %3246 = vmatprep.subr.mxu0 0.0
      %3247 = vmatpush1.msra.mxu0 0.0
      %3248 = vmatprep.subr.mxu0 0.0
      %3249 = vmatpush1.msra.mxu0 0.0
      %3250 = vmatprep.subr.mxu0 0.0
      %3251 = vmatpush1.msra.mxu0 0.0
      %3252 = vmatprep.subr.mxu0 0.0
      %3253 = vmatpush1.msra.mxu0 0.0
      %3254 = vmatprep.subr.mxu0 0.0
      %3255 = vmatpush1.msra.mxu0 0.0
      %3256 = vmatprep.subr.mxu0 0.0
      %3257 = vmatpush1.msra.mxu0 0.0
      %3258 = vmatprep.subr.mxu0 0.0
      %3259 = vmatpush1.msra.mxu0 0.0
      %3260 = vmatprep.subr.mxu0 0.0
      %3261 = vmatpush1.msra.mxu0 0.0
      %3262 = vmatprep.subr.mxu0 0.0
      %3263 = vmatpush1.msra.mxu0 0.0
      %3264 = vmatprep.mubr.f32.mxu0 0.0
      %v3265 = vand.u32 %v2904, 4294901760
      %3266 = vmatmul.mubr.f32.gmra.mrb[0].mxu0 %v3265
      %v3267 = vpop.f32.mrb[0].mxu0
      %v3268 = vadd.f32 %v3027, %v3267
      %v3269 = vpop.f32.mrb[0].mxu0
      %3270 = vmatprep.mubr.f32.mxu0 0.0
      %v3271 = vand.u32 %v2907, 4294901760
      %3272 = vmatmul.mubr.f32.gmra.mrb[0].mxu0 %v3271
      %v3273 = vpop.f32.mrb[0].mxu0
      %v3274 = vadd.f32 %v3037, %v3273
      %v3275 = vpop.f32.mrb[0].mxu0
      %3276 = vmatprep.mubr.f32.mxu0 0.0
      %v3277 = vand.u32 %v2910, 4294901760
      %3278 = vmatmul.mubr.f32.gmra.mrb[0].mxu0 %v3277
      %v3279 = vpop.f32.mrb[0].mxu0
      %v3280 = vadd.f32 %v3047, %v3279
      %v3281 = vpop.f32.mrb[0].mxu0
      %3282 = vmatprep.mubr.f32.mxu0 0.0
      %v3283 = vand.u32 %v2913, 4294901760
      %3284 = vmatmul.mubr.f32.gmra.mrb[0].mxu0 %v3283
      %v3285 = vpop.f32.mrb[0].mxu0
      %v3286 = vadd.f32 %v3057, %v3285
      %v3287 = vpop.f32.mrb[0].mxu0
      %3288 = vmatprep.mubr.f32.mxu0 0.0
      %v3289 = vand.u32 %v2916, 4294901760
      %3290 = vmatmul.mubr.f32.gmra.mrb[0].mxu0 %v3289
      %v3291 = vpop.f32.mrb[0].mxu0
      %v3292 = vadd.f32 %v3067, %v3291
      %v3293 = vpop.f32.mrb[0].mxu0
      %3294 = vmatprep.mubr.f32.mxu0 0.0
      %v3295 = vand.u32 %v2919, 4294901760
      %3296 = vmatmul.mubr.f32.gmra.mrb[0].mxu0 %v3295
      %v3297 = vpop.f32.mrb[0].mxu0
      %v3298 = vadd.f32 %v3077, %v3297
      %v3299 = vpop.f32.mrb[0].mxu0
      %3300 = vmatprep.mubr.f32.mxu0 0.0
      %v3301 = vand.u32 %v2922, 4294901760
      %3302 = vmatmul.mubr.f32.gmra.mrb[0].mxu0 %v3301
      %v3303 = vpop.f32.mrb[0].mxu0
      %v3304 = vadd.f32 %v3087, %v3303
      %v3305 = vpop.f32.mrb[0].mxu0
      %3306 = vmatprep.mubr.f32.mxu0 0.0
      %v3307 = vand.u32 %v2925, 4294901760
      %3308 = vmatmul.mubr.f32.gmra.mrb[0].mxu0 %v3307
      %v3309 = vpop.f32.mrb[0].mxu0
      %v3310 = vadd.f32 %v3097, %v3309
      %v3311 = vpop.f32.mrb[0].mxu0
      %3312 = vmatprep.mubr.f32.mxu0 0.0
      %v3313 = vand.u32 %v2928, 4294901760
      %3314 = vmatmul.mubr.f32.gmra.mrb[0].mxu0 %v3313
      %v3315 = vpop.f32.mrb[0].mxu0
      %v3316 = vadd.f32 %v3107, %v3315
      %v3317 = vpop.f32.mrb[0].mxu0
      %3318 = vmatprep.mubr.f32.mxu0 0.0
      %v3319 = vand.u32 %v2931, 4294901760
      %3320 = vmatmul.mubr.f32.gmra.mrb[0].mxu0 %v3319
      %v3321 = vpop.f32.mrb[0].mxu0
      %v3322 = vadd.f32 %v3117, %v3321
      %v3323 = vpop.f32.mrb[0].mxu0
      %3324 = vmatprep.mubr.f32.mxu0 0.0
      %v3325 = vand.u32 %v2934, 4294901760
      %3326 = vmatmul.mubr.f32.gmra.mrb[0].mxu0 %v3325
      %v3327 = vpop.f32.mrb[0].mxu0
      %v3328 = vadd.f32 %v3127, %v3327
      %v3329 = vpop.f32.mrb[0].mxu0
      %3330 = vmatprep.mubr.f32.mxu0 0.0
      %v3331 = vand.u32 %v2937, 4294901760
      %3332 = vmatmul.mubr.f32.gmra.mrb[0].mxu0 %v3331
      %v3333 = vpop.f32.mrb[0].mxu0
      %v3334 = vadd.f32 %v3137, %v3333
      %v3335 = vpop.f32.mrb[0].mxu0
      %3336 = vmatprep.mubr.f32.mxu0 0.0
      %v3337 = vand.u32 %v2940, 4294901760
      %3338 = vmatmul.mubr.f32.gmra.mrb[0].mxu0 %v3337
      %v3339 = vpop.f32.mrb[0].mxu0
      %v3340 = vadd.f32 %v3147, %v3339
      %v3341 = vpop.f32.mrb[0].mxu0
      %3342 = vmatprep.mubr.f32.mxu0 0.0
      %v3343 = vand.u32 %v2943, 4294901760
      %3344 = vmatmul.mubr.f32.gmra.mrb[0].mxu0 %v3343
      %v3345 = vpop.f32.mrb[0].mxu0
      %v3346 = vadd.f32 %v3157, %v3345
      %v3347 = vpop.f32.mrb[0].mxu0
      %3348 = vmatprep.mubr.f32.mxu0 0.0
      %v3349 = vand.u32 %v2946, 4294901760
      %3350 = vmatmul.mubr.f32.gmra.mrb[0].mxu0 %v3349
      %v3351 = vpop.f32.mrb[0].mxu0
      %v3352 = vadd.f32 %v3167, %v3351
      %v3353 = vpop.f32.mrb[0].mxu0
      %3354 = vmatprep.mubr.f32.mxu0 0.0
      %v3355 = vand.u32 %v2949, 4294901760
      %3356 = vmatmul.mubr.f32.gmra.mrb[0].mxu0 %v3355
      %v3357 = vpop.f32.mrb[0].mxu0
      %v3358 = vadd.f32 %v3177, %v3357
      %v3359 = vpop.f32.mrb[0].mxu0
      %3360 = vdwg.mxu0
      %3361 = vmatprep.subr.mxu0 0.0
      %v3362 = vand.u32 %v249, 4294901760
      %v3363 = vsub.f32 %v249, %v3362
      %3364 = vmatpush1.msra.mxu0 %v3363
      %3365 = vmatprep.subr.mxu0 0.0
      %v3366 = vand.u32 %v250, 4294901760
      %v3367 = vsub.f32 %v250, %v3366
      %3368 = vmatpush1.msra.mxu0 %v3367
      %3369 = vmatprep.subr.mxu0 0.0
      %v3370 = vand.u32 %v251, 4294901760
      %v3371 = vsub.f32 %v251, %v3370
      %3372 = vmatpush1.msra.mxu0 %v3371
      %3373 = vmatprep.subr.mxu0 0.0
      %v3374 = vand.u32 %v252, 4294901760
      %v3375 = vsub.f32 %v252, %v3374
      %3376 = vmatpush1.msra.mxu0 %v3375
      %3377 = vmatprep.subr.mxu0 0.0
      %3378 = vmatpush1.msra.mxu0 0.0
      %3379 = vmatprep.subr.mxu0 0.0
      %3380 = vmatpush1.msra.mxu0 0.0
      %3381 = vmatprep.subr.mxu0 0.0
      %3382 = vmatpush1.msra.mxu0 0.0
      %3383 = vmatprep.subr.mxu0 0.0
      %3384 = vmatpush1.msra.mxu0 0.0
      %3385 = vmatprep.subr.mxu0 0.0
      %3386 = vmatpush1.msra.mxu0 0.0
      %3387 = vmatprep.subr.mxu0 0.0
      %3388 = vmatpush1.msra.mxu0 0.0
      %3389 = vmatprep.subr.mxu0 0.0
      %3390 = vmatpush1.msra.mxu0 0.0
      %3391 = vmatprep.subr.mxu0 0.0
      %3392 = vmatpush1.msra.mxu0 0.0
      %3393 = vmatprep.subr.mxu0 0.0
      %3394 = vmatpush1.msra.mxu0 0.0
      %3395 = vmatprep.subr.mxu0 0.0
      %3396 = vmatpush1.msra.mxu0 0.0
      %3397 = vmatprep.subr.mxu0 0.0
      %3398 = vmatpush1.msra.mxu0 0.0
      %3399 = vmatprep.subr.mxu0 0.0
      %3400 = vmatpush1.msra.mxu0 0.0
      %3401 = vmatprep.subr.mxu0 0.0
      %3402 = vmatpush1.msra.mxu0 0.0
      %3403 = vmatprep.subr.mxu0 0.0
      %3404 = vmatpush1.msra.mxu0 0.0
      %3405 = vmatprep.subr.mxu0 0.0
      %3406 = vmatpush1.msra.mxu0 0.0
      %3407 = vmatprep.subr.mxu0 0.0
      %3408 = vmatpush1.msra.mxu0 0.0
      %3409 = vmatprep.subr.mxu0 0.0
      %3410 = vmatpush1.msra.mxu0 0.0
      %3411 = vmatprep.subr.mxu0 0.0
      %3412 = vmatpush1.msra.mxu0 0.0
      %3413 = vmatprep.subr.mxu0 0.0
      %3414 = vmatpush1.msra.mxu0 0.0
      %3415 = vmatprep.subr.mxu0 0.0
      %3416 = vmatpush1.msra.mxu0 0.0
      %3417 = vmatprep.subr.mxu0 0.0
      %3418 = vmatpush1.msra.mxu0 0.0
      %3419 = vmatprep.subr.mxu0 0.0
      %3420 = vmatpush1.msra.mxu0 0.0
      %3421 = vmatprep.subr.mxu0 0.0
      %3422 = vmatpush1.msra.mxu0 0.0
      %3423 = vmatprep.subr.mxu0 0.0
      %3424 = vmatpush1.msra.mxu0 0.0
      %3425 = vmatprep.subr.mxu0 0.0
      %3426 = vmatpush1.msra.mxu0 0.0
      %3427 = vmatprep.subr.mxu0 0.0
      %3428 = vmatpush1.msra.mxu0 0.0
      %3429 = vmatprep.subr.mxu0 0.0
      %3430 = vmatpush1.msra.mxu0 0.0
      %3431 = vmatprep.subr.mxu0 0.0
      %3432 = vmatpush1.msra.mxu0 0.0
      %3433 = vmatprep.mubr.f32.mxu0 0.0
      %v3434 = vand.u32 %v2904, 4294901760
      %v3435 = vsub.f32 %v2904, %v3434
      %3436 = vmatmul.mubr.f32.gmra.mrb[0].mxu0 %v3435
      %v3437 = vpop.f32.mrb[0].mxu0
      %v3438 = vadd.f32 %v3268, %v3437
      %v3439 = vpop.f32.mrb[0].mxu0
      %3440 = vmatprep.mubr.f32.mxu0 0.0
      %v3441 = vand.u32 %v2907, 4294901760
      %v3442 = vsub.f32 %v2907, %v3441
      %3443 = vmatmul.mubr.f32.gmra.mrb[0].mxu0 %v3442
      %v3444 = vpop.f32.mrb[0].mxu0
      %v3445 = vadd.f32 %v3274, %v3444
      %v3446 = vpop.f32.mrb[0].mxu0
      %3447 = vmatprep.mubr.f32.mxu0 0.0
      %v3448 = vand.u32 %v2910, 4294901760
      %v3449 = vsub.f32 %v2910, %v3448
      %3450 = vmatmul.mubr.f32.gmra.mrb[0].mxu0 %v3449
      %v3451 = vpop.f32.mrb[0].mxu0
      %v3452 = vadd.f32 %v3280, %v3451
      %v3453 = vpop.f32.mrb[0].mxu0
      %3454 = vmatprep.mubr.f32.mxu0 0.0
      %v3455 = vand.u32 %v2913, 4294901760
      %v3456 = vsub.f32 %v2913, %v3455
      %3457 = vmatmul.mubr.f32.gmra.mrb[0].mxu0 %v3456
      %v3458 = vpop.f32.mrb[0].mxu0
      %v3459 = vadd.f32 %v3286, %v3458
      %v3460 = vpop.f32.mrb[0].mxu0
      %3461 = vmatprep.mubr.f32.mxu0 0.0
      %v3462 = vand.u32 %v2916, 4294901760
      %v3463 = vsub.f32 %v2916, %v3462
      %3464 = vmatmul.mubr.f32.gmra.mrb[0].mxu0 %v3463
      %v3465 = vpop.f32.mrb[0].mxu0
      %v3466 = vadd.f32 %v3292, %v3465
      %v3467 = vpop.f32.mrb[0].mxu0
      %3468 = vmatprep.mubr.f32.mxu0 0.0
      %v3469 = vand.u32 %v2919, 4294901760
      %v3470 = vsub.f32 %v2919, %v3469
      %3471 = vmatmul.mubr.f32.gmra.mrb[0].mxu0 %v3470
      %v3472 = vpop.f32.mrb[0].mxu0
      %v3473 = vadd.f32 %v3298, %v3472
      %v3474 = vpop.f32.mrb[0].mxu0
      %3475 = vmatprep.mubr.f32.mxu0 0.0
      %v3476 = vand.u32 %v2922, 4294901760
      %v3477 = vsub.f32 %v2922, %v3476
      %3478 = vmatmul.mubr.f32.gmra.mrb[0].mxu0 %v3477
      %v3479 = vpop.f32.mrb[0].mxu0
      %v3480 = vadd.f32 %v3304, %v3479
      %v3481 = vpop.f32.mrb[0].mxu0
      %3482 = vmatprep.mubr.f32.mxu0 0.0
      %v3483 = vand.u32 %v2925, 4294901760
      %v3484 = vsub.f32 %v2925, %v3483
      %3485 = vmatmul.mubr.f32.gmra.mrb[0].mxu0 %v3484
      %v3486 = vpop.f32.mrb[0].mxu0
      %v3487 = vadd.f32 %v3310, %v3486
      %v3488 = vpop.f32.mrb[0].mxu0
      %3489 = vmatprep.mubr.f32.mxu0 0.0
      %v3490 = vand.u32 %v2928, 4294901760
      %v3491 = vsub.f32 %v2928, %v3490
      %3492 = vmatmul.mubr.f32.gmra.mrb[0].mxu0 %v3491
      %v3493 = vpop.f32.mrb[0].mxu0
      %v3494 = vadd.f32 %v3316, %v3493
      %v3495 = vpop.f32.mrb[0].mxu0
      %3496 = vmatprep.mubr.f32.mxu0 0.0
      %v3497 = vand.u32 %v2931, 4294901760
      %v3498 = vsub.f32 %v2931, %v3497
      %3499 = vmatmul.mubr.f32.gmra.mrb[0].mxu0 %v3498
      %v3500 = vpop.f32.mrb[0].mxu0
      %v3501 = vadd.f32 %v3322, %v3500
      %v3502 = vpop.f32.mrb[0].mxu0
      %3503 = vmatprep.mubr.f32.mxu0 0.0
      %v3504 = vand.u32 %v2934, 4294901760
      %v3505 = vsub.f32 %v2934, %v3504
      %3506 = vmatmul.mubr.f32.gmra.mrb[0].mxu0 %v3505
      %v3507 = vpop.f32.mrb[0].mxu0
      %v3508 = vadd.f32 %v3328, %v3507
      %v3509 = vpop.f32.mrb[0].mxu0
      %3510 = vmatprep.mubr.f32.mxu0 0.0
      %v3511 = vand.u32 %v2937, 4294901760
      %v3512 = vsub.f32 %v2937, %v3511
      %3513 = vmatmul.mubr.f32.gmra.mrb[0].mxu0 %v3512
      %v3514 = vpop.f32.mrb[0].mxu0
      %v3515 = vadd.f32 %v3334, %v3514
      %v3516 = vpop.f32.mrb[0].mxu0
      %3517 = vmatprep.mubr.f32.mxu0 0.0
      %v3518 = vand.u32 %v2940, 4294901760
      %v3519 = vsub.f32 %v2940, %v3518
      %3520 = vmatmul.mubr.f32.gmra.mrb[0].mxu0 %v3519
      %v3521 = vpop.f32.mrb[0].mxu0
      %v3522 = vadd.f32 %v3340, %v3521
      %v3523 = vpop.f32.mrb[0].mxu0
      %3524 = vmatprep.mubr.f32.mxu0 0.0
      %v3525 = vand.u32 %v2943, 4294901760
      %v3526 = vsub.f32 %v2943, %v3525
      %3527 = vmatmul.mubr.f32.gmra.mrb[0].mxu0 %v3526
      %v3528 = vpop.f32.mrb[0].mxu0
      %v3529 = vadd.f32 %v3346, %v3528
      %v3530 = vpop.f32.mrb[0].mxu0
      %3531 = vmatprep.mubr.f32.mxu0 0.0
      %v3532 = vand.u32 %v2946, 4294901760
      %v3533 = vsub.f32 %v2946, %v3532
      %3534 = vmatmul.mubr.f32.gmra.mrb[0].mxu0 %v3533
      %v3535 = vpop.f32.mrb[0].mxu0
      %v3536 = vadd.f32 %v3352, %v3535
      %v3537 = vpop.f32.mrb[0].mxu0
      %3538 = vmatprep.mubr.f32.mxu0 0.0
      %v3539 = vand.u32 %v2949, 4294901760
      %v3540 = vsub.f32 %v2949, %v3539
      %3541 = vmatmul.mubr.f32.gmra.mrb[0].mxu0 %v3540
      %v3542 = vpop.f32.mrb[0].mxu0
      %v3543 = vadd.f32 %v3358, %v3542
      %v3544 = vpop.f32.mrb[0].mxu0
      %3545 = vdwg.mxu0
      %3546 = vmatprep.subr.mxu0 0.0
      %v3547 = vand.u32 %v249, 4294901760
      %3548 = vmatpush1.msra.mxu0 %v3547
      %3549 = vmatprep.subr.mxu0 0.0
      %v3550 = vand.u32 %v250, 4294901760
      %3551 = vmatpush1.msra.mxu0 %v3550
      %3552 = vmatprep.subr.mxu0 0.0
      %v3553 = vand.u32 %v251, 4294901760
      %3554 = vmatpush1.msra.mxu0 %v3553
      %3555 = vmatprep.subr.mxu0 0.0
      %v3556 = vand.u32 %v252, 4294901760
      %3557 = vmatpush1.msra.mxu0 %v3556
      %3558 = vmatprep.subr.mxu0 0.0
      %3559 = vmatpush1.msra.mxu0 0.0
      %3560 = vmatprep.subr.mxu0 0.0
      %3561 = vmatpush1.msra.mxu0 0.0
      %3562 = vmatprep.subr.mxu0 0.0
      %3563 = vmatpush1.msra.mxu0 0.0
      %3564 = vmatprep.subr.mxu0 0.0
      %3565 = vmatpush1.msra.mxu0 0.0
      %3566 = vmatprep.subr.mxu0 0.0
      %3567 = vmatpush1.msra.mxu0 0.0
      %3568 = vmatprep.subr.mxu0 0.0
      %3569 = vmatpush1.msra.mxu0 0.0
      %3570 = vmatprep.subr.mxu0 0.0
      %3571 = vmatpush1.msra.mxu0 0.0
      %3572 = vmatprep.subr.mxu0 0.0
      %3573 = vmatpush1.msra.mxu0 0.0
      %3574 = vmatprep.subr.mxu0 0.0
      %3575 = vmatpush1.msra.mxu0 0.0
      %3576 = vmatprep.subr.mxu0 0.0
      %3577 = vmatpush1.msra.mxu0 0.0
      %3578 = vmatprep.subr.mxu0 0.0
      %3579 = vmatpush1.msra.mxu0 0.0
      %3580 = vmatprep.subr.mxu0 0.0
      %3581 = vmatpush1.msra.mxu0 0.0
      %3582 = vmatprep.subr.mxu0 0.0
      %3583 = vmatpush1.msra.mxu0 0.0
      %3584 = vmatprep.subr.mxu0 0.0
      %3585 = vmatpush1.msra.mxu0 0.0
      %3586 = vmatprep.subr.mxu0 0.0
      %3587 = vmatpush1.msra.mxu0 0.0
      %3588 = vmatprep.subr.mxu0 0.0
      %3589 = vmatpush1.msra.mxu0 0.0
      %3590 = vmatprep.subr.mxu0 0.0
      %3591 = vmatpush1.msra.mxu0 0.0
      %3592 = vmatprep.subr.mxu0 0.0
      %3593 = vmatpush1.msra.mxu0 0.0
      %3594 = vmatprep.subr.mxu0 0.0
      %3595 = vmatpush1.msra.mxu0 0.0
      %3596 = vmatprep.subr.mxu0 0.0
      %3597 = vmatpush1.msra.mxu0 0.0
      %3598 = vmatprep.subr.mxu0 0.0
      %3599 = vmatpush1.msra.mxu0 0.0
      %3600 = vmatprep.subr.mxu0 0.0
      %3601 = vmatpush1.msra.mxu0 0.0
      %3602 = vmatprep.subr.mxu0 0.0
      %3603 = vmatpush1.msra.mxu0 0.0
      %3604 = vmatprep.subr.mxu0 0.0
      %3605 = vmatpush1.msra.mxu0 0.0
      %3606 = vmatprep.subr.mxu0 0.0
      %3607 = vmatpush1.msra.mxu0 0.0
      %3608 = vmatprep.subr.mxu0 0.0
      %3609 = vmatpush1.msra.mxu0 0.0
      %3610 = vmatprep.subr.mxu0 0.0
      %3611 = vmatpush1.msra.mxu0 0.0
      %3612 = vmatprep.subr.mxu0 0.0
      %3613 = vmatpush1.msra.mxu0 0.0
      %3614 = vmatprep.mubr.f32.mxu0 0.0
      %v3615 = vand.u32 %v2904, 4294901760
      %v3616 = vsub.f32 %v2904, %v3615
      %v3617 = vand.u32 %v3616, 4294901760
      %3618 = vmatmul.mubr.f32.gmra.mrb[0].mxu0 %v3617
      %v3619 = vpop.f32.mrb[0].mxu0
      %v3620 = vadd.f32 %v3438, %v3619
      %v3621 = vpop.f32.mrb[0].mxu0
      %3622 = vmatprep.mubr.f32.mxu0 0.0
      %v3623 = vand.u32 %v2907, 4294901760
      %v3624 = vsub.f32 %v2907, %v3623
      %v3625 = vand.u32 %v3624, 4294901760
      %3626 = vmatmul.mubr.f32.gmra.mrb[0].mxu0 %v3625
      %v3627 = vpop.f32.mrb[0].mxu0
      %v3628 = vadd.f32 %v3445, %v3627
      %v3629 = vpop.f32.mrb[0].mxu0
      %3630 = vmatprep.mubr.f32.mxu0 0.0
      %v3631 = vand.u32 %v2910, 4294901760
      %v3632 = vsub.f32 %v2910, %v3631
      %v3633 = vand.u32 %v3632, 4294901760
      %3634 = vmatmul.mubr.f32.gmra.mrb[0].mxu0 %v3633
      %v3635 = vpop.f32.mrb[0].mxu0
      %v3636 = vadd.f32 %v3452, %v3635
      %v3637 = vpop.f32.mrb[0].mxu0
      %3638 = vmatprep.mubr.f32.mxu0 0.0
      %v3639 = vand.u32 %v2913, 4294901760
      %v3640 = vsub.f32 %v2913, %v3639
      %v3641 = vand.u32 %v3640, 4294901760
      %3642 = vmatmul.mubr.f32.gmra.mrb[0].mxu0 %v3641
      %v3643 = vpop.f32.mrb[0].mxu0
      %v3644 = vadd.f32 %v3459, %v3643
      %v3645 = vpop.f32.mrb[0].mxu0
      %3646 = vmatprep.mubr.f32.mxu0 0.0
      %v3647 = vand.u32 %v2916, 4294901760
      %v3648 = vsub.f32 %v2916, %v3647
      %v3649 = vand.u32 %v3648, 4294901760
      %3650 = vmatmul.mubr.f32.gmra.mrb[0].mxu0 %v3649
      %v3651 = vpop.f32.mrb[0].mxu0
      %v3652 = vadd.f32 %v3466, %v3651
      %v3653 = vpop.f32.mrb[0].mxu0
      %3654 = vmatprep.mubr.f32.mxu0 0.0
      %v3655 = vand.u32 %v2919, 4294901760
      %v3656 = vsub.f32 %v2919, %v3655
      %v3657 = vand.u32 %v3656, 4294901760
      %3658 = vmatmul.mubr.f32.gmra.mrb[0].mxu0 %v3657
      %v3659 = vpop.f32.mrb[0].mxu0
      %v3660 = vadd.f32 %v3473, %v3659
      %v3661 = vpop.f32.mrb[0].mxu0
      %3662 = vmatprep.mubr.f32.mxu0 0.0
      %v3663 = vand.u32 %v2922, 4294901760
      %v3664 = vsub.f32 %v2922, %v3663
      %v3665 = vand.u32 %v3664, 4294901760
      %3666 = vmatmul.mubr.f32.gmra.mrb[0].mxu0 %v3665
      %v3667 = vpop.f32.mrb[0].mxu0
      %v3668 = vadd.f32 %v3480, %v3667
      %v3669 = vpop.f32.mrb[0].mxu0
      %3670 = vmatprep.mubr.f32.mxu0 0.0
      %v3671 = vand.u32 %v2925, 4294901760
      %v3672 = vsub.f32 %v2925, %v3671
      %v3673 = vand.u32 %v3672, 4294901760
      %3674 = vmatmul.mubr.f32.gmra.mrb[0].mxu0 %v3673
      %v3675 = vpop.f32.mrb[0].mxu0
      %v3676 = vadd.f32 %v3487, %v3675
      %v3677 = vpop.f32.mrb[0].mxu0
      %3678 = vmatprep.mubr.f32.mxu0 0.0
      %v3679 = vand.u32 %v2928, 4294901760
      %v3680 = vsub.f32 %v2928, %v3679
      %v3681 = vand.u32 %v3680, 4294901760
      %3682 = vmatmul.mubr.f32.gmra.mrb[0].mxu0 %v3681
      %v3683 = vpop.f32.mrb[0].mxu0
      %v3684 = vadd.f32 %v3494, %v3683
      %v3685 = vpop.f32.mrb[0].mxu0
      %3686 = vmatprep.mubr.f32.mxu0 0.0
      %v3687 = vand.u32 %v2931, 4294901760
      %v3688 = vsub.f32 %v2931, %v3687
      %v3689 = vand.u32 %v3688, 4294901760
      %3690 = vmatmul.mubr.f32.gmra.mrb[0].mxu0 %v3689
      %v3691 = vpop.f32.mrb[0].mxu0
      %v3692 = vadd.f32 %v3501, %v3691
      %v3693 = vpop.f32.mrb[0].mxu0
      %3694 = vmatprep.mubr.f32.mxu0 0.0
      %v3695 = vand.u32 %v2934, 4294901760
      %v3696 = vsub.f32 %v2934, %v3695
      %v3697 = vand.u32 %v3696, 4294901760
      %3698 = vmatmul.mubr.f32.gmra.mrb[0].mxu0 %v3697
      %v3699 = vpop.f32.mrb[0].mxu0
      %v3700 = vadd.f32 %v3508, %v3699
      %v3701 = vpop.f32.mrb[0].mxu0
      %3702 = vmatprep.mubr.f32.mxu0 0.0
      %v3703 = vand.u32 %v2937, 4294901760
      %v3704 = vsub.f32 %v2937, %v3703
      %v3705 = vand.u32 %v3704, 4294901760
      %3706 = vmatmul.mubr.f32.gmra.mrb[0].mxu0 %v3705
      %v3707 = vpop.f32.mrb[0].mxu0
      %v3708 = vadd.f32 %v3515, %v3707
      %v3709 = vpop.f32.mrb[0].mxu0
      %3710 = vmatprep.mubr.f32.mxu0 0.0
      %v3711 = vand.u32 %v2940, 4294901760
      %v3712 = vsub.f32 %v2940, %v3711
      %v3713 = vand.u32 %v3712, 4294901760
      %3714 = vmatmul.mubr.f32.gmra.mrb[0].mxu0 %v3713
      %v3715 = vpop.f32.mrb[0].mxu0
      %v3716 = vadd.f32 %v3522, %v3715
      %v3717 = vpop.f32.mrb[0].mxu0
      %3718 = vmatprep.mubr.f32.mxu0 0.0
      %v3719 = vand.u32 %v2943, 4294901760
      %v3720 = vsub.f32 %v2943, %v3719
      %v3721 = vand.u32 %v3720, 4294901760
      %3722 = vmatmul.mubr.f32.gmra.mrb[0].mxu0 %v3721
      %v3723 = vpop.f32.mrb[0].mxu0
      %v3724 = vadd.f32 %v3529, %v3723
      %v3725 = vpop.f32.mrb[0].mxu0
      %3726 = vmatprep.mubr.f32.mxu0 0.0
      %v3727 = vand.u32 %v2946, 4294901760
      %v3728 = vsub.f32 %v2946, %v3727
      %v3729 = vand.u32 %v3728, 4294901760
      %3730 = vmatmul.mubr.f32.gmra.mrb[0].mxu0 %v3729
      %v3731 = vpop.f32.mrb[0].mxu0
      %v3732 = vadd.f32 %v3536, %v3731
      %v3733 = vpop.f32.mrb[0].mxu0
      %3734 = vmatprep.mubr.f32.mxu0 0.0
      %v3735 = vand.u32 %v2949, 4294901760
      %v3736 = vsub.f32 %v2949, %v3735
      %v3737 = vand.u32 %v3736, 4294901760
      %3738 = vmatmul.mubr.f32.gmra.mrb[0].mxu0 %v3737
      %v3739 = vpop.f32.mrb[0].mxu0
      %v3740 = vadd.f32 %v3543, %v3739
      %v3741 = vpop.f32.mrb[0].mxu0
      %3742 = vdwg.mxu0
      %3743 = vmatprep.subr.mxu0 0.0
      %v3744 = vand.u32 %v249, 4294901760
      %v3745 = vsub.f32 %v249, %v3744
      %v3746 = vand.u32 %v3745, 4294901760
      %3747 = vmatpush1.msra.mxu0 %v3746
      %3748 = vmatprep.subr.mxu0 0.0
      %v3749 = vand.u32 %v250, 4294901760
      %v3750 = vsub.f32 %v250, %v3749
      %v3751 = vand.u32 %v3750, 4294901760
      %3752 = vmatpush1.msra.mxu0 %v3751
      %3753 = vmatprep.subr.mxu0 0.0
      %v3754 = vand.u32 %v251, 4294901760
      %v3755 = vsub.f32 %v251, %v3754
      %v3756 = vand.u32 %v3755, 4294901760
      %3757 = vmatpush1.msra.mxu0 %v3756
      %3758 = vmatprep.subr.mxu0 0.0
      %v3759 = vand.u32 %v252, 4294901760
      %v3760 = vsub.f32 %v252, %v3759
      %v3761 = vand.u32 %v3760, 4294901760
      %3762 = vmatpush1.msra.mxu0 %v3761
      %3763 = vmatprep.subr.mxu0 0.0
      %3764 = vmatpush1.msra.mxu0 0.0
      %3765 = vmatprep.subr.mxu0 0.0
      %3766 = vmatpush1.msra.mxu0 0.0
      %3767 = vmatprep.subr.mxu0 0.0
      %3768 = vmatpush1.msra.mxu0 0.0
      %3769 = vmatprep.subr.mxu0 0.0
      %3770 = vmatpush1.msra.mxu0 0.0
      %3771 = vmatprep.subr.mxu0 0.0
      %3772 = vmatpush1.msra.mxu0 0.0
      %3773 = vmatprep.subr.mxu0 0.0
      %3774 = vmatpush1.msra.mxu0 0.0
      %3775 = vmatprep.subr.mxu0 0.0
      %3776 = vmatpush1.msra.mxu0 0.0
      %3777 = vmatprep.subr.mxu0 0.0
      %3778 = vmatpush1.msra.mxu0 0.0
      %3779 = vmatprep.subr.mxu0 0.0
      %3780 = vmatpush1.msra.mxu0 0.0
      %3781 = vmatprep.subr.mxu0 0.0
      %3782 = vmatpush1.msra.mxu0 0.0
      %3783 = vmatprep.subr.mxu0 0.0
      %3784 = vmatpush1.msra.mxu0 0.0
      %3785 = vmatprep.subr.mxu0 0.0
      %3786 = vmatpush1.msra.mxu0 0.0
      %3787 = vmatprep.subr.mxu0 0.0
      %3788 = vmatpush1.msra.mxu0 0.0
      %3789 = vmatprep.subr.mxu0 0.0
      %3790 = vmatpush1.msra.mxu0 0.0
      %3791 = vmatprep.subr.mxu0 0.0
      %3792 = vmatpush1.msra.mxu0 0.0
      %3793 = vmatprep.subr.mxu0 0.0
      %3794 = vmatpush1.msra.mxu0 0.0
      %3795 = vmatprep.subr.mxu0 0.0
      %3796 = vmatpush1.msra.mxu0 0.0
      %3797 = vmatprep.subr.mxu0 0.0
      %3798 = vmatpush1.msra.mxu0 0.0
      %3799 = vmatprep.subr.mxu0 0.0
      %3800 = vmatpush1.msra.mxu0 0.0
      %3801 = vmatprep.subr.mxu0 0.0
      %3802 = vmatpush1.msra.mxu0 0.0
      %3803 = vmatprep.subr.mxu0 0.0
      %3804 = vmatpush1.msra.mxu0 0.0
      %3805 = vmatprep.subr.mxu0 0.0
      %3806 = vmatpush1.msra.mxu0 0.0
      %3807 = vmatprep.subr.mxu0 0.0
      %3808 = vmatpush1.msra.mxu0 0.0
      %3809 = vmatprep.subr.mxu0 0.0
      %3810 = vmatpush1.msra.mxu0 0.0
      %3811 = vmatprep.subr.mxu0 0.0
      %3812 = vmatpush1.msra.mxu0 0.0
      %3813 = vmatprep.subr.mxu0 0.0
      %3814 = vmatpush1.msra.mxu0 0.0
      %3815 = vmatprep.subr.mxu0 0.0
      %3816 = vmatpush1.msra.mxu0 0.0
      %3817 = vmatprep.subr.mxu0 0.0
      %3818 = vmatpush1.msra.mxu0 0.0
      %3819 = vmatprep.mubr.f32.mxu0 0.0
      %v3820 = vand.u32 %v2904, 4294901760
      %3821 = vmatmul.mubr.f32.gmra.mrb[0].mxu0 %v3820
      %v3822 = vpop.f32.mrb[0].mxu0
      %v3823 = vadd.f32 %v3620, %v3822
      %v3824 = vpop.f32.mrb[0].mxu0
      %3825 = vmatprep.mubr.f32.mxu0 0.0
      %v3826 = vand.u32 %v2907, 4294901760
      %3827 = vmatmul.mubr.f32.gmra.mrb[0].mxu0 %v3826
      %v3828 = vpop.f32.mrb[0].mxu0
      %v3829 = vadd.f32 %v3628, %v3828
      %v3830 = vpop.f32.mrb[0].mxu0
      %3831 = vmatprep.mubr.f32.mxu0 0.0
      %v3832 = vand.u32 %v2910, 4294901760
      %3833 = vmatmul.mubr.f32.gmra.mrb[0].mxu0 %v3832
      %v3834 = vpop.f32.mrb[0].mxu0
      %v3835 = vadd.f32 %v3636, %v3834
      %v3836 = vpop.f32.mrb[0].mxu0
      %3837 = vmatprep.mubr.f32.mxu0 0.0
      %v3838 = vand.u32 %v2913, 4294901760
      %3839 = vmatmul.mubr.f32.gmra.mrb[0].mxu0 %v3838
      %v3840 = vpop.f32.mrb[0].mxu0
      %v3841 = vadd.f32 %v3644, %v3840
      %v3842 = vpop.f32.mrb[0].mxu0
      %3843 = vmatprep.mubr.f32.mxu0 0.0
      %v3844 = vand.u32 %v2916, 4294901760
      %3845 = vmatmul.mubr.f32.gmra.mrb[0].mxu0 %v3844
      %v3846 = vpop.f32.mrb[0].mxu0
      %v3847 = vadd.f32 %v3652, %v3846
      %v3848 = vpop.f32.mrb[0].mxu0
      %3849 = vmatprep.mubr.f32.mxu0 0.0
      %v3850 = vand.u32 %v2919, 4294901760
      %3851 = vmatmul.mubr.f32.gmra.mrb[0].mxu0 %v3850
      %v3852 = vpop.f32.mrb[0].mxu0
      %v3853 = vadd.f32 %v3660, %v3852
      %v3854 = vpop.f32.mrb[0].mxu0
      %3855 = vmatprep.mubr.f32.mxu0 0.0
      %v3856 = vand.u32 %v2922, 4294901760
      %3857 = vmatmul.mubr.f32.gmra.mrb[0].mxu0 %v3856
      %v3858 = vpop.f32.mrb[0].mxu0
      %v3859 = vadd.f32 %v3668, %v3858
      %v3860 = vpop.f32.mrb[0].mxu0
      %3861 = vmatprep.mubr.f32.mxu0 0.0
      %v3862 = vand.u32 %v2925, 4294901760
      %3863 = vmatmul.mubr.f32.gmra.mrb[0].mxu0 %v3862
      %v3864 = vpop.f32.mrb[0].mxu0
      %v3865 = vadd.f32 %v3676, %v3864
      %v3866 = vpop.f32.mrb[0].mxu0
      %3867 = vmatprep.mubr.f32.mxu0 0.0
      %v3868 = vand.u32 %v2928, 4294901760
      %3869 = vmatmul.mubr.f32.gmra.mrb[0].mxu0 %v3868
      %v3870 = vpop.f32.mrb[0].mxu0
      %v3871 = vadd.f32 %v3684, %v3870
      %v3872 = vpop.f32.mrb[0].mxu0
      %3873 = vmatprep.mubr.f32.mxu0 0.0
      %v3874 = vand.u32 %v2931, 4294901760
      %3875 = vmatmul.mubr.f32.gmra.mrb[0].mxu0 %v3874
      %v3876 = vpop.f32.mrb[0].mxu0
      %v3877 = vadd.f32 %v3692, %v3876
      %v3878 = vpop.f32.mrb[0].mxu0
      %3879 = vmatprep.mubr.f32.mxu0 0.0
      %v3880 = vand.u32 %v2934, 4294901760
      %3881 = vmatmul.mubr.f32.gmra.mrb[0].mxu0 %v3880
      %v3882 = vpop.f32.mrb[0].mxu0
      %v3883 = vadd.f32 %v3700, %v3882
      %v3884 = vpop.f32.mrb[0].mxu0
      %3885 = vmatprep.mubr.f32.mxu0 0.0
      %v3886 = vand.u32 %v2937, 4294901760
      %3887 = vmatmul.mubr.f32.gmra.mrb[0].mxu0 %v3886
      %v3888 = vpop.f32.mrb[0].mxu0
      %v3889 = vadd.f32 %v3708, %v3888
      %v3890 = vpop.f32.mrb[0].mxu0
      %3891 = vmatprep.mubr.f32.mxu0 0.0
      %v3892 = vand.u32 %v2940, 4294901760
      %3893 = vmatmul.mubr.f32.gmra.mrb[0].mxu0 %v3892
      %v3894 = vpop.f32.mrb[0].mxu0
      %v3895 = vadd.f32 %v3716, %v3894
      %v3896 = vpop.f32.mrb[0].mxu0
      %3897 = vmatprep.mubr.f32.mxu0 0.0
      %v3898 = vand.u32 %v2943, 4294901760
      %3899 = vmatmul.mubr.f32.gmra.mrb[0].mxu0 %v3898
      %v3900 = vpop.f32.mrb[0].mxu0
      %v3901 = vadd.f32 %v3724, %v3900
      %v3902 = vpop.f32.mrb[0].mxu0
      %3903 = vmatprep.mubr.f32.mxu0 0.0
      %v3904 = vand.u32 %v2946, 4294901760
      %3905 = vmatmul.mubr.f32.gmra.mrb[0].mxu0 %v3904
      %v3906 = vpop.f32.mrb[0].mxu0
      %v3907 = vadd.f32 %v3732, %v3906
      %v3908 = vpop.f32.mrb[0].mxu0
      %3909 = vmatprep.mubr.f32.mxu0 0.0
      %v3910 = vand.u32 %v2949, 4294901760
      %3911 = vmatmul.mubr.f32.gmra.mrb[0].mxu0 %v3910
      %v3912 = vpop.f32.mrb[0].mxu0
      %v3913 = vadd.f32 %v3740, %v3912
      %v3914 = vpop.f32.mrb[0].mxu0
      %3915 = vdwg.mxu0
      %3916 = vmatprep.subr.mxu0 0.0
      %v3917 = vand.u32 %v249, 4294901760
      %3918 = vmatpush1.msra.mxu0 %v3917
      %3919 = vmatprep.subr.mxu0 0.0
      %v3920 = vand.u32 %v250, 4294901760
      %3921 = vmatpush1.msra.mxu0 %v3920
      %3922 = vmatprep.subr.mxu0 0.0
      %v3923 = vand.u32 %v251, 4294901760
      %3924 = vmatpush1.msra.mxu0 %v3923
      %3925 = vmatprep.subr.mxu0 0.0
      %v3926 = vand.u32 %v252, 4294901760
      %3927 = vmatpush1.msra.mxu0 %v3926
      %3928 = vmatprep.subr.mxu0 0.0
      %3929 = vmatpush1.msra.mxu0 0.0
      %3930 = vmatprep.subr.mxu0 0.0
      %3931 = vmatpush1.msra.mxu0 0.0
      %3932 = vmatprep.subr.mxu0 0.0
      %3933 = vmatpush1.msra.mxu0 0.0
      %3934 = vmatprep.subr.mxu0 0.0
      %3935 = vmatpush1.msra.mxu0 0.0
      %3936 = vmatprep.subr.mxu0 0.0
      %3937 = vmatpush1.msra.mxu0 0.0
      %3938 = vmatprep.subr.mxu0 0.0
      %3939 = vmatpush1.msra.mxu0 0.0
      %3940 = vmatprep.subr.mxu0 0.0
      %3941 = vmatpush1.msra.mxu0 0.0
      %3942 = vmatprep.subr.mxu0 0.0
      %3943 = vmatpush1.msra.mxu0 0.0
      %3944 = vmatprep.subr.mxu0 0.0
      %3945 = vmatpush1.msra.mxu0 0.0
      %3946 = vmatprep.subr.mxu0 0.0
      %3947 = vmatpush1.msra.mxu0 0.0
      %3948 = vmatprep.subr.mxu0 0.0
      %3949 = vmatpush1.msra.mxu0 0.0
      %3950 = vmatprep.subr.mxu0 0.0
      %3951 = vmatpush1.msra.mxu0 0.0
      %3952 = vmatprep.subr.mxu0 0.0
      %3953 = vmatpush1.msra.mxu0 0.0
      %3954 = vmatprep.subr.mxu0 0.0
      %3955 = vmatpush1.msra.mxu0 0.0
      %3956 = vmatprep.subr.mxu0 0.0
      %3957 = vmatpush1.msra.mxu0 0.0
      %3958 = vmatprep.subr.mxu0 0.0
      %3959 = vmatpush1.msra.mxu0 0.0
      %3960 = vmatprep.subr.mxu0 0.0
      %3961 = vmatpush1.msra.mxu0 0.0
      %3962 = vmatprep.subr.mxu0 0.0
      %3963 = vmatpush1.msra.mxu0 0.0
      %3964 = vmatprep.subr.mxu0 0.0
      %3965 = vmatpush1.msra.mxu0 0.0
      %3966 = vmatprep.subr.mxu0 0.0
      %3967 = vmatpush1.msra.mxu0 0.0
      %3968 = vmatprep.subr.mxu0 0.0
      %3969 = vmatpush1.msra.mxu0 0.0
      %3970 = vmatprep.subr.mxu0 0.0
      %3971 = vmatpush1.msra.mxu0 0.0
      %3972 = vmatprep.subr.mxu0 0.0
      %3973 = vmatpush1.msra.mxu0 0.0
      %3974 = vmatprep.subr.mxu0 0.0
      %3975 = vmatpush1.msra.mxu0 0.0
      %3976 = vmatprep.subr.mxu0 0.0
      %3977 = vmatpush1.msra.mxu0 0.0
      %3978 = vmatprep.subr.mxu0 0.0
      %3979 = vmatpush1.msra.mxu0 0.0
      %3980 = vmatprep.subr.mxu0 0.0
      %3981 = vmatpush1.msra.mxu0 0.0
      %3982 = vmatprep.subr.mxu0 0.0
      %3983 = vmatpush1.msra.mxu0 0.0
      %3984 = vmatprep.mubr.f32.mxu0 0.0
      %v3985 = vand.u32 %v2904, 4294901760
      %3986 = vmatmul.mubr.f32.gmra.mrb[0].mxu0 %v3985
      %v3987 = vpop.f32.mrb[0].mxu0
      %v3988 = vadd.f32 %v3823, %v3987
      %v3989 = vpop.f32.mrb[0].mxu0
      %3990 = vmatprep.mubr.f32.mxu0 0.0
      %v3991 = vand.u32 %v2907, 4294901760
      %3992 = vmatmul.mubr.f32.gmra.mrb[0].mxu0 %v3991
      %v3993 = vpop.f32.mrb[0].mxu0
      %v3994 = vadd.f32 %v3829, %v3993
      %v3995 = vpop.f32.mrb[0].mxu0
      %3996 = vmatprep.mubr.f32.mxu0 0.0
      %v3997 = vand.u32 %v2910, 4294901760
      %3998 = vmatmul.mubr.f32.gmra.mrb[0].mxu0 %v3997
      %v3999 = vpop.f32.mrb[0].mxu0
      %v4000 = vadd.f32 %v3835, %v3999
      %v4001 = vpop.f32.mrb[0].mxu0
      %4002 = vmatprep.mubr.f32.mxu0 0.0
      %v4003 = vand.u32 %v2913, 4294901760
      %4004 = vmatmul.mubr.f32.gmra.mrb[0].mxu0 %v4003
      %v4005 = vpop.f32.mrb[0].mxu0
      %v4006 = vadd.f32 %v3841, %v4005
      %v4007 = vpop.f32.mrb[0].mxu0
      %4008 = vmatprep.mubr.f32.mxu0 0.0
      %v4009 = vand.u32 %v2916, 4294901760
      %4010 = vmatmul.mubr.f32.gmra.mrb[0].mxu0 %v4009
      %v4011 = vpop.f32.mrb[0].mxu0
      %v4012 = vadd.f32 %v3847, %v4011
      %v4013 = vpop.f32.mrb[0].mxu0
      %4014 = vmatprep.mubr.f32.mxu0 0.0
      %v4015 = vand.u32 %v2919, 4294901760
      %4016 = vmatmul.mubr.f32.gmra.mrb[0].mxu0 %v4015
      %v4017 = vpop.f32.mrb[0].mxu0
      %v4018 = vadd.f32 %v3853, %v4017
      %v4019 = vpop.f32.mrb[0].mxu0
      %4020 = vmatprep.mubr.f32.mxu0 0.0
      %v4021 = vand.u32 %v2922, 4294901760
      %4022 = vmatmul.mubr.f32.gmra.mrb[0].mxu0 %v4021
      %v4023 = vpop.f32.mrb[0].mxu0
      %v4024 = vadd.f32 %v3859, %v4023
      %v4025 = vpop.f32.mrb[0].mxu0
      %4026 = vmatprep.mubr.f32.mxu0 0.0
      %v4027 = vand.u32 %v2925, 4294901760
      %4028 = vmatmul.mubr.f32.gmra.mrb[0].mxu0 %v4027
      %v4029 = vpop.f32.mrb[0].mxu0
      %v4030 = vadd.f32 %v3865, %v4029
      %v4031 = vpop.f32.mrb[0].mxu0
      %4032 = vmatprep.mubr.f32.mxu0 0.0
      %v4033 = vand.u32 %v2928, 4294901760
      %4034 = vmatmul.mubr.f32.gmra.mrb[0].mxu0 %v4033
      %v4035 = vpop.f32.mrb[0].mxu0
      %v4036 = vadd.f32 %v3871, %v4035
      %v4037 = vpop.f32.mrb[0].mxu0
      %4038 = vmatprep.mubr.f32.mxu0 0.0
      %v4039 = vand.u32 %v2931, 4294901760
      %4040 = vmatmul.mubr.f32.gmra.mrb[0].mxu0 %v4039
      %v4041 = vpop.f32.mrb[0].mxu0
      %v4042 = vadd.f32 %v3877, %v4041
      %v4043 = vpop.f32.mrb[0].mxu0
      %4044 = vmatprep.mubr.f32.mxu0 0.0
      %v4045 = vand.u32 %v2934, 4294901760
      %4046 = vmatmul.mubr.f32.gmra.mrb[0].mxu0 %v4045
      %v4047 = vpop.f32.mrb[0].mxu0
      %v4048 = vadd.f32 %v3883, %v4047
      %v4049 = vpop.f32.mrb[0].mxu0
      %4050 = vmatprep.mubr.f32.mxu0 0.0
      %v4051 = vand.u32 %v2937, 4294901760
      %4052 = vmatmul.mubr.f32.gmra.mrb[0].mxu0 %v4051
      %v4053 = vpop.f32.mrb[0].mxu0
      %v4054 = vadd.f32 %v3889, %v4053
      %v4055 = vpop.f32.mrb[0].mxu0
      %4056 = vmatprep.mubr.f32.mxu0 0.0
      %v4057 = vand.u32 %v2940, 4294901760
      %4058 = vmatmul.mubr.f32.gmra.mrb[0].mxu0 %v4057
      %v4059 = vpop.f32.mrb[0].mxu0
      %v4060 = vadd.f32 %v3895, %v4059
      %v4061 = vpop.f32.mrb[0].mxu0
      %4062 = vmatprep.mubr.f32.mxu0 0.0
      %v4063 = vand.u32 %v2943, 4294901760
      %4064 = vmatmul.mubr.f32.gmra.mrb[0].mxu0 %v4063
      %v4065 = vpop.f32.mrb[0].mxu0
      %v4066 = vadd.f32 %v3901, %v4065
      %v4067 = vpop.f32.mrb[0].mxu0
      %4068 = vmatprep.mubr.f32.mxu0 0.0
      %v4069 = vand.u32 %v2946, 4294901760
      %4070 = vmatmul.mubr.f32.gmra.mrb[0].mxu0 %v4069
      %v4071 = vpop.f32.mrb[0].mxu0
      %v4072 = vadd.f32 %v3907, %v4071
      %v4073 = vpop.f32.mrb[0].mxu0
      %4074 = vmatprep.mubr.f32.mxu0 0.0
      %v4075 = vand.u32 %v2949, 4294901760
      %4076 = vmatmul.mubr.f32.gmra.mrb[0].mxu0 %v4075
      %v4077 = vpop.f32.mrb[0].mxu0
      %v4078 = vadd.f32 %v3913, %v4077
      %v4079 = vpop.f32.mrb[0].mxu0
      %4080 = vdwg.mxu0
      %v4081 = vmax.f32 %v3988, 0.0
      %v4082 = vmax.f32 %v3994, 0.0
      %v4083 = vmax.f32 %v4000, 0.0
      %v4084 = vmax.f32 %v4006, 0.0
      %v4085 = vmax.f32 %v4012, 0.0
      %v4086 = vmax.f32 %v4018, 0.0
      %v4087 = vmax.f32 %v4024, 0.0
      %v4088 = vmax.f32 %v4030, 0.0
      %v4089 = vmax.f32 %v4036, 0.0
      %v4090 = vmax.f32 %v4042, 0.0
      %v4091 = vmax.f32 %v4048, 0.0
      %v4092 = vmax.f32 %v4054, 0.0
      %v4093 = vmax.f32 %v4060, 0.0
      %v4094 = vmax.f32 %v4066, 0.0
      %v4095 = vmax.f32 %v4072, 0.0
      %v4096 = vmax.f32 %v4078, 0.0
      %v4098 = vlaneseq
      %v4099 = vshrl.u32 %v4098, 7
      %v4100 = vsub.s32 0, %v4099
      %v4101 = vrot.slane %v291, %v4100
      %4103 = vmatprep.subr.mxu0 0.0
      %v4104 = vand.u32 %v270, 4294901760
      %4105 = vmatpush1.msra.mxu0 %v4104
      %4106 = vmatprep.subr.mxu0 0.0
      %v4107 = vand.u32 %v271, 4294901760
      %4108 = vmatpush1.msra.mxu0 %v4107
      %4109 = vmatprep.subr.mxu0 0.0
      %v4110 = vand.u32 %v272, 4294901760
      %4111 = vmatpush1.msra.mxu0 %v4110
      %4112 = vmatprep.subr.mxu0 0.0
      %v4113 = vand.u32 %v273, 4294901760
      %4114 = vmatpush1.msra.mxu0 %v4113
      %4115 = vmatprep.subr.mxu0 0.0
      %v4116 = vand.u32 %v274, 4294901760
      %4117 = vmatpush1.msra.mxu0 %v4116
      %4118 = vmatprep.subr.mxu0 0.0
      %v4119 = vand.u32 %v275, 4294901760
      %4120 = vmatpush1.msra.mxu0 %v4119
      %4121 = vmatprep.subr.mxu0 0.0
      %v4122 = vand.u32 %v276, 4294901760
      %4123 = vmatpush1.msra.mxu0 %v4122
      %4124 = vmatprep.subr.mxu0 0.0
      %v4125 = vand.u32 %v277, 4294901760
      %4126 = vmatpush1.msra.mxu0 %v4125
      %4127 = vmatprep.subr.mxu0 0.0
      %v4128 = vand.u32 %v278, 4294901760
      %4129 = vmatpush1.msra.mxu0 %v4128
      %4130 = vmatprep.subr.mxu0 0.0
      %v4131 = vand.u32 %v279, 4294901760
      %4132 = vmatpush1.msra.mxu0 %v4131
      %4133 = vmatprep.subr.mxu0 0.0
      %v4134 = vand.u32 %v280, 4294901760
      %4135 = vmatpush1.msra.mxu0 %v4134
      %4136 = vmatprep.subr.mxu0 0.0
      %v4137 = vand.u32 %v281, 4294901760
      %4138 = vmatpush1.msra.mxu0 %v4137
      %4139 = vmatprep.subr.mxu0 0.0
      %v4140 = vand.u32 %v282, 4294901760
      %4141 = vmatpush1.msra.mxu0 %v4140
      %4142 = vmatprep.subr.mxu0 0.0
      %v4143 = vand.u32 %v283, 4294901760
      %4144 = vmatpush1.msra.mxu0 %v4143
      %4145 = vmatprep.subr.mxu0 0.0
      %v4146 = vand.u32 %v284, 4294901760
      %4147 = vmatpush1.msra.mxu0 %v4146
      %4148 = vmatprep.subr.mxu0 0.0
      %v4149 = vand.u32 %v285, 4294901760
      %4150 = vmatpush1.msra.mxu0 %v4149
      %4151 = vmatprep.subr.mxu0 0.0
      %4152 = vmatpush1.msra.mxu0 0.0
      %4153 = vmatprep.subr.mxu0 0.0
      %4154 = vmatpush1.msra.mxu0 0.0
      %4155 = vmatprep.subr.mxu0 0.0
      %4156 = vmatpush1.msra.mxu0 0.0
      %4157 = vmatprep.subr.mxu0 0.0
      %4158 = vmatpush1.msra.mxu0 0.0
      %4159 = vmatprep.subr.mxu0 0.0
      %4160 = vmatpush1.msra.mxu0 0.0
      %4161 = vmatprep.subr.mxu0 0.0
      %4162 = vmatpush1.msra.mxu0 0.0
      %4163 = vmatprep.subr.mxu0 0.0
      %4164 = vmatpush1.msra.mxu0 0.0
      %4165 = vmatprep.subr.mxu0 0.0
      %4166 = vmatpush1.msra.mxu0 0.0
      %4167 = vmatprep.subr.mxu0 0.0
      %4168 = vmatpush1.msra.mxu0 0.0
      %4169 = vmatprep.subr.mxu0 0.0
      %4170 = vmatpush1.msra.mxu0 0.0
      %4171 = vmatprep.subr.mxu0 0.0
      %4172 = vmatpush1.msra.mxu0 0.0
      %4173 = vmatprep.subr.mxu0 0.0
      %4174 = vmatpush1.msra.mxu0 0.0
      %4175 = vmatprep.subr.mxu0 0.0
      %4176 = vmatpush1.msra.mxu0 0.0
      %4177 = vmatprep.subr.mxu0 0.0
      %4178 = vmatpush1.msra.mxu0 0.0
      %4179 = vmatprep.subr.mxu0 0.0
      %4180 = vmatpush1.msra.mxu0 0.0
      %4181 = vmatprep.subr.mxu0 0.0
      %4182 = vmatpush1.msra.mxu0 0.0
      %4183 = vmatprep.mubr.f32.mxu0 0.0
      %v4184 = vand.u32 %v4081, 4294901760
      %v4185 = vsub.f32 %v4081, %v4184
      %v4186 = vand.u32 %v4185, 4294901760
      %v4187 = vsub.f32 %v4185, %v4186
      %v4188 = vand.u32 %v4187, 4294901760
      %4189 = vmatmul.mubr.f32.gmra.mrb[0].mxu0 %v4188
      %v4190 = vpop.f32.mrb[0].mxu0
      %v4191 = vadd.f32 %v4101, %v4190
      %v4192 = vpop.f32.mrb[0].mxu0
      %4193 = vmatprep.mubr.f32.mxu0 0.0
      %v4194 = vand.u32 %v4082, 4294901760
      %v4195 = vsub.f32 %v4082, %v4194
      %v4196 = vand.u32 %v4195, 4294901760
      %v4197 = vsub.f32 %v4195, %v4196
      %v4198 = vand.u32 %v4197, 4294901760
      %4199 = vmatmul.mubr.f32.gmra.mrb[0].mxu0 %v4198
      %v4200 = vpop.f32.mrb[0].mxu0
      %v4201 = vadd.f32 %v4101, %v4200
      %v4202 = vpop.f32.mrb[0].mxu0
      %4203 = vmatprep.mubr.f32.mxu0 0.0
      %v4204 = vand.u32 %v4083, 4294901760
      %v4205 = vsub.f32 %v4083, %v4204
      %v4206 = vand.u32 %v4205, 4294901760
      %v4207 = vsub.f32 %v4205, %v4206
      %v4208 = vand.u32 %v4207, 4294901760
      %4209 = vmatmul.mubr.f32.gmra.mrb[0].mxu0 %v4208
      %v4210 = vpop.f32.mrb[0].mxu0
      %v4211 = vadd.f32 %v4101, %v4210
      %v4212 = vpop.f32.mrb[0].mxu0
      %4213 = vmatprep.mubr.f32.mxu0 0.0
      %v4214 = vand.u32 %v4084, 4294901760
      %v4215 = vsub.f32 %v4084, %v4214
      %v4216 = vand.u32 %v4215, 4294901760
      %v4217 = vsub.f32 %v4215, %v4216
      %v4218 = vand.u32 %v4217, 4294901760
      %4219 = vmatmul.mubr.f32.gmra.mrb[0].mxu0 %v4218
      %v4220 = vpop.f32.mrb[0].mxu0
      %v4221 = vadd.f32 %v4101, %v4220
      %v4222 = vpop.f32.mrb[0].mxu0
      %4223 = vmatprep.mubr.f32.mxu0 0.0
      %v4224 = vand.u32 %v4085, 4294901760
      %v4225 = vsub.f32 %v4085, %v4224
      %v4226 = vand.u32 %v4225, 4294901760
      %v4227 = vsub.f32 %v4225, %v4226
      %v4228 = vand.u32 %v4227, 4294901760
      %4229 = vmatmul.mubr.f32.gmra.mrb[0].mxu0 %v4228
      %v4230 = vpop.f32.mrb[0].mxu0
      %v4231 = vadd.f32 %v4101, %v4230
      %v4232 = vpop.f32.mrb[0].mxu0
      %4233 = vmatprep.mubr.f32.mxu0 0.0
      %v4234 = vand.u32 %v4086, 4294901760
      %v4235 = vsub.f32 %v4086, %v4234
      %v4236 = vand.u32 %v4235, 4294901760
      %v4237 = vsub.f32 %v4235, %v4236
      %v4238 = vand.u32 %v4237, 4294901760
      %4239 = vmatmul.mubr.f32.gmra.mrb[0].mxu0 %v4238
      %v4240 = vpop.f32.mrb[0].mxu0
      %v4241 = vadd.f32 %v4101, %v4240
      %v4242 = vpop.f32.mrb[0].mxu0
      %4243 = vmatprep.mubr.f32.mxu0 0.0
      %v4244 = vand.u32 %v4087, 4294901760
      %v4245 = vsub.f32 %v4087, %v4244
      %v4246 = vand.u32 %v4245, 4294901760
      %v4247 = vsub.f32 %v4245, %v4246
      %v4248 = vand.u32 %v4247, 4294901760
      %4249 = vmatmul.mubr.f32.gmra.mrb[0].mxu0 %v4248
      %v4250 = vpop.f32.mrb[0].mxu0
      %v4251 = vadd.f32 %v4101, %v4250
      %v4252 = vpop.f32.mrb[0].mxu0
      %4253 = vmatprep.mubr.f32.mxu0 0.0
      %v4254 = vand.u32 %v4088, 4294901760
      %v4255 = vsub.f32 %v4088, %v4254
      %v4256 = vand.u32 %v4255, 4294901760
      %v4257 = vsub.f32 %v4255, %v4256
      %v4258 = vand.u32 %v4257, 4294901760
      %4259 = vmatmul.mubr.f32.gmra.mrb[0].mxu0 %v4258
      %v4260 = vpop.f32.mrb[0].mxu0
      %v4261 = vadd.f32 %v4101, %v4260
      %v4262 = vpop.f32.mrb[0].mxu0
      %4263 = vmatprep.mubr.f32.mxu0 0.0
      %v4264 = vand.u32 %v4089, 4294901760
      %v4265 = vsub.f32 %v4089, %v4264
      %v4266 = vand.u32 %v4265, 4294901760
      %v4267 = vsub.f32 %v4265, %v4266
      %v4268 = vand.u32 %v4267, 4294901760
      %4269 = vmatmul.mubr.f32.gmra.mrb[0].mxu0 %v4268
      %v4270 = vpop.f32.mrb[0].mxu0
      %v4271 = vadd.f32 %v4101, %v4270
      %v4272 = vpop.f32.mrb[0].mxu0
      %4273 = vmatprep.mubr.f32.mxu0 0.0
      %v4274 = vand.u32 %v4090, 4294901760
      %v4275 = vsub.f32 %v4090, %v4274
      %v4276 = vand.u32 %v4275, 4294901760
      %v4277 = vsub.f32 %v4275, %v4276
      %v4278 = vand.u32 %v4277, 4294901760
      %4279 = vmatmul.mubr.f32.gmra.mrb[0].mxu0 %v4278
      %v4280 = vpop.f32.mrb[0].mxu0
      %v4281 = vadd.f32 %v4101, %v4280
      %v4282 = vpop.f32.mrb[0].mxu0
      %4283 = vmatprep.mubr.f32.mxu0 0.0
      %v4284 = vand.u32 %v4091, 4294901760
      %v4285 = vsub.f32 %v4091, %v4284
      %v4286 = vand.u32 %v4285, 4294901760
      %v4287 = vsub.f32 %v4285, %v4286
      %v4288 = vand.u32 %v4287, 4294901760
      %4289 = vmatmul.mubr.f32.gmra.mrb[0].mxu0 %v4288
      %v4290 = vpop.f32.mrb[0].mxu0
      %v4291 = vadd.f32 %v4101, %v4290
      %v4292 = vpop.f32.mrb[0].mxu0
      %4293 = vmatprep.mubr.f32.mxu0 0.0
      %v4294 = vand.u32 %v4092, 4294901760
      %v4295 = vsub.f32 %v4092, %v4294
      %v4296 = vand.u32 %v4295, 4294901760
      %v4297 = vsub.f32 %v4295, %v4296
      %v4298 = vand.u32 %v4297, 4294901760
      %4299 = vmatmul.mubr.f32.gmra.mrb[0].mxu0 %v4298
      %v4300 = vpop.f32.mrb[0].mxu0
      %v4301 = vadd.f32 %v4101, %v4300
      %v4302 = vpop.f32.mrb[0].mxu0
      %4303 = vmatprep.mubr.f32.mxu0 0.0
      %v4304 = vand.u32 %v4093, 4294901760
      %v4305 = vsub.f32 %v4093, %v4304
      %v4306 = vand.u32 %v4305, 4294901760
      %v4307 = vsub.f32 %v4305, %v4306
      %v4308 = vand.u32 %v4307, 4294901760
      %4309 = vmatmul.mubr.f32.gmra.mrb[0].mxu0 %v4308
      %v4310 = vpop.f32.mrb[0].mxu0
      %v4311 = vadd.f32 %v4101, %v4310
      %v4312 = vpop.f32.mrb[0].mxu0
      %4313 = vmatprep.mubr.f32.mxu0 0.0
      %v4314 = vand.u32 %v4094, 4294901760
      %v4315 = vsub.f32 %v4094, %v4314
      %v4316 = vand.u32 %v4315, 4294901760
      %v4317 = vsub.f32 %v4315, %v4316
      %v4318 = vand.u32 %v4317, 4294901760
      %4319 = vmatmul.mubr.f32.gmra.mrb[0].mxu0 %v4318
      %v4320 = vpop.f32.mrb[0].mxu0
      %v4321 = vadd.f32 %v4101, %v4320
      %v4322 = vpop.f32.mrb[0].mxu0
      %4323 = vmatprep.mubr.f32.mxu0 0.0
      %v4324 = vand.u32 %v4095, 4294901760
      %v4325 = vsub.f32 %v4095, %v4324
      %v4326 = vand.u32 %v4325, 4294901760
      %v4327 = vsub.f32 %v4325, %v4326
      %v4328 = vand.u32 %v4327, 4294901760
      %4329 = vmatmul.mubr.f32.gmra.mrb[0].mxu0 %v4328
      %v4330 = vpop.f32.mrb[0].mxu0
      %v4331 = vadd.f32 %v4101, %v4330
      %v4332 = vpop.f32.mrb[0].mxu0
      %4333 = vmatprep.mubr.f32.mxu0 0.0
      %v4334 = vand.u32 %v4096, 4294901760
      %v4335 = vsub.f32 %v4096, %v4334
      %v4336 = vand.u32 %v4335, 4294901760
      %v4337 = vsub.f32 %v4335, %v4336
      %v4338 = vand.u32 %v4337, 4294901760
      %4339 = vmatmul.mubr.f32.gmra.mrb[0].mxu0 %v4338
      %v4340 = vpop.f32.mrb[0].mxu0
      %v4341 = vadd.f32 %v4101, %v4340
      %v4342 = vpop.f32.mrb[0].mxu0
      %4343 = vdwg.mxu0
      %4344 = vmatprep.subr.mxu0 0.0
      %v4345 = vand.u32 %v270, 4294901760
      %v4346 = vsub.f32 %v270, %v4345
      %v4347 = vand.u32 %v4346, 4294901760
      %v4348 = vsub.f32 %v4346, %v4347
      %v4349 = vand.u32 %v4348, 4294901760
      %4350 = vmatpush1.msra.mxu0 %v4349
      %4351 = vmatprep.subr.mxu0 0.0
      %v4352 = vand.u32 %v271, 4294901760
      %v4353 = vsub.f32 %v271, %v4352
      %v4354 = vand.u32 %v4353, 4294901760
      %v4355 = vsub.f32 %v4353, %v4354
      %v4356 = vand.u32 %v4355, 4294901760
      %4357 = vmatpush1.msra.mxu0 %v4356
      %4358 = vmatprep.subr.mxu0 0.0
      %v4359 = vand.u32 %v272, 4294901760
      %v4360 = vsub.f32 %v272, %v4359
      %v4361 = vand.u32 %v4360, 4294901760
      %v4362 = vsub.f32 %v4360, %v4361
      %v4363 = vand.u32 %v4362, 4294901760
      %4364 = vmatpush1.msra.mxu0 %v4363
      %4365 = vmatprep.subr.mxu0 0.0
      %v4366 = vand.u32 %v273, 4294901760
      %v4367 = vsub.f32 %v273, %v4366
      %v4368 = vand.u32 %v4367, 4294901760
      %v4369 = vsub.f32 %v4367, %v4368
      %v4370 = vand.u32 %v4369, 4294901760
      %4371 = vmatpush1.msra.mxu0 %v4370
      %4372 = vmatprep.subr.mxu0 0.0
      %v4373 = vand.u32 %v274, 4294901760
      %v4374 = vsub.f32 %v274, %v4373
      %v4375 = vand.u32 %v4374, 4294901760
      %v4376 = vsub.f32 %v4374, %v4375
      %v4377 = vand.u32 %v4376, 4294901760
      %4378 = vmatpush1.msra.mxu0 %v4377
      %4379 = vmatprep.subr.mxu0 0.0
      %v4380 = vand.u32 %v275, 4294901760
      %v4381 = vsub.f32 %v275, %v4380
      %v4382 = vand.u32 %v4381, 4294901760
      %v4383 = vsub.f32 %v4381, %v4382
      %v4384 = vand.u32 %v4383, 4294901760
      %4385 = vmatpush1.msra.mxu0 %v4384
      %4386 = vmatprep.subr.mxu0 0.0
      %v4387 = vand.u32 %v276, 4294901760
      %v4388 = vsub.f32 %v276, %v4387
      %v4389 = vand.u32 %v4388, 4294901760
      %v4390 = vsub.f32 %v4388, %v4389
      %v4391 = vand.u32 %v4390, 4294901760
      %4392 = vmatpush1.msra.mxu0 %v4391
      %4393 = vmatprep.subr.mxu0 0.0
      %v4394 = vand.u32 %v277, 4294901760
      %v4395 = vsub.f32 %v277, %v4394
      %v4396 = vand.u32 %v4395, 4294901760
      %v4397 = vsub.f32 %v4395, %v4396
      %v4398 = vand.u32 %v4397, 4294901760
      %4399 = vmatpush1.msra.mxu0 %v4398
      %4400 = vmatprep.subr.mxu0 0.0
      %v4401 = vand.u32 %v278, 4294901760
      %v4402 = vsub.f32 %v278, %v4401
      %v4403 = vand.u32 %v4402, 4294901760
      %v4404 = vsub.f32 %v4402, %v4403
      %v4405 = vand.u32 %v4404, 4294901760
      %4406 = vmatpush1.msra.mxu0 %v4405
      %4407 = vmatprep.subr.mxu0 0.0
      %v4408 = vand.u32 %v279, 4294901760
      %v4409 = vsub.f32 %v279, %v4408
      %v4410 = vand.u32 %v4409, 4294901760
      %v4411 = vsub.f32 %v4409, %v4410
      %v4412 = vand.u32 %v4411, 4294901760
      %4413 = vmatpush1.msra.mxu0 %v4412
      %4414 = vmatprep.subr.mxu0 0.0
      %v4415 = vand.u32 %v280, 4294901760
      %v4416 = vsub.f32 %v280, %v4415
      %v4417 = vand.u32 %v4416, 4294901760
      %v4418 = vsub.f32 %v4416, %v4417
      %v4419 = vand.u32 %v4418, 4294901760
      %4420 = vmatpush1.msra.mxu0 %v4419
      %4421 = vmatprep.subr.mxu0 0.0
      %v4422 = vand.u32 %v281, 4294901760
      %v4423 = vsub.f32 %v281, %v4422
      %v4424 = vand.u32 %v4423, 4294901760
      %v4425 = vsub.f32 %v4423, %v4424
      %v4426 = vand.u32 %v4425, 4294901760
      %4427 = vmatpush1.msra.mxu0 %v4426
      %4428 = vmatprep.subr.mxu0 0.0
      %v4429 = vand.u32 %v282, 4294901760
      %v4430 = vsub.f32 %v282, %v4429
      %v4431 = vand.u32 %v4430, 4294901760
      %v4432 = vsub.f32 %v4430, %v4431
      %v4433 = vand.u32 %v4432, 4294901760
      %4434 = vmatpush1.msra.mxu0 %v4433
      %4435 = vmatprep.subr.mxu0 0.0
      %v4436 = vand.u32 %v283, 4294901760
      %v4437 = vsub.f32 %v283, %v4436
      %v4438 = vand.u32 %v4437, 4294901760
      %v4439 = vsub.f32 %v4437, %v4438
      %v4440 = vand.u32 %v4439, 4294901760
      %4441 = vmatpush1.msra.mxu0 %v4440
      %4442 = vmatprep.subr.mxu0 0.0
      %v4443 = vand.u32 %v284, 4294901760
      %v4444 = vsub.f32 %v284, %v4443
      %v4445 = vand.u32 %v4444, 4294901760
      %v4446 = vsub.f32 %v4444, %v4445
      %v4447 = vand.u32 %v4446, 4294901760
      %4448 = vmatpush1.msra.mxu0 %v4447
      %4449 = vmatprep.subr.mxu0 0.0
      %v4450 = vand.u32 %v285, 4294901760
      %v4451 = vsub.f32 %v285, %v4450
      %v4452 = vand.u32 %v4451, 4294901760
      %v4453 = vsub.f32 %v4451, %v4452
      %v4454 = vand.u32 %v4453, 4294901760
      %4455 = vmatpush1.msra.mxu0 %v4454
      %4456 = vmatprep.subr.mxu0 0.0
      %4457 = vmatpush1.msra.mxu0 0.0
      %4458 = vmatprep.subr.mxu0 0.0
      %4459 = vmatpush1.msra.mxu0 0.0
      %4460 = vmatprep.subr.mxu0 0.0
      %4461 = vmatpush1.msra.mxu0 0.0
      %4462 = vmatprep.subr.mxu0 0.0
      %4463 = vmatpush1.msra.mxu0 0.0
      %4464 = vmatprep.subr.mxu0 0.0
      %4465 = vmatpush1.msra.mxu0 0.0
      %4466 = vmatprep.subr.mxu0 0.0
      %4467 = vmatpush1.msra.mxu0 0.0
      %4468 = vmatprep.subr.mxu0 0.0
      %4469 = vmatpush1.msra.mxu0 0.0
      %4470 = vmatprep.subr.mxu0 0.0
      %4471 = vmatpush1.msra.mxu0 0.0
      %4472 = vmatprep.subr.mxu0 0.0
      %4473 = vmatpush1.msra.mxu0 0.0
      %4474 = vmatprep.subr.mxu0 0.0
      %4475 = vmatpush1.msra.mxu0 0.0
      %4476 = vmatprep.subr.mxu0 0.0
      %4477 = vmatpush1.msra.mxu0 0.0
      %4478 = vmatprep.subr.mxu0 0.0
      %4479 = vmatpush1.msra.mxu0 0.0
      %4480 = vmatprep.subr.mxu0 0.0
      %4481 = vmatpush1.msra.mxu0 0.0
      %4482 = vmatprep.subr.mxu0 0.0
      %4483 = vmatpush1.msra.mxu0 0.0
      %4484 = vmatprep.subr.mxu0 0.0
      %4485 = vmatpush1.msra.mxu0 0.0
      %4486 = vmatprep.subr.mxu0 0.0
      %4487 = vmatpush1.msra.mxu0 0.0
      %4488 = vmatprep.mubr.f32.mxu0 0.0
      %v4489 = vand.u32 %v4081, 4294901760
      %4490 = vmatmul.mubr.f32.gmra.mrb[0].mxu0 %v4489
      %v4491 = vpop.f32.mrb[0].mxu0
      %v4492 = vadd.f32 %v4191, %v4491
      %v4493 = vpop.f32.mrb[0].mxu0
      %4494 = vmatprep.mubr.f32.mxu0 0.0
      %v4495 = vand.u32 %v4082, 4294901760
      %4496 = vmatmul.mubr.f32.gmra.mrb[0].mxu0 %v4495
      %v4497 = vpop.f32.mrb[0].mxu0
      %v4498 = vadd.f32 %v4201, %v4497
      %v4499 = vpop.f32.mrb[0].mxu0
      %4500 = vmatprep.mubr.f32.mxu0 0.0
      %v4501 = vand.u32 %v4083, 4294901760
      %4502 = vmatmul.mubr.f32.gmra.mrb[0].mxu0 %v4501
      %v4503 = vpop.f32.mrb[0].mxu0
      %v4504 = vadd.f32 %v4211, %v4503
      %v4505 = vpop.f32.mrb[0].mxu0
      %4506 = vmatprep.mubr.f32.mxu0 0.0
      %v4507 = vand.u32 %v4084, 4294901760
      %4508 = vmatmul.mubr.f32.gmra.mrb[0].mxu0 %v4507
      %v4509 = vpop.f32.mrb[0].mxu0
      %v4510 = vadd.f32 %v4221, %v4509
      %v4511 = vpop.f32.mrb[0].mxu0
      %4512 = vmatprep.mubr.f32.mxu0 0.0
      %v4513 = vand.u32 %v4085, 4294901760
      %4514 = vmatmul.mubr.f32.gmra.mrb[0].mxu0 %v4513
      %v4515 = vpop.f32.mrb[0].mxu0
      %v4516 = vadd.f32 %v4231, %v4515
      %v4517 = vpop.f32.mrb[0].mxu0
      %4518 = vmatprep.mubr.f32.mxu0 0.0
      %v4519 = vand.u32 %v4086, 4294901760
      %4520 = vmatmul.mubr.f32.gmra.mrb[0].mxu0 %v4519
      %v4521 = vpop.f32.mrb[0].mxu0
      %v4522 = vadd.f32 %v4241, %v4521
      %v4523 = vpop.f32.mrb[0].mxu0
      %4524 = vmatprep.mubr.f32.mxu0 0.0
      %v4525 = vand.u32 %v4087, 4294901760
      %4526 = vmatmul.mubr.f32.gmra.mrb[0].mxu0 %v4525
      %v4527 = vpop.f32.mrb[0].mxu0
      %v4528 = vadd.f32 %v4251, %v4527
      %v4529 = vpop.f32.mrb[0].mxu0
      %4530 = vmatprep.mubr.f32.mxu0 0.0
      %v4531 = vand.u32 %v4088, 4294901760
      %4532 = vmatmul.mubr.f32.gmra.mrb[0].mxu0 %v4531
      %v4533 = vpop.f32.mrb[0].mxu0
      %v4534 = vadd.f32 %v4261, %v4533
      %v4535 = vpop.f32.mrb[0].mxu0
      %4536 = vmatprep.mubr.f32.mxu0 0.0
      %v4537 = vand.u32 %v4089, 4294901760
      %4538 = vmatmul.mubr.f32.gmra.mrb[0].mxu0 %v4537
      %v4539 = vpop.f32.mrb[0].mxu0
      %v4540 = vadd.f32 %v4271, %v4539
      %v4541 = vpop.f32.mrb[0].mxu0
      %4542 = vmatprep.mubr.f32.mxu0 0.0
      %v4543 = vand.u32 %v4090, 4294901760
      %4544 = vmatmul.mubr.f32.gmra.mrb[0].mxu0 %v4543
      %v4545 = vpop.f32.mrb[0].mxu0
      %v4546 = vadd.f32 %v4281, %v4545
      %v4547 = vpop.f32.mrb[0].mxu0
      %4548 = vmatprep.mubr.f32.mxu0 0.0
      %v4549 = vand.u32 %v4091, 4294901760
      %4550 = vmatmul.mubr.f32.gmra.mrb[0].mxu0 %v4549
      %v4551 = vpop.f32.mrb[0].mxu0
      %v4552 = vadd.f32 %v4291, %v4551
      %v4553 = vpop.f32.mrb[0].mxu0
      %4554 = vmatprep.mubr.f32.mxu0 0.0
      %v4555 = vand.u32 %v4092, 4294901760
      %4556 = vmatmul.mubr.f32.gmra.mrb[0].mxu0 %v4555
      %v4557 = vpop.f32.mrb[0].mxu0
      %v4558 = vadd.f32 %v4301, %v4557
      %v4559 = vpop.f32.mrb[0].mxu0
      %4560 = vmatprep.mubr.f32.mxu0 0.0
      %v4561 = vand.u32 %v4093, 4294901760
      %4562 = vmatmul.mubr.f32.gmra.mrb[0].mxu0 %v4561
      %v4563 = vpop.f32.mrb[0].mxu0
      %v4564 = vadd.f32 %v4311, %v4563
      %v4565 = vpop.f32.mrb[0].mxu0
      %4566 = vmatprep.mubr.f32.mxu0 0.0
      %v4567 = vand.u32 %v4094, 4294901760
      %4568 = vmatmul.mubr.f32.gmra.mrb[0].mxu0 %v4567
      %v4569 = vpop.f32.mrb[0].mxu0
      %v4570 = vadd.f32 %v4321, %v4569
      %v4571 = vpop.f32.mrb[0].mxu0
      %4572 = vmatprep.mubr.f32.mxu0 0.0
      %v4573 = vand.u32 %v4095, 4294901760
      %4574 = vmatmul.mubr.f32.gmra.mrb[0].mxu0 %v4573
      %v4575 = vpop.f32.mrb[0].mxu0
      %v4576 = vadd.f32 %v4331, %v4575
      %v4577 = vpop.f32.mrb[0].mxu0
      %4578 = vmatprep.mubr.f32.mxu0 0.0
      %v4579 = vand.u32 %v4096, 4294901760
      %4580 = vmatmul.mubr.f32.gmra.mrb[0].mxu0 %v4579
      %v4581 = vpop.f32.mrb[0].mxu0
      %v4582 = vadd.f32 %v4341, %v4581
      %v4583 = vpop.f32.mrb[0].mxu0
      %4584 = vdwg.mxu0
      %4585 = vmatprep.subr.mxu0 0.0
      %v4586 = vand.u32 %v270, 4294901760
      %v4587 = vsub.f32 %v270, %v4586
      %4588 = vmatpush1.msra.mxu0 %v4587
      %4589 = vmatprep.subr.mxu0 0.0
      %v4590 = vand.u32 %v271, 4294901760
      %v4591 = vsub.f32 %v271, %v4590
      %4592 = vmatpush1.msra.mxu0 %v4591
      %4593 = vmatprep.subr.mxu0 0.0
      %v4594 = vand.u32 %v272, 4294901760
      %v4595 = vsub.f32 %v272, %v4594
      %4596 = vmatpush1.msra.mxu0 %v4595
      %4597 = vmatprep.subr.mxu0 0.0
      %v4598 = vand.u32 %v273, 4294901760
      %v4599 = vsub.f32 %v273, %v4598
      %4600 = vmatpush1.msra.mxu0 %v4599
      %4601 = vmatprep.subr.mxu0 0.0
      %v4602 = vand.u32 %v274, 4294901760
      %v4603 = vsub.f32 %v274, %v4602
      %4604 = vmatpush1.msra.mxu0 %v4603
      %4605 = vmatprep.subr.mxu0 0.0
      %v4606 = vand.u32 %v275, 4294901760
      %v4607 = vsub.f32 %v275, %v4606
      %4608 = vmatpush1.msra.mxu0 %v4607
      %4609 = vmatprep.subr.mxu0 0.0
      %v4610 = vand.u32 %v276, 4294901760
      %v4611 = vsub.f32 %v276, %v4610
      %4612 = vmatpush1.msra.mxu0 %v4611
      %4613 = vmatprep.subr.mxu0 0.0
      %v4614 = vand.u32 %v277, 4294901760
      %v4615 = vsub.f32 %v277, %v4614
      %4616 = vmatpush1.msra.mxu0 %v4615
      %4617 = vmatprep.subr.mxu0 0.0
      %v4618 = vand.u32 %v278, 4294901760
      %v4619 = vsub.f32 %v278, %v4618
      %4620 = vmatpush1.msra.mxu0 %v4619
      %4621 = vmatprep.subr.mxu0 0.0
      %v4622 = vand.u32 %v279, 4294901760
      %v4623 = vsub.f32 %v279, %v4622
      %4624 = vmatpush1.msra.mxu0 %v4623
      %4625 = vmatprep.subr.mxu0 0.0
      %v4626 = vand.u32 %v280, 4294901760
      %v4627 = vsub.f32 %v280, %v4626
      %4628 = vmatpush1.msra.mxu0 %v4627
      %4629 = vmatprep.subr.mxu0 0.0
      %v4630 = vand.u32 %v281, 4294901760
      %v4631 = vsub.f32 %v281, %v4630
      %4632 = vmatpush1.msra.mxu0 %v4631
      %4633 = vmatprep.subr.mxu0 0.0
      %v4634 = vand.u32 %v282, 4294901760
      %v4635 = vsub.f32 %v282, %v4634
      %4636 = vmatpush1.msra.mxu0 %v4635
      %4637 = vmatprep.subr.mxu0 0.0
      %v4638 = vand.u32 %v283, 4294901760
      %v4639 = vsub.f32 %v283, %v4638
      %4640 = vmatpush1.msra.mxu0 %v4639
      %4641 = vmatprep.subr.mxu0 0.0
      %v4642 = vand.u32 %v284, 4294901760
      %v4643 = vsub.f32 %v284, %v4642
      %4644 = vmatpush1.msra.mxu0 %v4643
      %4645 = vmatprep.subr.mxu0 0.0
      %v4646 = vand.u32 %v285, 4294901760
      %v4647 = vsub.f32 %v285, %v4646
      %4648 = vmatpush1.msra.mxu0 %v4647
      %4649 = vmatprep.subr.mxu0 0.0
      %4650 = vmatpush1.msra.mxu0 0.0
      %4651 = vmatprep.subr.mxu0 0.0
      %4652 = vmatpush1.msra.mxu0 0.0
      %4653 = vmatprep.subr.mxu0 0.0
      %4654 = vmatpush1.msra.mxu0 0.0
      %4655 = vmatprep.subr.mxu0 0.0
      %4656 = vmatpush1.msra.mxu0 0.0
      %4657 = vmatprep.subr.mxu0 0.0
      %4658 = vmatpush1.msra.mxu0 0.0
      %4659 = vmatprep.subr.mxu0 0.0
      %4660 = vmatpush1.msra.mxu0 0.0
      %4661 = vmatprep.subr.mxu0 0.0
      %4662 = vmatpush1.msra.mxu0 0.0
      %4663 = vmatprep.subr.mxu0 0.0
      %4664 = vmatpush1.msra.mxu0 0.0
      %4665 = vmatprep.subr.mxu0 0.0
      %4666 = vmatpush1.msra.mxu0 0.0
      %4667 = vmatprep.subr.mxu0 0.0
      %4668 = vmatpush1.msra.mxu0 0.0
      %4669 = vmatprep.subr.mxu0 0.0
      %4670 = vmatpush1.msra.mxu0 0.0
      %4671 = vmatprep.subr.mxu0 0.0
      %4672 = vmatpush1.msra.mxu0 0.0
      %4673 = vmatprep.subr.mxu0 0.0
      %4674 = vmatpush1.msra.mxu0 0.0
      %4675 = vmatprep.subr.mxu0 0.0
      %4676 = vmatpush1.msra.mxu0 0.0
      %4677 = vmatprep.subr.mxu0 0.0
      %4678 = vmatpush1.msra.mxu0 0.0
      %4679 = vmatprep.subr.mxu0 0.0
      %4680 = vmatpush1.msra.mxu0 0.0
      %4681 = vmatprep.mubr.f32.mxu0 0.0
      %v4682 = vand.u32 %v4081, 4294901760
      %v4683 = vsub.f32 %v4081, %v4682
      %4684 = vmatmul.mubr.f32.gmra.mrb[0].mxu0 %v4683
      %v4685 = vpop.f32.mrb[0].mxu0
      %v4686 = vadd.f32 %v4492, %v4685
      %v4687 = vpop.f32.mrb[0].mxu0
      %4688 = vmatprep.mubr.f32.mxu0 0.0
      %v4689 = vand.u32 %v4082, 4294901760
      %v4690 = vsub.f32 %v4082, %v4689
      %4691 = vmatmul.mubr.f32.gmra.mrb[0].mxu0 %v4690
      %v4692 = vpop.f32.mrb[0].mxu0
      %v4693 = vadd.f32 %v4498, %v4692
      %v4694 = vpop.f32.mrb[0].mxu0
      %4695 = vmatprep.mubr.f32.mxu0 0.0
      %v4696 = vand.u32 %v4083, 4294901760
      %v4697 = vsub.f32 %v4083, %v4696
      %4698 = vmatmul.mubr.f32.gmra.mrb[0].mxu0 %v4697
      %v4699 = vpop.f32.mrb[0].mxu0
      %v4700 = vadd.f32 %v4504, %v4699
      %v4701 = vpop.f32.mrb[0].mxu0
      %4702 = vmatprep.mubr.f32.mxu0 0.0
      %v4703 = vand.u32 %v4084, 4294901760
      %v4704 = vsub.f32 %v4084, %v4703
      %4705 = vmatmul.mubr.f32.gmra.mrb[0].mxu0 %v4704
      %v4706 = vpop.f32.mrb[0].mxu0
      %v4707 = vadd.f32 %v4510, %v4706
      %v4708 = vpop.f32.mrb[0].mxu0
      %4709 = vmatprep.mubr.f32.mxu0 0.0
      %v4710 = vand.u32 %v4085, 4294901760
      %v4711 = vsub.f32 %v4085, %v4710
      %4712 = vmatmul.mubr.f32.gmra.mrb[0].mxu0 %v4711
      %v4713 = vpop.f32.mrb[0].mxu0
      %v4714 = vadd.f32 %v4516, %v4713
      %v4715 = vpop.f32.mrb[0].mxu0
      %4716 = vmatprep.mubr.f32.mxu0 0.0
      %v4717 = vand.u32 %v4086, 4294901760
      %v4718 = vsub.f32 %v4086, %v4717
      %4719 = vmatmul.mubr.f32.gmra.mrb[0].mxu0 %v4718
      %v4720 = vpop.f32.mrb[0].mxu0
      %v4721 = vadd.f32 %v4522, %v4720
      %v4722 = vpop.f32.mrb[0].mxu0
      %4723 = vmatprep.mubr.f32.mxu0 0.0
      %v4724 = vand.u32 %v4087, 4294901760
      %v4725 = vsub.f32 %v4087, %v4724
      %4726 = vmatmul.mubr.f32.gmra.mrb[0].mxu0 %v4725
      %v4727 = vpop.f32.mrb[0].mxu0
      %v4728 = vadd.f32 %v4528, %v4727
      %v4729 = vpop.f32.mrb[0].mxu0
      %4730 = vmatprep.mubr.f32.mxu0 0.0
      %v4731 = vand.u32 %v4088, 4294901760
      %v4732 = vsub.f32 %v4088, %v4731
      %4733 = vmatmul.mubr.f32.gmra.mrb[0].mxu0 %v4732
      %v4734 = vpop.f32.mrb[0].mxu0
      %v4735 = vadd.f32 %v4534, %v4734
      %v4736 = vpop.f32.mrb[0].mxu0
      %4737 = vmatprep.mubr.f32.mxu0 0.0
      %v4738 = vand.u32 %v4089, 4294901760
      %v4739 = vsub.f32 %v4089, %v4738
      %4740 = vmatmul.mubr.f32.gmra.mrb[0].mxu0 %v4739
      %v4741 = vpop.f32.mrb[0].mxu0
      %v4742 = vadd.f32 %v4540, %v4741
      %v4743 = vpop.f32.mrb[0].mxu0
      %4744 = vmatprep.mubr.f32.mxu0 0.0
      %v4745 = vand.u32 %v4090, 4294901760
      %v4746 = vsub.f32 %v4090, %v4745
      %4747 = vmatmul.mubr.f32.gmra.mrb[0].mxu0 %v4746
      %v4748 = vpop.f32.mrb[0].mxu0
      %v4749 = vadd.f32 %v4546, %v4748
      %v4750 = vpop.f32.mrb[0].mxu0
      %4751 = vmatprep.mubr.f32.mxu0 0.0
      %v4752 = vand.u32 %v4091, 4294901760
      %v4753 = vsub.f32 %v4091, %v4752
      %4754 = vmatmul.mubr.f32.gmra.mrb[0].mxu0 %v4753
      %v4755 = vpop.f32.mrb[0].mxu0
      %v4756 = vadd.f32 %v4552, %v4755
      %v4757 = vpop.f32.mrb[0].mxu0
      %4758 = vmatprep.mubr.f32.mxu0 0.0
      %v4759 = vand.u32 %v4092, 4294901760
      %v4760 = vsub.f32 %v4092, %v4759
      %4761 = vmatmul.mubr.f32.gmra.mrb[0].mxu0 %v4760
      %v4762 = vpop.f32.mrb[0].mxu0
      %v4763 = vadd.f32 %v4558, %v4762
      %v4764 = vpop.f32.mrb[0].mxu0
      %4765 = vmatprep.mubr.f32.mxu0 0.0
      %v4766 = vand.u32 %v4093, 4294901760
      %v4767 = vsub.f32 %v4093, %v4766
      %4768 = vmatmul.mubr.f32.gmra.mrb[0].mxu0 %v4767
      %v4769 = vpop.f32.mrb[0].mxu0
      %v4770 = vadd.f32 %v4564, %v4769
      %v4771 = vpop.f32.mrb[0].mxu0
      %4772 = vmatprep.mubr.f32.mxu0 0.0
      %v4773 = vand.u32 %v4094, 4294901760
      %v4774 = vsub.f32 %v4094, %v4773
      %4775 = vmatmul.mubr.f32.gmra.mrb[0].mxu0 %v4774
      %v4776 = vpop.f32.mrb[0].mxu0
      %v4777 = vadd.f32 %v4570, %v4776
      %v4778 = vpop.f32.mrb[0].mxu0
      %4779 = vmatprep.mubr.f32.mxu0 0.0
      %v4780 = vand.u32 %v4095, 4294901760
      %v4781 = vsub.f32 %v4095, %v4780
      %4782 = vmatmul.mubr.f32.gmra.mrb[0].mxu0 %v4781
      %v4783 = vpop.f32.mrb[0].mxu0
      %v4784 = vadd.f32 %v4576, %v4783
      %v4785 = vpop.f32.mrb[0].mxu0
      %4786 = vmatprep.mubr.f32.mxu0 0.0
      %v4787 = vand.u32 %v4096, 4294901760
      %v4788 = vsub.f32 %v4096, %v4787
      %4789 = vmatmul.mubr.f32.gmra.mrb[0].mxu0 %v4788
      %v4790 = vpop.f32.mrb[0].mxu0
      %v4791 = vadd.f32 %v4582, %v4790
      %v4792 = vpop.f32.mrb[0].mxu0
      %4793 = vdwg.mxu0
      %4794 = vmatprep.subr.mxu0 0.0
      %v4795 = vand.u32 %v270, 4294901760
      %4796 = vmatpush1.msra.mxu0 %v4795
      %4797 = vmatprep.subr.mxu0 0.0
      %v4798 = vand.u32 %v271, 4294901760
      %4799 = vmatpush1.msra.mxu0 %v4798
      %4800 = vmatprep.subr.mxu0 0.0
      %v4801 = vand.u32 %v272, 4294901760
      %4802 = vmatpush1.msra.mxu0 %v4801
      %4803 = vmatprep.subr.mxu0 0.0
      %v4804 = vand.u32 %v273, 4294901760
      %4805 = vmatpush1.msra.mxu0 %v4804
      %4806 = vmatprep.subr.mxu0 0.0
      %v4807 = vand.u32 %v274, 4294901760
      %4808 = vmatpush1.msra.mxu0 %v4807
      %4809 = vmatprep.subr.mxu0 0.0
      %v4810 = vand.u32 %v275, 4294901760
      %4811 = vmatpush1.msra.mxu0 %v4810
      %4812 = vmatprep.subr.mxu0 0.0
      %v4813 = vand.u32 %v276, 4294901760
      %4814 = vmatpush1.msra.mxu0 %v4813
      %4815 = vmatprep.subr.mxu0 0.0
      %v4816 = vand.u32 %v277, 4294901760
      %4817 = vmatpush1.msra.mxu0 %v4816
      %4818 = vmatprep.subr.mxu0 0.0
      %v4819 = vand.u32 %v278, 4294901760
      %4820 = vmatpush1.msra.mxu0 %v4819
      %4821 = vmatprep.subr.mxu0 0.0
      %v4822 = vand.u32 %v279, 4294901760
      %4823 = vmatpush1.msra.mxu0 %v4822
      %4824 = vmatprep.subr.mxu0 0.0
      %v4825 = vand.u32 %v280, 4294901760
      %4826 = vmatpush1.msra.mxu0 %v4825
      %4827 = vmatprep.subr.mxu0 0.0
      %v4828 = vand.u32 %v281, 4294901760
      %4829 = vmatpush1.msra.mxu0 %v4828
      %4830 = vmatprep.subr.mxu0 0.0
      %v4831 = vand.u32 %v282, 4294901760
      %4832 = vmatpush1.msra.mxu0 %v4831
      %4833 = vmatprep.subr.mxu0 0.0
      %v4834 = vand.u32 %v283, 4294901760
      %4835 = vmatpush1.msra.mxu0 %v4834
      %4836 = vmatprep.subr.mxu0 0.0
      %v4837 = vand.u32 %v284, 4294901760
      %4838 = vmatpush1.msra.mxu0 %v4837
      %4839 = vmatprep.subr.mxu0 0.0
      %v4840 = vand.u32 %v285, 4294901760
      %4841 = vmatpush1.msra.mxu0 %v4840
      %4842 = vmatprep.subr.mxu0 0.0
      %4843 = vmatpush1.msra.mxu0 0.0
      %4844 = vmatprep.subr.mxu0 0.0
      %4845 = vmatpush1.msra.mxu0 0.0
      %4846 = vmatprep.subr.mxu0 0.0
      %4847 = vmatpush1.msra.mxu0 0.0
      %4848 = vmatprep.subr.mxu0 0.0
      %4849 = vmatpush1.msra.mxu0 0.0
      %4850 = vmatprep.subr.mxu0 0.0
      %4851 = vmatpush1.msra.mxu0 0.0
      %4852 = vmatprep.subr.mxu0 0.0
      %4853 = vmatpush1.msra.mxu0 0.0
      %4854 = vmatprep.subr.mxu0 0.0
      %4855 = vmatpush1.msra.mxu0 0.0
      %4856 = vmatprep.subr.mxu0 0.0
      %4857 = vmatpush1.msra.mxu0 0.0
      %4858 = vmatprep.subr.mxu0 0.0
      %4859 = vmatpush1.msra.mxu0 0.0
      %4860 = vmatprep.subr.mxu0 0.0
      %4861 = vmatpush1.msra.mxu0 0.0
      %4862 = vmatprep.subr.mxu0 0.0
      %4863 = vmatpush1.msra.mxu0 0.0
      %4864 = vmatprep.subr.mxu0 0.0
      %4865 = vmatpush1.msra.mxu0 0.0
      %4866 = vmatprep.subr.mxu0 0.0
      %4867 = vmatpush1.msra.mxu0 0.0
      %4868 = vmatprep.subr.mxu0 0.0
      %4869 = vmatpush1.msra.mxu0 0.0
      %4870 = vmatprep.subr.mxu0 0.0
      %4871 = vmatpush1.msra.mxu0 0.0
      %4872 = vmatprep.subr.mxu0 0.0
      %4873 = vmatpush1.msra.mxu0 0.0
      %4874 = vmatprep.mubr.f32.mxu0 0.0
      %v4875 = vand.u32 %v4081, 4294901760
      %v4876 = vsub.f32 %v4081, %v4875
      %v4877 = vand.u32 %v4876, 4294901760
      %4878 = vmatmul.mubr.f32.gmra.mrb[0].mxu0 %v4877
      %v4879 = vpop.f32.mrb[0].mxu0
      %v4880 = vadd.f32 %v4686, %v4879
      %v4881 = vpop.f32.mrb[0].mxu0
      %4882 = vmatprep.mubr.f32.mxu0 0.0
      %v4883 = vand.u32 %v4082, 4294901760
      %v4884 = vsub.f32 %v4082, %v4883
      %v4885 = vand.u32 %v4884, 4294901760
      %4886 = vmatmul.mubr.f32.gmra.mrb[0].mxu0 %v4885
      %v4887 = vpop.f32.mrb[0].mxu0
      %v4888 = vadd.f32 %v4693, %v4887
      %v4889 = vpop.f32.mrb[0].mxu0
      %4890 = vmatprep.mubr.f32.mxu0 0.0
      %v4891 = vand.u32 %v4083, 4294901760
      %v4892 = vsub.f32 %v4083, %v4891
      %v4893 = vand.u32 %v4892, 4294901760
      %4894 = vmatmul.mubr.f32.gmra.mrb[0].mxu0 %v4893
      %v4895 = vpop.f32.mrb[0].mxu0
      %v4896 = vadd.f32 %v4700, %v4895
      %v4897 = vpop.f32.mrb[0].mxu0
      %4898 = vmatprep.mubr.f32.mxu0 0.0
      %v4899 = vand.u32 %v4084, 4294901760
      %v4900 = vsub.f32 %v4084, %v4899
      %v4901 = vand.u32 %v4900, 4294901760
      %4902 = vmatmul.mubr.f32.gmra.mrb[0].mxu0 %v4901
      %v4903 = vpop.f32.mrb[0].mxu0
      %v4904 = vadd.f32 %v4707, %v4903
      %v4905 = vpop.f32.mrb[0].mxu0
      %4906 = vmatprep.mubr.f32.mxu0 0.0
      %v4907 = vand.u32 %v4085, 4294901760
      %v4908 = vsub.f32 %v4085, %v4907
      %v4909 = vand.u32 %v4908, 4294901760
      %4910 = vmatmul.mubr.f32.gmra.mrb[0].mxu0 %v4909
      %v4911 = vpop.f32.mrb[0].mxu0
      %v4912 = vadd.f32 %v4714, %v4911
      %v4913 = vpop.f32.mrb[0].mxu0
      %4914 = vmatprep.mubr.f32.mxu0 0.0
      %v4915 = vand.u32 %v4086, 4294901760
      %v4916 = vsub.f32 %v4086, %v4915
      %v4917 = vand.u32 %v4916, 4294901760
      %4918 = vmatmul.mubr.f32.gmra.mrb[0].mxu0 %v4917
      %v4919 = vpop.f32.mrb[0].mxu0
      %v4920 = vadd.f32 %v4721, %v4919
      %v4921 = vpop.f32.mrb[0].mxu0
      %4922 = vmatprep.mubr.f32.mxu0 0.0
      %v4923 = vand.u32 %v4087, 4294901760
      %v4924 = vsub.f32 %v4087, %v4923
      %v4925 = vand.u32 %v4924, 4294901760
      %4926 = vmatmul.mubr.f32.gmra.mrb[0].mxu0 %v4925
      %v4927 = vpop.f32.mrb[0].mxu0
      %v4928 = vadd.f32 %v4728, %v4927
      %v4929 = vpop.f32.mrb[0].mxu0
      %4930 = vmatprep.mubr.f32.mxu0 0.0
      %v4931 = vand.u32 %v4088, 4294901760
      %v4932 = vsub.f32 %v4088, %v4931
      %v4933 = vand.u32 %v4932, 4294901760
      %4934 = vmatmul.mubr.f32.gmra.mrb[0].mxu0 %v4933
      %v4935 = vpop.f32.mrb[0].mxu0
      %v4936 = vadd.f32 %v4735, %v4935
      %v4937 = vpop.f32.mrb[0].mxu0
      %4938 = vmatprep.mubr.f32.mxu0 0.0
      %v4939 = vand.u32 %v4089, 4294901760
      %v4940 = vsub.f32 %v4089, %v4939
      %v4941 = vand.u32 %v4940, 4294901760
      %4942 = vmatmul.mubr.f32.gmra.mrb[0].mxu0 %v4941
      %v4943 = vpop.f32.mrb[0].mxu0
      %v4944 = vadd.f32 %v4742, %v4943
      %v4945 = vpop.f32.mrb[0].mxu0
      %4946 = vmatprep.mubr.f32.mxu0 0.0
      %v4947 = vand.u32 %v4090, 4294901760
      %v4948 = vsub.f32 %v4090, %v4947
      %v4949 = vand.u32 %v4948, 4294901760
      %4950 = vmatmul.mubr.f32.gmra.mrb[0].mxu0 %v4949
      %v4951 = vpop.f32.mrb[0].mxu0
      %v4952 = vadd.f32 %v4749, %v4951
      %v4953 = vpop.f32.mrb[0].mxu0
      %4954 = vmatprep.mubr.f32.mxu0 0.0
      %v4955 = vand.u32 %v4091, 4294901760
      %v4956 = vsub.f32 %v4091, %v4955
      %v4957 = vand.u32 %v4956, 4294901760
      %4958 = vmatmul.mubr.f32.gmra.mrb[0].mxu0 %v4957
      %v4959 = vpop.f32.mrb[0].mxu0
      %v4960 = vadd.f32 %v4756, %v4959
      %v4961 = vpop.f32.mrb[0].mxu0
      %4962 = vmatprep.mubr.f32.mxu0 0.0
      %v4963 = vand.u32 %v4092, 4294901760
      %v4964 = vsub.f32 %v4092, %v4963
      %v4965 = vand.u32 %v4964, 4294901760
      %4966 = vmatmul.mubr.f32.gmra.mrb[0].mxu0 %v4965
      %v4967 = vpop.f32.mrb[0].mxu0
      %v4968 = vadd.f32 %v4763, %v4967
      %v4969 = vpop.f32.mrb[0].mxu0
      %4970 = vmatprep.mubr.f32.mxu0 0.0
      %v4971 = vand.u32 %v4093, 4294901760
      %v4972 = vsub.f32 %v4093, %v4971
      %v4973 = vand.u32 %v4972, 4294901760
      %4974 = vmatmul.mubr.f32.gmra.mrb[0].mxu0 %v4973
      %v4975 = vpop.f32.mrb[0].mxu0
      %v4976 = vadd.f32 %v4770, %v4975
      %v4977 = vpop.f32.mrb[0].mxu0
      %4978 = vmatprep.mubr.f32.mxu0 0.0
      %v4979 = vand.u32 %v4094, 4294901760
      %v4980 = vsub.f32 %v4094, %v4979
      %v4981 = vand.u32 %v4980, 4294901760
      %4982 = vmatmul.mubr.f32.gmra.mrb[0].mxu0 %v4981
      %v4983 = vpop.f32.mrb[0].mxu0
      %v4984 = vadd.f32 %v4777, %v4983
      %v4985 = vpop.f32.mrb[0].mxu0
      %4986 = vmatprep.mubr.f32.mxu0 0.0
      %v4987 = vand.u32 %v4095, 4294901760
      %v4988 = vsub.f32 %v4095, %v4987
      %v4989 = vand.u32 %v4988, 4294901760
      %4990 = vmatmul.mubr.f32.gmra.mrb[0].mxu0 %v4989
      %v4991 = vpop.f32.mrb[0].mxu0
      %v4992 = vadd.f32 %v4784, %v4991
      %v4993 = vpop.f32.mrb[0].mxu0
      %4994 = vmatprep.mubr.f32.mxu0 0.0
      %v4995 = vand.u32 %v4096, 4294901760
      %v4996 = vsub.f32 %v4096, %v4995
      %v4997 = vand.u32 %v4996, 4294901760
      %4998 = vmatmul.mubr.f32.gmra.mrb[0].mxu0 %v4997
      %v4999 = vpop.f32.mrb[0].mxu0
      %v5000 = vadd.f32 %v4791, %v4999
      %v5001 = vpop.f32.mrb[0].mxu0
      %5002 = vdwg.mxu0
      %5003 = vmatprep.subr.mxu0 0.0
      %v5004 = vand.u32 %v270, 4294901760
      %v5005 = vsub.f32 %v270, %v5004
      %v5006 = vand.u32 %v5005, 4294901760
      %5007 = vmatpush1.msra.mxu0 %v5006
      %5008 = vmatprep.subr.mxu0 0.0
      %v5009 = vand.u32 %v271, 4294901760
      %v5010 = vsub.f32 %v271, %v5009
      %v5011 = vand.u32 %v5010, 4294901760
      %5012 = vmatpush1.msra.mxu0 %v5011
      %5013 = vmatprep.subr.mxu0 0.0
      %v5014 = vand.u32 %v272, 4294901760
      %v5015 = vsub.f32 %v272, %v5014
      %v5016 = vand.u32 %v5015, 4294901760
      %5017 = vmatpush1.msra.mxu0 %v5016
      %5018 = vmatprep.subr.mxu0 0.0
      %v5019 = vand.u32 %v273, 4294901760
      %v5020 = vsub.f32 %v273, %v5019
      %v5021 = vand.u32 %v5020, 4294901760
      %5022 = vmatpush1.msra.mxu0 %v5021
      %5023 = vmatprep.subr.mxu0 0.0
      %v5024 = vand.u32 %v274, 4294901760
      %v5025 = vsub.f32 %v274, %v5024
      %v5026 = vand.u32 %v5025, 4294901760
      %5027 = vmatpush1.msra.mxu0 %v5026
      %5028 = vmatprep.subr.mxu0 0.0
      %v5029 = vand.u32 %v275, 4294901760
      %v5030 = vsub.f32 %v275, %v5029
      %v5031 = vand.u32 %v5030, 4294901760
      %5032 = vmatpush1.msra.mxu0 %v5031
      %5033 = vmatprep.subr.mxu0 0.0
      %v5034 = vand.u32 %v276, 4294901760
      %v5035 = vsub.f32 %v276, %v5034
      %v5036 = vand.u32 %v5035, 4294901760
      %5037 = vmatpush1.msra.mxu0 %v5036
      %5038 = vmatprep.subr.mxu0 0.0
      %v5039 = vand.u32 %v277, 4294901760
      %v5040 = vsub.f32 %v277, %v5039
      %v5041 = vand.u32 %v5040, 4294901760
      %5042 = vmatpush1.msra.mxu0 %v5041
      %5043 = vmatprep.subr.mxu0 0.0
      %v5044 = vand.u32 %v278, 4294901760
      %v5045 = vsub.f32 %v278, %v5044
      %v5046 = vand.u32 %v5045, 4294901760
      %5047 = vmatpush1.msra.mxu0 %v5046
      %5048 = vmatprep.subr.mxu0 0.0
      %v5049 = vand.u32 %v279, 4294901760
      %v5050 = vsub.f32 %v279, %v5049
      %v5051 = vand.u32 %v5050, 4294901760
      %5052 = vmatpush1.msra.mxu0 %v5051
      %5053 = vmatprep.subr.mxu0 0.0
      %v5054 = vand.u32 %v280, 4294901760
      %v5055 = vsub.f32 %v280, %v5054
      %v5056 = vand.u32 %v5055, 4294901760
      %5057 = vmatpush1.msra.mxu0 %v5056
      %5058 = vmatprep.subr.mxu0 0.0
      %v5059 = vand.u32 %v281, 4294901760
      %v5060 = vsub.f32 %v281, %v5059
      %v5061 = vand.u32 %v5060, 4294901760
      %5062 = vmatpush1.msra.mxu0 %v5061
      %5063 = vmatprep.subr.mxu0 0.0
      %v5064 = vand.u32 %v282, 4294901760
      %v5065 = vsub.f32 %v282, %v5064
      %v5066 = vand.u32 %v5065, 4294901760
      %5067 = vmatpush1.msra.mxu0 %v5066
      %5068 = vmatprep.subr.mxu0 0.0
      %v5069 = vand.u32 %v283, 4294901760
      %v5070 = vsub.f32 %v283, %v5069
      %v5071 = vand.u32 %v5070, 4294901760
      %5072 = vmatpush1.msra.mxu0 %v5071
      %5073 = vmatprep.subr.mxu0 0.0
      %v5074 = vand.u32 %v284, 4294901760
      %v5075 = vsub.f32 %v284, %v5074
      %v5076 = vand.u32 %v5075, 4294901760
      %5077 = vmatpush1.msra.mxu0 %v5076
      %5078 = vmatprep.subr.mxu0 0.0
      %v5079 = vand.u32 %v285, 4294901760
      %v5080 = vsub.f32 %v285, %v5079
      %v5081 = vand.u32 %v5080, 4294901760
      %5082 = vmatpush1.msra.mxu0 %v5081
      %5083 = vmatprep.subr.mxu0 0.0
      %5084 = vmatpush1.msra.mxu0 0.0
      %5085 = vmatprep.subr.mxu0 0.0
      %5086 = vmatpush1.msra.mxu0 0.0
      %5087 = vmatprep.subr.mxu0 0.0
      %5088 = vmatpush1.msra.mxu0 0.0
      %5089 = vmatprep.subr.mxu0 0.0
      %5090 = vmatpush1.msra.mxu0 0.0
      %5091 = vmatprep.subr.mxu0 0.0
      %5092 = vmatpush1.msra.mxu0 0.0
      %5093 = vmatprep.subr.mxu0 0.0
      %5094 = vmatpush1.msra.mxu0 0.0
      %5095 = vmatprep.subr.mxu0 0.0
      %5096 = vmatpush1.msra.mxu0 0.0
      %5097 = vmatprep.subr.mxu0 0.0
      %5098 = vmatpush1.msra.mxu0 0.0
      %5099 = vmatprep.subr.mxu0 0.0
      %5100 = vmatpush1.msra.mxu0 0.0
      %5101 = vmatprep.subr.mxu0 0.0
      %5102 = vmatpush1.msra.mxu0 0.0
      %5103 = vmatprep.subr.mxu0 0.0
      %5104 = vmatpush1.msra.mxu0 0.0
      %5105 = vmatprep.subr.mxu0 0.0
      %5106 = vmatpush1.msra.mxu0 0.0
      %5107 = vmatprep.subr.mxu0 0.0
      %5108 = vmatpush1.msra.mxu0 0.0
      %5109 = vmatprep.subr.mxu0 0.0
      %5110 = vmatpush1.msra.mxu0 0.0
      %5111 = vmatprep.subr.mxu0 0.0
      %5112 = vmatpush1.msra.mxu0 0.0
      %5113 = vmatprep.subr.mxu0 0.0
      %5114 = vmatpush1.msra.mxu0 0.0
      %5115 = vmatprep.mubr.f32.mxu0 0.0
      %v5116 = vand.u32 %v4081, 4294901760
      %5117 = vmatmul.mubr.f32.gmra.mrb[0].mxu0 %v5116
      %v5118 = vpop.f32.mrb[0].mxu0
      %v5119 = vadd.f32 %v4880, %v5118
      %v5120 = vpop.f32.mrb[0].mxu0
      %5121 = vmatprep.mubr.f32.mxu0 0.0
      %v5122 = vand.u32 %v4082, 4294901760
      %5123 = vmatmul.mubr.f32.gmra.mrb[0].mxu0 %v5122
      %v5124 = vpop.f32.mrb[0].mxu0
      %v5125 = vadd.f32 %v4888, %v5124
      %v5126 = vpop.f32.mrb[0].mxu0
      %5127 = vmatprep.mubr.f32.mxu0 0.0
      %v5128 = vand.u32 %v4083, 4294901760
      %5129 = vmatmul.mubr.f32.gmra.mrb[0].mxu0 %v5128
      %v5130 = vpop.f32.mrb[0].mxu0
      %v5131 = vadd.f32 %v4896, %v5130
      %v5132 = vpop.f32.mrb[0].mxu0
      %5133 = vmatprep.mubr.f32.mxu0 0.0
      %v5134 = vand.u32 %v4084, 4294901760
      %5135 = vmatmul.mubr.f32.gmra.mrb[0].mxu0 %v5134
      %v5136 = vpop.f32.mrb[0].mxu0
      %v5137 = vadd.f32 %v4904, %v5136
      %v5138 = vpop.f32.mrb[0].mxu0
      %5139 = vmatprep.mubr.f32.mxu0 0.0
      %v5140 = vand.u32 %v4085, 4294901760
      %5141 = vmatmul.mubr.f32.gmra.mrb[0].mxu0 %v5140
      %v5142 = vpop.f32.mrb[0].mxu0
      %v5143 = vadd.f32 %v4912, %v5142
      %v5144 = vpop.f32.mrb[0].mxu0
      %5145 = vmatprep.mubr.f32.mxu0 0.0
      %v5146 = vand.u32 %v4086, 4294901760
      %5147 = vmatmul.mubr.f32.gmra.mrb[0].mxu0 %v5146
      %v5148 = vpop.f32.mrb[0].mxu0
      %v5149 = vadd.f32 %v4920, %v5148
      %v5150 = vpop.f32.mrb[0].mxu0
      %5151 = vmatprep.mubr.f32.mxu0 0.0
      %v5152 = vand.u32 %v4087, 4294901760
      %5153 = vmatmul.mubr.f32.gmra.mrb[0].mxu0 %v5152
      %v5154 = vpop.f32.mrb[0].mxu0
      %v5155 = vadd.f32 %v4928, %v5154
      %v5156 = vpop.f32.mrb[0].mxu0
      %5157 = vmatprep.mubr.f32.mxu0 0.0
      %v5158 = vand.u32 %v4088, 4294901760
      %5159 = vmatmul.mubr.f32.gmra.mrb[0].mxu0 %v5158
      %v5160 = vpop.f32.mrb[0].mxu0
      %v5161 = vadd.f32 %v4936, %v5160
      %v5162 = vpop.f32.mrb[0].mxu0
      %5163 = vmatprep.mubr.f32.mxu0 0.0
      %v5164 = vand.u32 %v4089, 4294901760
      %5165 = vmatmul.mubr.f32.gmra.mrb[0].mxu0 %v5164
      %v5166 = vpop.f32.mrb[0].mxu0
      %v5167 = vadd.f32 %v4944, %v5166
      %v5168 = vpop.f32.mrb[0].mxu0
      %5169 = vmatprep.mubr.f32.mxu0 0.0
      %v5170 = vand.u32 %v4090, 4294901760
      %5171 = vmatmul.mubr.f32.gmra.mrb[0].mxu0 %v5170
      %v5172 = vpop.f32.mrb[0].mxu0
      %v5173 = vadd.f32 %v4952, %v5172
      %v5174 = vpop.f32.mrb[0].mxu0
      %5175 = vmatprep.mubr.f32.mxu0 0.0
      %v5176 = vand.u32 %v4091, 4294901760
      %5177 = vmatmul.mubr.f32.gmra.mrb[0].mxu0 %v5176
      %v5178 = vpop.f32.mrb[0].mxu0
      %v5179 = vadd.f32 %v4960, %v5178
      %v5180 = vpop.f32.mrb[0].mxu0
      %5181 = vmatprep.mubr.f32.mxu0 0.0
      %v5182 = vand.u32 %v4092, 4294901760
      %5183 = vmatmul.mubr.f32.gmra.mrb[0].mxu0 %v5182
      %v5184 = vpop.f32.mrb[0].mxu0
      %v5185 = vadd.f32 %v4968, %v5184
      %v5186 = vpop.f32.mrb[0].mxu0
      %5187 = vmatprep.mubr.f32.mxu0 0.0
      %v5188 = vand.u32 %v4093, 4294901760
      %5189 = vmatmul.mubr.f32.gmra.mrb[0].mxu0 %v5188
      %v5190 = vpop.f32.mrb[0].mxu0
      %v5191 = vadd.f32 %v4976, %v5190
      %v5192 = vpop.f32.mrb[0].mxu0
      %5193 = vmatprep.mubr.f32.mxu0 0.0
      %v5194 = vand.u32 %v4094, 4294901760
      %5195 = vmatmul.mubr.f32.gmra.mrb[0].mxu0 %v5194
      %v5196 = vpop.f32.mrb[0].mxu0
      %v5197 = vadd.f32 %v4984, %v5196
      %v5198 = vpop.f32.mrb[0].mxu0
      %5199 = vmatprep.mubr.f32.mxu0 0.0
      %v5200 = vand.u32 %v4095, 4294901760
      %5201 = vmatmul.mubr.f32.gmra.mrb[0].mxu0 %v5200
      %v5202 = vpop.f32.mrb[0].mxu0
      %v5203 = vadd.f32 %v4992, %v5202
      %v5204 = vpop.f32.mrb[0].mxu0
      %5205 = vmatprep.mubr.f32.mxu0 0.0
      %v5206 = vand.u32 %v4096, 4294901760
      %5207 = vmatmul.mubr.f32.gmra.mrb[0].mxu0 %v5206
      %v5208 = vpop.f32.mrb[0].mxu0
      %v5209 = vadd.f32 %v5000, %v5208
      %v5210 = vpop.f32.mrb[0].mxu0
      %5211 = vdwg.mxu0
      %5212 = vmatprep.subr.mxu0 0.0
      %v5213 = vand.u32 %v270, 4294901760
      %5214 = vmatpush1.msra.mxu0 %v5213
      %5215 = vmatprep.subr.mxu0 0.0
      %v5216 = vand.u32 %v271, 4294901760
      %5217 = vmatpush1.msra.mxu0 %v5216
      %5218 = vmatprep.subr.mxu0 0.0
      %v5219 = vand.u32 %v272, 4294901760
      %5220 = vmatpush1.msra.mxu0 %v5219
      %5221 = vmatprep.subr.mxu0 0.0
      %v5222 = vand.u32 %v273, 4294901760
      %5223 = vmatpush1.msra.mxu0 %v5222
      %5224 = vmatprep.subr.mxu0 0.0
      %v5225 = vand.u32 %v274, 4294901760
      %5226 = vmatpush1.msra.mxu0 %v5225
      %5227 = vmatprep.subr.mxu0 0.0
      %v5228 = vand.u32 %v275, 4294901760
      %5229 = vmatpush1.msra.mxu0 %v5228
      %5230 = vmatprep.subr.mxu0 0.0
      %v5231 = vand.u32 %v276, 4294901760
      %5232 = vmatpush1.msra.mxu0 %v5231
      %5233 = vmatprep.subr.mxu0 0.0
      %v5234 = vand.u32 %v277, 4294901760
      %5235 = vmatpush1.msra.mxu0 %v5234
      %5236 = vmatprep.subr.mxu0 0.0
      %v5237 = vand.u32 %v278, 4294901760
      %5238 = vmatpush1.msra.mxu0 %v5237
      %5239 = vmatprep.subr.mxu0 0.0
      %v5240 = vand.u32 %v279, 4294901760
      %5241 = vmatpush1.msra.mxu0 %v5240
      %5242 = vmatprep.subr.mxu0 0.0
      %v5243 = vand.u32 %v280, 4294901760
      %5244 = vmatpush1.msra.mxu0 %v5243
      %5245 = vmatprep.subr.mxu0 0.0
      %v5246 = vand.u32 %v281, 4294901760
      %5247 = vmatpush1.msra.mxu0 %v5246
      %5248 = vmatprep.subr.mxu0 0.0
      %v5249 = vand.u32 %v282, 4294901760
      %5250 = vmatpush1.msra.mxu0 %v5249
      %5251 = vmatprep.subr.mxu0 0.0
      %v5252 = vand.u32 %v283, 4294901760
      %5253 = vmatpush1.msra.mxu0 %v5252
      %5254 = vmatprep.subr.mxu0 0.0
      %v5255 = vand.u32 %v284, 4294901760
      %5256 = vmatpush1.msra.mxu0 %v5255
      %5257 = vmatprep.subr.mxu0 0.0
      %v5258 = vand.u32 %v285, 4294901760
      %5259 = vmatpush1.msra.mxu0 %v5258
      %5260 = vmatprep.subr.mxu0 0.0
      %5261 = vmatpush1.msra.mxu0 0.0
      %5262 = vmatprep.subr.mxu0 0.0
      %5263 = vmatpush1.msra.mxu0 0.0
      %5264 = vmatprep.subr.mxu0 0.0
      %5265 = vmatpush1.msra.mxu0 0.0
      %5266 = vmatprep.subr.mxu0 0.0
      %5267 = vmatpush1.msra.mxu0 0.0
      %5268 = vmatprep.subr.mxu0 0.0
      %5269 = vmatpush1.msra.mxu0 0.0
      %5270 = vmatprep.subr.mxu0 0.0
      %5271 = vmatpush1.msra.mxu0 0.0
      %5272 = vmatprep.subr.mxu0 0.0
      %5273 = vmatpush1.msra.mxu0 0.0
      %5274 = vmatprep.subr.mxu0 0.0
      %5275 = vmatpush1.msra.mxu0 0.0
      %5276 = vmatprep.subr.mxu0 0.0
      %5277 = vmatpush1.msra.mxu0 0.0
      %5278 = vmatprep.subr.mxu0 0.0
      %5279 = vmatpush1.msra.mxu0 0.0
      %5280 = vmatprep.subr.mxu0 0.0
      %5281 = vmatpush1.msra.mxu0 0.0
      %5282 = vmatprep.subr.mxu0 0.0
      %5283 = vmatpush1.msra.mxu0 0.0
      %5284 = vmatprep.subr.mxu0 0.0
      %5285 = vmatpush1.msra.mxu0 0.0
      %5286 = vmatprep.subr.mxu0 0.0
      %5287 = vmatpush1.msra.mxu0 0.0
      %5288 = vmatprep.subr.mxu0 0.0
      %5289 = vmatpush1.msra.mxu0 0.0
      %5290 = vmatprep.subr.mxu0 0.0
      %5291 = vmatpush1.msra.mxu0 0.0
      %5292 = vmatprep.mubr.f32.mxu0 0.0
      %v5293 = vand.u32 %v4081, 4294901760
      %5294 = vmatmul.mubr.f32.gmra.mrb[0].mxu0 %v5293
      %v5295 = vpop.f32.mrb[0].mxu0
      %v5296 = vadd.f32 %v5119, %v5295
      %v5297 = vpop.f32.mrb[0].mxu0
      %5298 = vmatprep.mubr.f32.mxu0 0.0
      %v5299 = vand.u32 %v4082, 4294901760
      %5300 = vmatmul.mubr.f32.gmra.mrb[0].mxu0 %v5299
      %v5301 = vpop.f32.mrb[0].mxu0
      %v5302 = vadd.f32 %v5125, %v5301
      %v5303 = vpop.f32.mrb[0].mxu0
      %5304 = vmatprep.mubr.f32.mxu0 0.0
      %v5305 = vand.u32 %v4083, 4294901760
      %5306 = vmatmul.mubr.f32.gmra.mrb[0].mxu0 %v5305
      %v5307 = vpop.f32.mrb[0].mxu0
      %v5308 = vadd.f32 %v5131, %v5307
      %v5309 = vpop.f32.mrb[0].mxu0
      %5310 = vmatprep.mubr.f32.mxu0 0.0
      %v5311 = vand.u32 %v4084, 4294901760
      %5312 = vmatmul.mubr.f32.gmra.mrb[0].mxu0 %v5311
      %v5313 = vpop.f32.mrb[0].mxu0
      %v5314 = vadd.f32 %v5137, %v5313
      %v5315 = vpop.f32.mrb[0].mxu0
      %5316 = vmatprep.mubr.f32.mxu0 0.0
      %v5317 = vand.u32 %v4085, 4294901760
      %5318 = vmatmul.mubr.f32.gmra.mrb[0].mxu0 %v5317
      %v5319 = vpop.f32.mrb[0].mxu0
      %v5320 = vadd.f32 %v5143, %v5319
      %v5321 = vpop.f32.mrb[0].mxu0
      %5322 = vmatprep.mubr.f32.mxu0 0.0
      %v5323 = vand.u32 %v4086, 4294901760
      %5324 = vmatmul.mubr.f32.gmra.mrb[0].mxu0 %v5323
      %v5325 = vpop.f32.mrb[0].mxu0
      %v5326 = vadd.f32 %v5149, %v5325
      %v5327 = vpop.f32.mrb[0].mxu0
      %5328 = vmatprep.mubr.f32.mxu0 0.0
      %v5329 = vand.u32 %v4087, 4294901760
      %5330 = vmatmul.mubr.f32.gmra.mrb[0].mxu0 %v5329
      %v5331 = vpop.f32.mrb[0].mxu0
      %v5332 = vadd.f32 %v5155, %v5331
      %v5333 = vpop.f32.mrb[0].mxu0
      %5334 = vmatprep.mubr.f32.mxu0 0.0
      %v5335 = vand.u32 %v4088, 4294901760
      %5336 = vmatmul.mubr.f32.gmra.mrb[0].mxu0 %v5335
      %v5337 = vpop.f32.mrb[0].mxu0
      %v5338 = vadd.f32 %v5161, %v5337
      %v5339 = vpop.f32.mrb[0].mxu0
      %5340 = vmatprep.mubr.f32.mxu0 0.0
      %v5341 = vand.u32 %v4089, 4294901760
      %5342 = vmatmul.mubr.f32.gmra.mrb[0].mxu0 %v5341
      %v5343 = vpop.f32.mrb[0].mxu0
      %v5344 = vadd.f32 %v5167, %v5343
      %v5345 = vpop.f32.mrb[0].mxu0
      %5346 = vmatprep.mubr.f32.mxu0 0.0
      %v5347 = vand.u32 %v4090, 4294901760
      %5348 = vmatmul.mubr.f32.gmra.mrb[0].mxu0 %v5347
      %v5349 = vpop.f32.mrb[0].mxu0
      %v5350 = vadd.f32 %v5173, %v5349
      %v5351 = vpop.f32.mrb[0].mxu0
      %5352 = vmatprep.mubr.f32.mxu0 0.0
      %v5353 = vand.u32 %v4091, 4294901760
      %5354 = vmatmul.mubr.f32.gmra.mrb[0].mxu0 %v5353
      %v5355 = vpop.f32.mrb[0].mxu0
      %v5356 = vadd.f32 %v5179, %v5355
      %v5357 = vpop.f32.mrb[0].mxu0
      %5358 = vmatprep.mubr.f32.mxu0 0.0
      %v5359 = vand.u32 %v4092, 4294901760
      %5360 = vmatmul.mubr.f32.gmra.mrb[0].mxu0 %v5359
      %v5361 = vpop.f32.mrb[0].mxu0
      %v5362 = vadd.f32 %v5185, %v5361
      %v5363 = vpop.f32.mrb[0].mxu0
      %5364 = vmatprep.mubr.f32.mxu0 0.0
      %v5365 = vand.u32 %v4093, 4294901760
      %5366 = vmatmul.mubr.f32.gmra.mrb[0].mxu0 %v5365
      %v5367 = vpop.f32.mrb[0].mxu0
      %v5368 = vadd.f32 %v5191, %v5367
      %v5369 = vpop.f32.mrb[0].mxu0
      %5370 = vmatprep.mubr.f32.mxu0 0.0
      %v5371 = vand.u32 %v4094, 4294901760
      %5372 = vmatmul.mubr.f32.gmra.mrb[0].mxu0 %v5371
      %v5373 = vpop.f32.mrb[0].mxu0
      %v5374 = vadd.f32 %v5197, %v5373
      %v5375 = vpop.f32.mrb[0].mxu0
      %5376 = vmatprep.mubr.f32.mxu0 0.0
      %v5377 = vand.u32 %v4095, 4294901760
      %5378 = vmatmul.mubr.f32.gmra.mrb[0].mxu0 %v5377
      %v5379 = vpop.f32.mrb[0].mxu0
      %v5380 = vadd.f32 %v5203, %v5379
      %v5381 = vpop.f32.mrb[0].mxu0
      %5382 = vmatprep.mubr.f32.mxu0 0.0
      %v5383 = vand.u32 %v4096, 4294901760
      %5384 = vmatmul.mubr.f32.gmra.mrb[0].mxu0 %v5383
      %v5385 = vpop.f32.mrb[0].mxu0
      %v5386 = vadd.f32 %v5209, %v5385
      %v5387 = vpop.f32.mrb[0].mxu0
      %5388 = vdwg.mxu0
      %v5389 = vadd.f32 %v2881, %v5296
      %v5390 = vadd.f32 %v2882, %v5302
      %v5391 = vadd.f32 %v2883, %v5308
      %v5392 = vadd.f32 %v2884, %v5314
      %v5393 = vadd.f32 %v2885, %v5320
      %v5394 = vadd.f32 %v2886, %v5326
      %v5395 = vadd.f32 %v2887, %v5332
      %v5396 = vadd.f32 %v2888, %v5338
      %v5397 = vadd.f32 %v2889, %v5344
      %v5398 = vadd.f32 %v2890, %v5350
      %v5399 = vadd.f32 %v2891, %v5356
      %v5400 = vadd.f32 %v2892, %v5362
      %v5401 = vadd.f32 %v2893, %v5368
      %v5402 = vadd.f32 %v2894, %v5374
      %v5403 = vadd.f32 %v2895, %v5380
      %v5404 = vadd.f32 %v2896, %v5386
      %5405 = vst.msk [vmem:[%s226] sm:$0xff] %vm298, %v5389
      %5406 = vst.msk [vmem:[%s226 + $0x8] sm:$0xff] %vm298, %v5390
      %5407 = vst.msk [vmem:[%s226 + $0x10] sm:$0xff] %vm298, %v5391
      %5408 = vst.msk [vmem:[%s226 + $0x18] sm:$0xff] %vm298, %v5392
      %5409 = vst.msk [vmem:[%s226 + $0x20] sm:$0xff] %vm298, %v5393
      %5410 = vst.msk [vmem:[%s226 + $0x28] sm:$0xff] %vm298, %v5394
      %5411 = vst.msk [vmem:[%s226 + $0x30] sm:$0xff] %vm298, %v5395
      %5412 = vst.msk [vmem:[%s226 + $0x38] sm:$0xff] %vm298, %v5396
      %5413 = vst.msk [vmem:[%s226 + $0x40] sm:$0xff] %vm298, %v5397
      %5414 = vst.msk [vmem:[%s226 + $0x48] sm:$0xff] %vm298, %v5398
      %5415 = vst.msk [vmem:[%s226 + $0x50] sm:$0xff] %vm298, %v5399
      %5416 = vst.msk [vmem:[%s226 + $0x58] sm:$0xff] %vm298, %v5400
      %5417 = vst.msk [vmem:[%s226 + $0x60] sm:$0xff] %vm298, %v5401
      %5418 = vst.msk [vmem:[%s226 + $0x68] sm:$0xff] %vm298, %v5402
      %5419 = vst.msk [vmem:[%s226 + $0x70] sm:$0xff] %vm298, %v5403
      %5420 = vst.msk [vmem:[%s226 + $0x78] sm:$0xff] %vm298, %v5404
      %s5421 = smul.u32 16, %s16
      %p5422 = scmp.lt.s32.totalorder %s5421, 31
      %s5423 = scalar_select %p5422, %s5421, 31
      %s5424 = smul.addr %s5423, 8
      %s5425 = scalar_lea.vmem %s5, %s5424
      // Predicated region
      $region41: #{tpu_custom_call.1} parent=39 // pred_check
        %p5426 = pneg %p144
      $region42: #{tpu_custom_call.1} parent=39 // pred_check_branch
        %5428 = sbr.rel (%p5426) target = $region44
      $region43: #{tpu_custom_call.1} parent=39 // pred_region
        %s5429 = smul.u32 16, %s16
      $region44: #{tpu_custom_call.1} parent=39 // pred_fallthru
        _
    $region40: #{tpu_custom_call.1} parent=5 // pred_fallthru
      _
    %p5430 = scmp.le.s32.totalorder 2, %s11
    // Predicated region
    $region45: #{tpu_custom_call.1} parent=5 // pred_check
      %p5431 = pneg %p5430
    $region46: #{tpu_custom_call.1} parent=5 // pred_check_branch
      %5433 = sbr.rel (%p5431) target = $region48
    $region47: #{tpu_custom_call.1} parent=5 // pred_region
      %s5434 = ssub.s32 %s11, 2
      // Predicated region
      $region49: #{tpu_custom_call.1} parent=47 // pred_check
        %p5435 = pneg %p150
      $region50: #{tpu_custom_call.1} parent=47 // pred_check_branch
        %5437 = sbr.rel (%p5435) target = $region52
      $region51: #{tpu_custom_call.1} parent=47 // pred_region
        %s5438 = smul.u32 16, %s17
        %p5439 = scmp.lt.s32.totalorder %s5438, 31
        %s5440 = scalar_select %p5439, %s5438, 31
        %s5441 = smul.addr %s5440, 8
        %s5442 = scalar_lea.vmem %s5, %s5441
      $region52: #{tpu_custom_call.1} parent=47 // pred_fallthru
        _
    $region48: #{tpu_custom_call.1} parent=5 // pred_fallthru
      _
  $region6: #{tpu_custom_call.1} parent=0 // loop_footer
    %s15 = sadd.s32 1, %s11
  $region7: #{tpu_custom_call.1} parent=0 // loop_footer_branch
    %10 = sbr.rel target = $region3
  $region8: #{tpu_custom_call.1} parent=0 // loop_exit
    _

</llo_original>
